<compile_context>
chip_gen: v5e
topology: v5e:2x2
jax: 0.10.0
libtpu: 0.0.40
codegen_flags: <defaults>
</compile_context>

<pallas_src>
import functools

import jax
import jax.numpy as jnp
import numpy as np
from jax.experimental import pallas as pl
from jax.experimental.pallas import tpu as pltpu


def _round_up(x, m):
    return ((x + m - 1) // m) * m


# -----------------------------------------------------------------------------------------
# Stage 1: fused start/end FFN + bias augmentation + first biaffine contraction (per batch)
# -----------------------------------------------------------------------------------------
def stage1_kernel(x_ref, w1s_ref, b1s_ref, w2s_ref, b2s_ref,
                  w1e_ref, b1e_ref, w2e_ref, b2e_ref, u_ref,
                  e1_ref, t_ref):
    x = x_ref[0]                                                            # (S, H)

    # start branch: relu(x @ w1s + b1s) @ w2s_pad + b2s_pad -> (S, Hpad)
    #   (w2s_pad/b2s_pad carry the "ones" column at index H and zeros beyond -> bias-augmented s1)
    hs = jnp.maximum(
        jnp.dot(x, w1s_ref[...], preferred_element_type=jnp.float32) + b1s_ref[...], 0.0)
    s1p = jnp.dot(hs, w2s_ref[...], preferred_element_type=jnp.float32) + b2s_ref[...]

    # end branch -> bias-augmented e1 (S, Hpad)
    he = jnp.maximum(
        jnp.dot(x, w1e_ref[...], preferred_element_type=jnp.float32) + b1e_ref[...], 0.0)
    e1p = jnp.dot(he, w2e_ref[...], preferred_element_type=jnp.float32) + b2e_ref[...]

    e1_ref[0] = e1p
    # First biaffine contraction (MXU): t[i, q*C + c] = sum_p s1p[i, p] * U[p, c, q]
    t_ref[0] = jnp.dot(s1p, u_ref[...], preferred_element_type=jnp.float32)


# -----------------------------------------------------------------------------------------
# Stage 2: second biaffine contraction + slot classifier (per (batch, start-position i))
# -----------------------------------------------------------------------------------------
def stage2_kernel(e1_ref, t_ref, wc_ref, bc_ref, emb_ref, score_ref):
    e1p = e1_ref[0]                        # (S, Hpad)  — resident across the i axis
    m_i = t_ref[0, 0]                      # (Hpad, C):  M_i[q, c] = sum_p s1[i, p] U[p, c, q]
    emb_i = jnp.dot(e1p, m_i, preferred_element_type=jnp.float32)           # (S, C) = emb[b, i]
    emb_ref[0, 0] = emb_i
    score_ref[0, 0] = (jnp.dot(emb_i, wc_ref[...], preferred_element_type=jnp.float32)
                       + bc_ref[...])


# -----------------------------------------------------------------------------------------
# One-time parameter preparation (outside the forward path)
# -----------------------------------------------------------------------------------------
def prepare_params(params, H, C, L):
    Hp = H + 1
    Hpad = _round_up(Hp, 8)                 # lane/sublane-friendly, zero-padded contraction dim
    F = params["w1s"].shape[1]

    def pad_second_linear(w2, b2):
        w2p = jnp.zeros((F, Hpad), jnp.float32).at[:, :H].set(w2)
        b2p = jnp.zeros((1, Hpad), jnp.float32).at[:, :H].set(b2)
        b2p = b2p.at[0, H].set(1.0)         # the "ones" bias-augmentation column
        return w2p, b2p

    w2s_pad, b2s_pad = pad_second_linear(params["w2s"], params["b2s"])
    w2e_pad, b2e_pad = pad_second_linear(params["w2e"], params["b2e"])

    # U (Hp, C, Hp) [p, c, q] -> u_pad (Hpad, Hpad*C) with u_pad[p, q*C + c] = U[p, c, q].
    # Done once here, NOT per forward call.
    u_pqc = jnp.transpose(params["u"], (0, 2, 1))                           # (p, q, c)
    u_pad = (jnp.zeros((Hpad, Hpad, C), jnp.float32)
             .at[:Hp, :Hp, :].set(u_pqc)
             .reshape(Hpad, Hpad * C))

    return dict(
        w1s=params["w1s"], b1s=params["b1s"], w2s_pad=w2s_pad, b2s_pad=b2s_pad,
        w1e=params["w1e"], b1e=params["b1e"], w2e_pad=w2e_pad, b2e_pad=b2e_pad,
        u_pad=u_pad, wc_t=params["wc_t"], bc=params["bc"],
        Hpad=Hpad, C=C, L=L,
    )


# -----------------------------------------------------------------------------------------
# Full forward
# -----------------------------------------------------------------------------------------
def slot_classifier_forward(word_context, intent_context, prep):
    # use_intent_context_attn=False -> intent_context unused; dropout(p=0.0) -> identity.
    del intent_context
    B, S, H = word_context.shape
    Hpad, C, L = prep["Hpad"], prep["C"], prep["L"]
    F = prep["w1s"].shape[1]
    vmem_limit = 32 * 1024 * 1024

    # ---- Stage 1: FFNs + bias augmentation + first biaffine contraction ----
    e1p, t = pl.pallas_call(
        stage1_kernel,
        grid=(B,),
        in_specs=[
            pl.BlockSpec((1, S, H), lambda b: (b, 0, 0)),          # x (per-batch slab)
            pl.BlockSpec((H, F), lambda b: (0, 0)),                # w1s (resident)
            pl.BlockSpec((1, F), lambda b: (0, 0)),                # b1s
            pl.BlockSpec((F, Hpad), lambda b: (0, 0)),             # w2s_pad
            pl.BlockSpec((1, Hpad), lambda b: (0, 0)),             # b2s_pad (carries the "ones" col)
            pl.BlockSpec((H, F), lambda b: (0, 0)),                # w1e
            pl.BlockSpec((1, F), lambda b: (0, 0)),                # b1e
            pl.BlockSpec((F, Hpad), lambda b: (0, 0)),             # w2e_pad
            pl.BlockSpec((1, Hpad), lambda b: (0, 0)),             # b2e_pad
            pl.BlockSpec((Hpad, Hpad * C), lambda b: (0, 0)),      # u_pad (resident)
        ],
        out_specs=(
            pl.BlockSpec((1, S, Hpad), lambda b: (b, 0, 0)),       # bias-augmented end features
            pl.BlockSpec((1, S, Hpad * C), lambda b: (b, 0, 0)),   # T = s1p @ u_pad
        ),
        out_shape=(
            jax.ShapeDtypeStruct((B, S, Hpad), jnp.float32),
            jax.ShapeDtypeStruct((B, S, Hpad * C), jnp.float32),
        ),
        compiler_params=pltpu.CompilerParams(
            dimension_semantics=("parallel",), vmem_limit_bytes=vmem_limit),
    )(word_context,
      prep["w1s"], prep["b1s"], prep["w2s_pad"], prep["b2s_pad"],
      prep["w1e"], prep["b1e"], prep["w2e_pad"], prep["b2e_pad"],
      prep["u_pad"])

    # Free row-major metadata reshape (bitcast under jit, no data movement).
    t3 = t.reshape(B, S, Hpad, C)

    # ---- Stage 2: second biaffine contraction + classifier (grid over batch and position i) ----
    emb, score = pl.pallas_call(
        stage2_kernel,
        grid=(B, S),
        in_specs=[
            pl.BlockSpec((1, S, Hpad), lambda b, i: (b, 0, 0)),        # e1p (resident across i)
            pl.BlockSpec((1, 1, Hpad, C), lambda b, i: (b, i, 0, 0)),  # T3 slab for position i
            pl.BlockSpec((C, L), lambda b, i: (0, 0)),                 # classifier weight^T (resident)
            pl.BlockSpec((1, L), lambda b, i: (0, 0)),                 # classifier bias
        ],
        out_specs=(
            pl.BlockSpec((1, 1, S, C), lambda b, i: (b, i, 0, 0)),     # embedding[b, i]
            pl.BlockSpec((1, 1, S, L), lambda b, i: (b, i, 0, 0)),     # score[b, i]
        ),
        out_shape=(
            jax.ShapeDtypeStruct((B, S, S, C), jnp.float32),
            jax.ShapeDtypeStruct((B, S, S, L), jnp.float32),
        ),
        compiler_params=pltpu.CompilerParams(
            dimension_semantics=("parallel", "parallel"), vmem_limit_bytes=vmem_limit),
    )(e1p, t3, prep["wc_t"], prep["bc"])

    return score, emb


# ------------------------------------ Pure-JAX reference -----------------------------------
def reference_forward(word_context, params):
    B, S, H = word_context.shape

    def ffn(x, w1, b1, w2, b2):
        return jnp.maximum(x @ w1 + b1, 0.0) @ w2 + b2

    start = ffn(word_context, params["w1s"], params["b1s"], params["w2s"], params["b2s"])
    end = ffn(word_context, params["w1e"], params["b1e"], params["w2e"], params["b2e"])
    ones = jnp.ones((B, S, 1), jnp.float32)
    s1 = jnp.concatenate([start, ones], axis=-1)
    e1 = jnp.concatenate([end, ones], axis=-1)
    emb = jnp.einsum("bip,pcq,bjq->bijc", s1, params["u"], e1)
    score = emb @ params["wc_t"] + params["bc"]
    return score, emb


if __name__ == "__main__":
    B, S, H = 2, 8, 32          # batch, max_seq_len (small), config.hidden_size
    F = 64                      # hidden_dim_ffw (small)
    C = 256                     # biaffine classSize (fixed by module)
    L = 8                       # num_slot_labels
    NUM_INTENT = 4              # num_intent_labels (unused path)
    Hp = H + 1

    key = jax.random.PRNGKey(0)
    ks = jax.random.split(key, 13)
    params = dict(
        w1s=0.1 * jax.random.normal(ks[0], (H, F), jnp.float32),
        b1s=0.1 * jax.random.normal(ks[1], (1, F), jnp.float32),
        w2s=0.1 * jax.random.normal(ks[2], (F, H), jnp.float32),
        b2s=0.1 * jax.random.normal(ks[3], (1, H), jnp.float32),
        w1e=0.1 * jax.random.normal(ks[4], (H, F), jnp.float32),
        b1e=0.1 * jax.random.normal(ks[5], (1, F), jnp.float32),
        w2e=0.1 * jax.random.normal(ks[6], (F, H), jnp.float32),
        b2e=0.1 * jax.random.normal(ks[7], (1, H), jnp.float32),
        u=0.05 * jax.random.normal(ks[8], (Hp, C, Hp), jnp.float32),   # bilinearMap (in1+1, C, in2+1)
        wc_t=0.1 * jax.random.normal(ks[9], (C, L), jnp.float32),      # classifier weight^T
        bc=0.1 * jax.random.normal(ks[10], (1, L), jnp.float32),       # classifier bias
    )
    word_context = jax.random.normal(ks[11], (B, S, H), jnp.float32)
    intent_context = jax.random.normal(ks[12], (B, NUM_INTENT), jnp.float32)

    prep = prepare_params(params, H, C, L)
    fwd = jax.jit(functools.partial(slot_classifier_forward, prep=prep))

    score, emb = fwd(word_context, intent_context)
    jax.block_until_ready((score, emb))

    score_ref, emb_ref = reference_forward(word_context, params)
    assert score.shape == (B, S, S, L) and emb.shape == (B, S, S, C)
    np.testing.assert_allclose(np.asarray(emb), np.asarray(emb_ref), atol=1e-3, rtol=1e-3)
    np.testing.assert_allclose(np.asarray(score), np.asarray(score_ref), atol=1e-3, rtol=1e-3)
    print("KERNEL_OK")
</pallas_src>

<mosaic_0001>
module attributes {stable_mosaic.version = 11 : i64} {
  func.func @stage2_kernel(%arg0: i32, %arg1: i32, %arg2: memref<1x8x40xf32, #tpu.memory_space<vmem>>, %arg3: memref<1x1x40x256xf32, #tpu.memory_space<vmem>>, %arg4: memref<256x8xf32, #tpu.memory_space<vmem>>, %arg5: memref<1x8xf32, #tpu.memory_space<vmem>>, %arg6: memref<1x1x8x256xf32, #tpu.memory_space<vmem>>, %arg7: memref<1x1x8x8xf32, #tpu.memory_space<vmem>>) attributes {dimension_semantics = [#tpu.dimension_semantics<parallel>, #tpu.dimension_semantics<parallel>], iteration_bounds = array<i64: 2, 8>, scalar_prefetch = 0 : i64, scratch_operands = 0 : i64, tpu.core_type = #tpu.core_type<tc>, window_params = [{transform_indices = @transform_0, window_bounds = array<i64: 1, 8, 40>}, {transform_indices = @transform_1, window_bounds = array<i64: 1, 1, 40, 256>}, {pipeline_mode = #tpu.pipeline_mode<synchronous>, transform_indices = @transform_2, window_bounds = array<i64: 256, 8>}, {pipeline_mode = #tpu.pipeline_mode<synchronous>, transform_indices = @transform_3, window_bounds = array<i64: 1, 8>}, {transform_indices = @transform_4, window_bounds = array<i64: 1, 1, 8, 256>}, {transform_indices = @transform_5, window_bounds = array<i64: 1, 1, 8, 8>}]} {
    %c0 = arith.constant 0 : index
    %c0_0 = arith.constant 0 : index
    %c0_1 = arith.constant 0 : index
    %0 = vector.load %arg2[%c0, %c0_0, %c0_1] : memref<1x8x40xf32, #tpu.memory_space<vmem>>, vector<1x8x40xf32>
    %1 = vector.shape_cast %0 : vector<1x8x40xf32> to vector<8x40xf32>
    %c0_2 = arith.constant 0 : index
    %c0_3 = arith.constant 0 : index
    %c0_4 = arith.constant 0 : index
    %c0_5 = arith.constant 0 : index
    %2 = vector.load %arg3[%c0_2, %c0_3, %c0_4, %c0_5] : memref<1x1x40x256xf32, #tpu.memory_space<vmem>>, vector<1x1x40x256xf32>
    %3 = vector.shape_cast %2 : vector<1x1x40x256xf32> to vector<40x256xf32>
    %cst = arith.constant dense<0.000000e+00> : vector<8x256xf32>
    %4 = tpu.matmul %1, %3, %cst {dimension_numbers = #tpu.dot_dimension_numbers<[1], [0], [0], [1], [0, 0, 1, 1], [], []>} : vector<8x40xf32>, vector<40x256xf32>, vector<8x256xf32> -> vector<8x256xf32>
    %c0_6 = arith.constant 0 : index
    %c0_7 = arith.constant 0 : index
    %c0_8 = arith.constant 0 : index
    %c0_9 = arith.constant 0 : index
    %5 = vector.load %arg6[%c0_6, %c0_7, %c0_8, %c0_9] : memref<1x1x8x256xf32, #tpu.memory_space<vmem>>, vector<1x1x8x256xf32>
    %6 = vector.shape_cast %5 : vector<1x1x8x256xf32> to vector<8x256xf32>
    %7 = vector.shape_cast %4 : vector<8x256xf32> to vector<1x1x8x256xf32>
    tpu.vector_store %arg6[%c0_6, %c0_7, %c0_8, %c0_9], %7 {strides = array<i32>} : memref<1x1x8x256xf32, #tpu.memory_space<vmem>>, vector<1x1x8x256xf32>,
    %c0_10 = arith.constant 0 : index
    %c0_11 = arith.constant 0 : index
    %8 = vector.load %arg4[%c0_10, %c0_11] : memref<256x8xf32, #tpu.memory_space<vmem>>, vector<256x8xf32>
    %cst_12 = arith.constant dense<0.000000e+00> : vector<8x8xf32>
    %9 = tpu.matmul %4, %8, %cst_12 {dimension_numbers = #tpu.dot_dimension_numbers<[1], [0], [0], [1], [0, 0, 1, 1], [], []>} : vector<8x256xf32>, vector<256x8xf32>, vector<8x8xf32> -> vector<8x8xf32>
    %c0_13 = arith.constant 0 : index
    %c0_14 = arith.constant 0 : index
    %10 = vector.load %arg5[%c0_13, %c0_14] : memref<1x8xf32, #tpu.memory_space<vmem>>, vector<1x8xf32>
    %11 = vector.broadcast %10 : vector<1x8xf32> to vector<8x8xf32>
    %12 = arith.addf %9, %11 : vector<8x8xf32>
    %c0_15 = arith.constant 0 : index
    %c0_16 = arith.constant 0 : index
    %c0_17 = arith.constant 0 : index
    %c0_18 = arith.constant 0 : index
    %13 = vector.load %arg7[%c0_15, %c0_16, %c0_17, %c0_18] : memref<1x1x8x8xf32, #tpu.memory_space<vmem>>, vector<1x1x8x8xf32>
    %14 = vector.shape_cast %13 : vector<1x1x8x8xf32> to vector<8x8xf32>
    %15 = vector.shape_cast %12 : vector<8x8xf32> to vector<1x1x8x8xf32>
    tpu.vector_store %arg7[%c0_15, %c0_16, %c0_17, %c0_18], %15 {strides = array<i32>} : memref<1x1x8x8xf32, #tpu.memory_space<vmem>>, vector<1x1x8x8xf32>,
    return
  }
  func.func @transform_0(%arg0: i32, %arg1: i32) -> (i32, i32, i32) {
    %c0_i32 = arith.constant 0 : i32
    %c0_i32_0 = arith.constant 0 : i32
    %c0_i32_1 = arith.constant 0 : i32
    return %arg0, %c0_i32, %c0_i32_0 : i32, i32, i32
  }
  func.func @transform_1(%arg0: i32, %arg1: i32) -> (i32, i32, i32, i32) {
    %c0_i32 = arith.constant 0 : i32
    %c0_i32_0 = arith.constant 0 : i32
    %c0_i32_1 = arith.constant 0 : i32
    return %arg0, %arg1, %c0_i32, %c0_i32_0 : i32, i32, i32, i32
  }
  func.func @transform_2(%arg0: i32, %arg1: i32) -> (i32, i32) {
    %c0_i32 = arith.constant 0 : i32
    %c0_i32_0 = arith.constant 0 : i32
    %c0_i32_1 = arith.constant 0 : i32
    return %c0_i32, %c0_i32_0 : i32, i32
  }
  func.func @transform_3(%arg0: i32, %arg1: i32) -> (i32, i32) {
    %c0_i32 = arith.constant 0 : i32
    %c0_i32_0 = arith.constant 0 : i32
    %c0_i32_1 = arith.constant 0 : i32
    return %c0_i32, %c0_i32_0 : i32, i32
  }
  func.func @transform_4(%arg0: i32, %arg1: i32) -> (i32, i32, i32, i32) {
    %c0_i32 = arith.constant 0 : i32
    %c0_i32_0 = arith.constant 0 : i32
    %c0_i32_1 = arith.constant 0 : i32
    return %arg0, %arg1, %c0_i32, %c0_i32_0 : i32, i32, i32, i32
  }
  func.func @transform_5(%arg0: i32, %arg1: i32) -> (i32, i32, i32, i32) {
    %c0_i32 = arith.constant 0 : i32
    %c0_i32_0 = arith.constant 0 : i32
    %c0_i32_1 = arith.constant 0 : i32
    return %arg0, %arg1, %c0_i32, %c0_i32_0 : i32, i32, i32, i32
  }
}

module attributes {stable_mosaic.version = 11 : i64} {
  func.func @stage1_kernel(%arg0: i32, %arg1: memref<1x8x32xf32, #tpu.memory_space<vmem>>, %arg2: memref<32x64xf32, #tpu.memory_space<vmem>>, %arg3: memref<1x64xf32, #tpu.memory_space<vmem>>, %arg4: memref<64x40xf32, #tpu.memory_space<vmem>>, %arg5: memref<1x40xf32, #tpu.memory_space<vmem>>, %arg6: memref<32x64xf32, #tpu.memory_space<vmem>>, %arg7: memref<1x64xf32, #tpu.memory_space<vmem>>, %arg8: memref<64x40xf32, #tpu.memory_space<vmem>>, %arg9: memref<1x40xf32, #tpu.memory_space<vmem>>, %arg10: memref<40x10240xf32, #tpu.memory_space<vmem>>, %arg11: memref<1x8x40xf32, #tpu.memory_space<vmem>>, %arg12: memref<1x8x10240xf32, #tpu.memory_space<vmem>>) attributes {dimension_semantics = [#tpu.dimension_semantics<parallel>], iteration_bounds = array<i64: 2>, scalar_prefetch = 0 : i64, scratch_operands = 0 : i64, tpu.core_type = #tpu.core_type<tc>, window_params = [{transform_indices = @transform_0, window_bounds = array<i64: 1, 8, 32>}, {pipeline_mode = #tpu.pipeline_mode<synchronous>, transform_indices = @transform_1, window_bounds = array<i64: 32, 64>}, {pipeline_mode = #tpu.pipeline_mode<synchronous>, transform_indices = @transform_2, window_bounds = array<i64: 1, 64>}, {pipeline_mode = #tpu.pipeline_mode<synchronous>, transform_indices = @transform_3, window_bounds = array<i64: 64, 40>}, {pipeline_mode = #tpu.pipeline_mode<synchronous>, transform_indices = @transform_4, window_bounds = array<i64: 1, 40>}, {pipeline_mode = #tpu.pipeline_mode<synchronous>, transform_indices = @transform_5, window_bounds = array<i64: 32, 64>}, {pipeline_mode = #tpu.pipeline_mode<synchronous>, transform_indices = @transform_6, window_bounds = array<i64: 1, 64>}, {pipeline_mode = #tpu.pipeline_mode<synchronous>, transform_indices = @transform_7, window_bounds = array<i64: 64, 40>}, {pipeline_mode = #tpu.pipeline_mode<synchronous>, transform_indices = @transform_8, window_bounds = array<i64: 1, 40>}, {pipeline_mode = #tpu.pipeline_mode<synchronous>, transform_indices = @transform_9, window_bounds = array<i64: 40, 10240>}, {transform_indices = @transform_10, window_bounds = array<i64: 1, 8, 40>}, {transform_indices = @transform_11, window_bounds = array<i64: 1, 8, 10240>}]} {
    %c0 = arith.constant 0 : index
    %c0_0 = arith.constant 0 : index
    %c0_1 = arith.constant 0 : index
    %0 = vector.load %arg1[%c0, %c0_0, %c0_1] : memref<1x8x32xf32, #tpu.memory_space<vmem>>, vector<1x8x32xf32>
    %1 = vector.shape_cast %0 : vector<1x8x32xf32> to vector<8x32xf32>
    %c0_2 = arith.constant 0 : index
    %c0_3 = arith.constant 0 : index
    %2 = vector.load %arg2[%c0_2, %c0_3] : memref<32x64xf32, #tpu.memory_space<vmem>>, vector<32x64xf32>
    %cst = arith.constant dense<0.000000e+00> : vector<8x64xf32>
    %3 = tpu.matmul %1, %2, %cst {dimension_numbers = #tpu.dot_dimension_numbers<[1], [0], [0], [1], [0, 0, 1, 1], [], []>} : vector<8x32xf32>, vector<32x64xf32>, vector<8x64xf32> -> vector<8x64xf32>
    %c0_4 = arith.constant 0 : index
    %c0_5 = arith.constant 0 : index
    %4 = vector.load %arg3[%c0_4, %c0_5] : memref<1x64xf32, #tpu.memory_space<vmem>>, vector<1x64xf32>
    %5 = vector.broadcast %4 : vector<1x64xf32> to vector<8x64xf32>
    %6 = arith.addf %3, %5 : vector<8x64xf32>
    %cst_6 = arith.constant 0.000000e+00 : f32
    %7 = vector.broadcast %cst_6 : f32 to vector<8x64xf32>
    %8 = arith.maximumf %6, %7 : vector<8x64xf32>
    %c0_7 = arith.constant 0 : index
    %c0_8 = arith.constant 0 : index
    %9 = vector.load %arg4[%c0_7, %c0_8] : memref<64x40xf32, #tpu.memory_space<vmem>>, vector<64x40xf32>
    %cst_9 = arith.constant dense<0.000000e+00> : vector<8x40xf32>
    %10 = tpu.matmul %8, %9, %cst_9 {dimension_numbers = #tpu.dot_dimension_numbers<[1], [0], [0], [1], [0, 0, 1, 1], [], []>} : vector<8x64xf32>, vector<64x40xf32>, vector<8x40xf32> -> vector<8x40xf32>
    %c0_10 = arith.constant 0 : index
    %c0_11 = arith.constant 0 : index
    %11 = vector.load %arg5[%c0_10, %c0_11] : memref<1x40xf32, #tpu.memory_space<vmem>>, vector<1x40xf32>
    %12 = vector.broadcast %11 : vector<1x40xf32> to vector<8x40xf32>
    %13 = arith.addf %10, %12 : vector<8x40xf32>
    %c0_12 = arith.constant 0 : index
    %c0_13 = arith.constant 0 : index
    %14 = vector.load %arg6[%c0_12, %c0_13] : memref<32x64xf32, #tpu.memory_space<vmem>>, vector<32x64xf32>
    %cst_14 = arith.constant dense<0.000000e+00> : vector<8x64xf32>
    %15 = tpu.matmul %1, %14, %cst_14 {dimension_numbers = #tpu.dot_dimension_numbers<[1], [0], [0], [1], [0, 0, 1, 1], [], []>} : vector<8x32xf32>, vector<32x64xf32>, vector<8x64xf32> -> vector<8x64xf32>
    %c0_15 = arith.constant 0 : index
    %c0_16 = arith.constant 0 : index
    %16 = vector.load %arg7[%c0_15, %c0_16] : memref<1x64xf32, #tpu.memory_space<vmem>>, vector<1x64xf32>
    %17 = vector.broadcast %16 : vector<1x64xf32> to vector<8x64xf32>
    %18 = arith.addf %15, %17 : vector<8x64xf32>
    %cst_17 = arith.constant 0.000000e+00 : f32
    %19 = vector.broadcast %cst_17 : f32 to vector<8x64xf32>
    %20 = arith.maximumf %18, %19 : vector<8x64xf32>
    %c0_18 = arith.constant 0 : index
    %c0_19 = arith.constant 0 : index
    %21 = vector.load %arg8[%c0_18, %c0_19] : memref<64x40xf32, #tpu.memory_space<vmem>>, vector<64x40xf32>
    %cst_20 = arith.constant dense<0.000000e+00> : vector<8x40xf32>
    %22 = tpu.matmul %20, %21, %cst_20 {dimension_numbers = #tpu.dot_dimension_numbers<[1], [0], [0], [1], [0, 0, 1, 1], [], []>} : vector<8x64xf32>, vector<64x40xf32>, vector<8x40xf32> -> vector<8x40xf32>
    %c0_21 = arith.constant 0 : index
    %c0_22 = arith.constant 0 : index
    %23 = vector.load %arg9[%c0_21, %c0_22] : memref<1x40xf32, #tpu.memory_space<vmem>>, vector<1x40xf32>
    %24 = vector.broadcast %23 : vector<1x40xf32> to vector<8x40xf32>
    %25 = arith.addf %22, %24 : vector<8x40xf32>
    %c0_23 = arith.constant 0 : index
    %c0_24 = arith.constant 0 : index
    %c0_25 = arith.constant 0 : index
    %26 = vector.load %arg11[%c0_23, %c0_24, %c0_25] : memref<1x8x40xf32, #tpu.memory_space<vmem>>, vector<1x8x40xf32>
    %27 = vector.shape_cast %26 : vector<1x8x40xf32> to vector<8x40xf32>
    %28 = vector.shape_cast %25 : vector<8x40xf32> to vector<1x8x40xf32>
    tpu.vector_store %arg11[%c0_23, %c0_24, %c0_25], %28 {strides = array<i32>} : memref<1x8x40xf32, #tpu.memory_space<vmem>>, vector<1x8x40xf32>,
    %c0_26 = arith.constant 0 : index
    %c0_27 = arith.constant 0 : index
    %29 = vector.load %arg10[%c0_26, %c0_27] : memref<40x10240xf32, #tpu.memory_space<vmem>>, vector<40x10240xf32>
    %cst_28 = arith.constant dense<0.000000e+00> : vector<8x10240xf32>
    %30 = tpu.matmul %13, %29, %cst_28 {dimension_numbers = #tpu.dot_dimension_numbers<[1], [0], [0], [1], [0, 0, 1, 1], [], []>} : vector<8x40xf32>, vector<40x10240xf32>, vector<8x10240xf32> -> vector<8x10240xf32>
    %c0_29 = arith.constant 0 : index
    %c0_30 = arith.constant 0 : index
    %c0_31 = arith.constant 0 : index
    %31 = vector.load %arg12[%c0_29, %c0_30, %c0_31] : memref<1x8x10240xf32, #tpu.memory_space<vmem>>, vector<1x8x10240xf32>
    %32 = vector.shape_cast %31 : vector<1x8x10240xf32> to vector<8x10240xf32>
    %33 = vector.shape_cast %30 : vector<8x10240xf32> to vector<1x8x10240xf32>
    tpu.vector_store %arg12[%c0_29, %c0_30, %c0_31], %33 {strides = array<i32>} : memref<1x8x10240xf32, #tpu.memory_space<vmem>>, vector<1x8x10240xf32>,
    return
  }
  func.func @transform_0(%arg0: i32) -> (i32, i32, i32) {
    %c0_i32 = arith.constant 0 : i32
    %c0_i32_0 = arith.constant 0 : i32
    %c0_i32_1 = arith.constant 0 : i32
    return %arg0, %c0_i32, %c0_i32_0 : i32, i32, i32
  }
  func.func @transform_1(%arg0: i32) -> (i32, i32) {
    %c0_i32 = arith.constant 0 : i32
    %c0_i32_0 = arith.constant 0 : i32
    %c0_i32_1 = arith.constant 0 : i32
    return %c0_i32, %c0_i32_0 : i32, i32
  }
  func.func @transform_2(%arg0: i32) -> (i32, i32) {
    %c0_i32 = arith.constant 0 : i32
    %c0_i32_0 = arith.constant 0 : i32
    %c0_i32_1 = arith.constant 0 : i32
    return %c0_i32, %c0_i32_0 : i32, i32
  }
  func.func @transform_3(%arg0: i32) -> (i32, i32) {
    %c0_i32 = arith.constant 0 : i32
    %c0_i32_0 = arith.constant 0 : i32
    %c0_i32_1 = arith.constant 0 : i32
    return %c0_i32, %c0_i32_0 : i32, i32
  }
  func.func @transform_4(%arg0: i32) -> (i32, i32) {
    %c0_i32 = arith.constant 0 : i32
    %c0_i32_0 = arith.constant 0 : i32
    %c0_i32_1 = arith.constant 0 : i32
    return %c0_i32, %c0_i32_0 : i32, i32
  }
  func.func @transform_5(%arg0: i32) -> (i32, i32) {
    %c0_i32 = arith.constant 0 : i32
    %c0_i32_0 = arith.constant 0 : i32
    %c0_i32_1 = arith.constant 0 : i32
    return %c0_i32, %c0_i32_0 : i32, i32
  }
  func.func @transform_6(%arg0: i32) -> (i32, i32) {
    %c0_i32 = arith.constant 0 : i32
    %c0_i32_0 = arith.constant 0 : i32
    %c0_i32_1 = arith.constant 0 : i32
    return %c0_i32, %c0_i32_0 : i32, i32
  }
  func.func @transform_7(%arg0: i32) -> (i32, i32) {
    %c0_i32 = arith.constant 0 : i32
    %c0_i32_0 = arith.constant 0 : i32
    %c0_i32_1 = arith.constant 0 : i32
    return %c0_i32, %c0_i32_0 : i32, i32
  }
  func.func @transform_8(%arg0: i32) -> (i32, i32) {
    %c0_i32 = arith.constant 0 : i32
    %c0_i32_0 = arith.constant 0 : i32
    %c0_i32_1 = arith.constant 0 : i32
    return %c0_i32, %c0_i32_0 : i32, i32
  }
  func.func @transform_9(%arg0: i32) -> (i32, i32) {
    %c0_i32 = arith.constant 0 : i32
    %c0_i32_0 = arith.constant 0 : i32
    %c0_i32_1 = arith.constant 0 : i32
    return %c0_i32, %c0_i32_0 : i32, i32
  }
  func.func @transform_10(%arg0: i32) -> (i32, i32, i32) {
    %c0_i32 = arith.constant 0 : i32
    %c0_i32_0 = arith.constant 0 : i32
    %c0_i32_1 = arith.constant 0 : i32
    return %arg0, %c0_i32, %c0_i32_0 : i32, i32, i32
  }
  func.func @transform_11(%arg0: i32) -> (i32, i32, i32) {
    %c0_i32 = arith.constant 0 : i32
    %c0_i32_0 = arith.constant 0 : i32
    %c0_i32_1 = arith.constant 0 : i32
    return %arg0, %c0_i32, %c0_i32_0 : i32, i32, i32
  }
}

</mosaic_0001>

<llo_original>
// kernel: slot_classifier_forward.3
$region0: #{slot_classifier_forward.3}
  #allocation0 [shape = 'u32[]', space=smem, size = 0x4, offset = 0x4, fixed_abs, tag = 'smem constant byte address 0x4 - core index']
  #allocation1 [shape = 'u32[72,128]{1,0:T(1,128)}', space=vmem, size = 0x9000, scoped, tag = 'internal scratch']
  %s0 = inlined_call_operand.vmem [shape: f32[2,8,40], index: 0, kind: input, shape index: {}]
  %s1 = inlined_call_operand.vmem [shape: f32[2,8,40,256], index: 1, kind: input, shape index: {}]
  %s2 = inlined_call_operand.hbm [shape: f32[256,8], index: 2, kind: input, shape index: {}]
  %s3 = inlined_call_operand.hbm [shape: f32[1,8], index: 3, kind: input, shape index: {}]
  %s4 = inlined_call_operand.hbm [shape: f32[2,8,8,256], index: 4, kind: output, shape index: {0}]
  %s5 = inlined_call_operand.hbm [shape: f32[2,8,8,8], index: 5, kind: output, shape index: {1}]
  %6 = xla_tuple %s4, %s5
  %s7 = sld [smem:[#allocation0]]
  $region65: #{slot_classifier_forward.3} parent=0
    _
  %s9 = ssub.s32 1, %s7
  %s10 = scalar_select 0, %s9, %s7
  $region1: #{slot_classifier_forward.3} parent=0
    #allocation2 [shape = 'u8[131072]{0}', space=vmem, size = 0x20000, scoped, tag = 'input window, operand 2, single buffered']
    #allocation3 [shape = 's32[2]{0}', space=sflag, size = 0x8, scoped, tag = 'scoped memory for slot_classifier_forward.3']
    #allocation4 [shape = 's32[2]{0}', space=sflag, size = 0x8, scoped, tag = 'scoped memory for slot_classifier_forward.3']
    #allocation5 [shape = 'u8[512]{0}', space=vmem, size = 0x400, scoped, tag = 'input window, operand 3, single buffered']
    #allocation6 [shape = 's32[1]{0}', space=sflag, size = 0x4, scoped, tag = 'scoped memory for slot_classifier_forward.3']
    #allocation7 [shape = 'u8[16384]{0}', space=vmem, size = 0x4000, scoped, tag = 'output window, operand 0']
    #allocation8 [shape = 'u8[8192]{0}', space=vmem, size = 0x2000, scoped, tag = 'output window, operand 1']
    #allocation9 [shape = 's32[2]{0}', space=sflag, size = 0x8, scoped, tag = 'scoped memory for slot_classifier_forward.3']
    %11 = vsyncpa [#allocation3], 0
    %12 = vsyncpa [#allocation6], 0
    %13 = vsyncpa [#allocation4], 0
    %s14 = scalar_lea.sflag [#allocation4], 1
    %15 = vsyncpa %s14, 0
    %16 = vsyncpa [#allocation9], 0
    %s17 = scalar_lea.sflag [#allocation9], 1
    %18 = vsyncpa %s17, 0
    loop: start=0, step=1, limit=18
    $region2: #{slot_classifier_forward.3} parent=1 // loop_pre_header
      _
    $region3: #{slot_classifier_forward.3} parent=1 // loop_header
      %s20 = sphi 0, %s24
      %p21 = scmp.ge.s32.totalorder %s20, 18
      %s27 = sphi 0, %s39
      %s28 = sphi 0, %s35
      %s29 = sphi 0, %s27
      %s30 = sphi 0, %s28
      %s31 = sphi 0, %s29
      %s32 = sphi 0, %s30
      %s42 = sphi 0, %s44
      %s45 = sphi 0, %s42
      %s46 = sphi 0, %s45
      %s62 = sphi 0, %s46
      %s70 = sphi 0, %s72
      %s73 = sphi 0, %s70
      %s74 = sphi 0, %s73
      %s90 = sphi 0, %s74
      %s94 = sphi 0, %s94
      %s96 = sphi 0, %s94
      %s97 = sphi 0, %s96
      %s111 = sphi 0, %s97
      %s115 = sphi 0, %s115
      %s117 = sphi 0, %s115
      %s118 = sphi 0, %s117
      %s132 = sphi 0, %s118
      %s140 = sphi 0, %s142
      %s143 = sphi 0, %s140
      %s144 = sphi 0, %s143
      %s160 = sphi 0, %s144
      %s168 = sphi 0, %s170
      %s171 = sphi 0, %s168
      %s172 = sphi 0, %s171
      %s188 = sphi 0, %s172
    $region4: #{slot_classifier_forward.3} parent=1 // loop_header_branch
      %23 = sbr.rel (%p21) target = $region8
    $region5: #{slot_classifier_forward.3} parent=1 // loop_body
      %s25 = ssub.s32 %s20, 1
      %s26 = ssub.s32 %s20, 2
      %s33 = sadd.s32 1, %s28
      %p34 = scmp.ge.s32.totalorder %s33, 8
      %s35 = scalar_select %p34, 0, %s33
      %s36 = sadd.s32 1, %s27
      %s37 = scalar_select %p34, %s36, %s27
      %p38 = scmp.ge.s32.totalorder %s37, 2
      %s39 = scalar_select %p38, 0, %s37
      %s40 = ssub.s32 %s27, %s39
      %p41 = scmp.eq.s32.totalorder %s40, 0
      %s43 = sadd.s32 %s42, 1
      %s44 = scalar_select %p41, %s42, %s43
      %p47 = pneg %p41
      %p48 = scmp.eq.s32.totalorder %s20, 15
      %p49 = por %p47, %p48
      %p50 = scmp.ne.s32.totalorder %s42, %s45
      %p51 = scmp.eq.s32.totalorder %s20, 0
      %p52 = por %p50, %p51
      %p53 = scmp.ne.s32.totalorder %s42, %s45
      %p54 = scmp.eq.s32.totalorder %s25, 15
      %p55 = por %p53, %p54
      %p56 = scmp.ne.s32.totalorder %s45, %s46
      %p57 = scmp.eq.s32.totalorder %s25, 0
      %p58 = por %p56, %p57
      %p59 = scmp.ne.s32.totalorder %s45, %s46
      %p60 = scmp.eq.s32.totalorder %s26, 15
      %p61 = por %p59, %p60
      %p63 = scmp.ne.s32.totalorder %s46, %s62
      %p64 = scmp.eq.s32.totalorder %s26, 0
      %p65 = por %p63, %p64
      %s66 = ssub.s32 %s27, %s39
      %s67 = ssub.s32 %s28, %s35
      %s68 = sor.u32 %s66, %s67
      %p69 = scmp.eq.s32.totalorder %s68, 0
      %s71 = sadd.s32 %s70, 1
      %s72 = scalar_select %p69, %s70, %s71
      %p75 = pneg %p69
      %p76 = scmp.eq.s32.totalorder %s20, 15
      %p77 = por %p75, %p76
      %p78 = scmp.ne.s32.totalorder %s70, %s73
      %p79 = scmp.eq.s32.totalorder %s20, 0
      %p80 = por %p78, %p79
      %p81 = scmp.ne.s32.totalorder %s70, %s73
      %p82 = scmp.eq.s32.totalorder %s25, 15
      %p83 = por %p81, %p82
      %p84 = scmp.ne.s32.totalorder %s73, %s74
      %p85 = scmp.eq.s32.totalorder %s25, 0
      %p86 = por %p84, %p85
      %p87 = scmp.ne.s32.totalorder %s73, %s74
      %p88 = scmp.eq.s32.totalorder %s26, 15
      %p89 = por %p87, %p88
      %p91 = scmp.ne.s32.totalorder %s74, %s90
      %p92 = scmp.eq.s32.totalorder %s26, 0
      %p93 = por %p91, %p92
      %s95 = sadd.s32 %s94, 1
      %p98 = scmp.eq.s32.totalorder %s20, 15
      %p99 = scmp.ne.s32.totalorder %s94, %s96
      %p100 = scmp.eq.s32.totalorder %s20, 0
      %p101 = por %p99, %p100
      %p102 = scmp.ne.s32.totalorder %s94, %s96
      %p103 = scmp.eq.s32.totalorder %s25, 15
      %p104 = por %p102, %p103
      %p105 = scmp.ne.s32.totalorder %s96, %s97
      %p106 = scmp.eq.s32.totalorder %s25, 0
      %p107 = por %p105, %p106
      %p108 = scmp.ne.s32.totalorder %s96, %s97
      %p109 = scmp.eq.s32.totalorder %s26, 15
      %p110 = por %p108, %p109
      %p112 = scmp.ne.s32.totalorder %s97, %s111
      %p113 = scmp.eq.s32.totalorder %s26, 0
      %p114 = por %p112, %p113
      %s116 = sadd.s32 %s115, 1
      %p119 = scmp.eq.s32.totalorder %s20, 15
      %p120 = scmp.ne.s32.totalorder %s115, %s117
      %p121 = scmp.eq.s32.totalorder %s20, 0
      %p122 = por %p120, %p121
      %p123 = scmp.ne.s32.totalorder %s115, %s117
      %p124 = scmp.eq.s32.totalorder %s25, 15
      %p125 = por %p123, %p124
      %p126 = scmp.ne.s32.totalorder %s117, %s118
      %p127 = scmp.eq.s32.totalorder %s25, 0
      %p128 = por %p126, %p127
      %p129 = scmp.ne.s32.totalorder %s117, %s118
      %p130 = scmp.eq.s32.totalorder %s26, 15
      %p131 = por %p129, %p130
      %p133 = scmp.ne.s32.totalorder %s118, %s132
      %p134 = scmp.eq.s32.totalorder %s26, 0
      %p135 = por %p133, %p134
      %s136 = ssub.s32 %s27, %s39
      %s137 = ssub.s32 %s28, %s35
      %s138 = sor.u32 %s136, %s137
      %p139 = scmp.eq.s32.totalorder %s138, 0
      %s141 = sadd.s32 %s140, 1
      %s142 = scalar_select %p139, %s140, %s141
      %p145 = pneg %p139
      %p146 = scmp.eq.s32.totalorder %s20, 15
      %p147 = por %p145, %p146
      %p148 = scmp.ne.s32.totalorder %s140, %s143
      %p149 = scmp.eq.s32.totalorder %s20, 0
      %p150 = por %p148, %p149
      %p151 = scmp.ne.s32.totalorder %s140, %s143
      %p152 = scmp.eq.s32.totalorder %s25, 15
      %p153 = por %p151, %p152
      %p154 = scmp.ne.s32.totalorder %s143, %s144
      %p155 = scmp.eq.s32.totalorder %s25, 0
      %p156 = por %p154, %p155
      %p157 = scmp.ne.s32.totalorder %s143, %s144
      %p158 = scmp.eq.s32.totalorder %s26, 15
      %p159 = por %p157, %p158
      %p161 = scmp.ne.s32.totalorder %s144, %s160
      %p162 = scmp.eq.s32.totalorder %s26, 0
      %p163 = por %p161, %p162
      %s164 = ssub.s32 %s27, %s39
      %s165 = ssub.s32 %s28, %s35
      %s166 = sor.u32 %s164, %s165
      %p167 = scmp.eq.s32.totalorder %s166, 0
      %s169 = sadd.s32 %s168, 1
      %s170 = scalar_select %p167, %s168, %s169
      %p173 = pneg %p167
      %p174 = scmp.eq.s32.totalorder %s20, 15
      %p175 = por %p173, %p174
      %p176 = scmp.ne.s32.totalorder %s168, %s171
      %p177 = scmp.eq.s32.totalorder %s20, 0
      %p178 = por %p176, %p177
      %p179 = scmp.ne.s32.totalorder %s168, %s171
      %p180 = scmp.eq.s32.totalorder %s25, 15
      %p181 = por %p179, %p180
      %p182 = scmp.ne.s32.totalorder %s171, %s172
      %p183 = scmp.eq.s32.totalorder %s25, 0
      %p184 = por %p182, %p183
      %p185 = scmp.ne.s32.totalorder %s171, %s172
      %p186 = scmp.eq.s32.totalorder %s26, 15
      %p187 = por %p185, %p186
      %p189 = scmp.ne.s32.totalorder %s172, %s188
      %p190 = scmp.eq.s32.totalorder %s26, 0
      %p191 = por %p189, %p190
      %p192 = scmp.le.s32.totalorder 1, %s20
      %p193 = scmp.lt.s32.totalorder %s20, 17
      %p194 = pnand %p192, %p193
      %p195 = pneg %p194
      // Predicated region
      $region9: #{slot_classifier_forward.3} parent=5 // pred_check
        _
      $region10: #{slot_classifier_forward.3} parent=5 // pred_check_branch
        %197 = sbr.rel (%p194) target = $region12
      $region11: #{slot_classifier_forward.3} parent=5 // pred_region
        %s198 = ssub.s32 %s20, 1
        // Predicated region
        $region13: #{slot_classifier_forward.3} parent=11 // pred_check
          %p199 = pneg %p107
        $region14: #{slot_classifier_forward.3} parent=11 // pred_check_branch
          %201 = sbr.rel (%p199) target = $region16
        $region15: #{slot_classifier_forward.3} parent=11 // pred_region
          %203 = vsyncadd [#allocation3], 0
          %s204 = sshll.u32 %s2, 4
          %s205 = int_to_ptr.hbm [resolvable:$true] %s204
          %s206 = sshll.u32 [#allocation2], 4
          %s207 = int_to_ptr.vmem [resolvable:$true] %s206
          %212 = dma.hbm_to_vmem [thread:$0]  %s205, 4096, %s207, [#allocation3], 128, 128, 8
        $region16: #{slot_classifier_forward.3} parent=11 // pred_fallthru
          _
        // Predicated region
        $region17: #{slot_classifier_forward.3} parent=11 // pred_check
          %p213 = pneg %p128
        $region18: #{slot_classifier_forward.3} parent=11 // pred_check_branch
          %215 = sbr.rel (%p213) target = $region20
        $region19: #{slot_classifier_forward.3} parent=11 // pred_region
          %217 = vsyncadd [#allocation6], 0
          %s219 = sshll.u32 %s3, 4
          %s220 = int_to_ptr.hbm [resolvable:$true] %s219
          %s221 = sshll.u32 [#allocation5], 4
          %s222 = int_to_ptr.vmem [resolvable:$true] %s221
          %224 = dma.hbm_to_vmem [thread:$0]  %s220, 16, %s222, [#allocation6]
        $region20: #{slot_classifier_forward.3} parent=11 // pred_fallthru
          _
      $region12: #{slot_classifier_forward.3} parent=5 // pred_fallthru
        _
      %p225 = scmp.lt.s32.totalorder %s20, 16
      // Predicated region
      $region21: #{slot_classifier_forward.3} parent=5 // pred_check
        %p226 = pneg %p225
      $region22: #{slot_classifier_forward.3} parent=5 // pred_check_branch
        %228 = sbr.rel (%p226) target = $region24
      $region23: #{slot_classifier_forward.3} parent=5 // pred_region
        // Predicated region
        $region25: #{slot_classifier_forward.3} parent=23 // pred_check
          %p229 = pneg %p52
        $region26: #{slot_classifier_forward.3} parent=23 // pred_check_branch
          %231 = sbr.rel (%p229) target = $region28
        $region27: #{slot_classifier_forward.3} parent=23 // pred_region
          %p232 = scmp.lt.s32.totalorder %s27, 1
          %s233 = scalar_select %p232, %s27, 1
          %s234 = smul.addr %s233, 8
          %s235 = scalar_lea.vmem %s0, %s234
        $region28: #{slot_classifier_forward.3} parent=23 // pred_fallthru
          _
        // Predicated region
        $region29: #{slot_classifier_forward.3} parent=23 // pred_check
          %p236 = pneg %p80
        $region30: #{slot_classifier_forward.3} parent=23 // pred_check_branch
          %238 = sbr.rel (%p236) target = $region32
        $region31: #{slot_classifier_forward.3} parent=23 // pred_region
          %p239 = scmp.lt.s32.totalorder %s27, 1
          %s240 = scalar_select %p239, %s27, 1
          %p241 = scmp.lt.s32.totalorder %s28, 7
          %s242 = scalar_select %p241, %s28, 7
          %s243 = smul.addr %s242, 10
          %s244 = smul.addr %s240, 80
          %s245 = sadd.s32 %s243, %s244
          %s246 = smul.addr %s245, 8
          %s247 = scalar_lea.vmem %s1, %s246
        $region32: #{slot_classifier_forward.3} parent=23 // pred_fallthru
          _
      $region24: #{slot_classifier_forward.3} parent=5 // pred_fallthru
        _
      %p248 = scmp.le.s32.totalorder 1, %s20
      %p249 = scmp.lt.s32.totalorder %s20, 17
      %p250 = pnand %p248, %p249
      %p251 = pneg %p250
      // Predicated region
      $region33: #{slot_classifier_forward.3} parent=5 // pred_check
        _
      $region34: #{slot_classifier_forward.3} parent=5 // pred_check_branch
        %253 = sbr.rel (%p250) target = $region36
      $region35: #{slot_classifier_forward.3} parent=5 // pred_region
        %s254 = ssub.s32 %s20, 1
        // Predicated region
        $region37: #{slot_classifier_forward.3} parent=35 // pred_check
          %p255 = pneg %p107
        $region38: #{slot_classifier_forward.3} parent=35 // pred_check_branch
          %257 = sbr.rel (%p255) target = $region40
        $region39: #{slot_classifier_forward.3} parent=35 // pred_region
          %259 = dma.done [#allocation3], 4096
        $region40: #{slot_classifier_forward.3} parent=35 // pred_fallthru
          _
        // Predicated region
        $region41: #{slot_classifier_forward.3} parent=35 // pred_check
          %p260 = pneg %p128
        $region42: #{slot_classifier_forward.3} parent=35 // pred_check_branch
          %262 = sbr.rel (%p260) target = $region44
        $region43: #{slot_classifier_forward.3} parent=35 // pred_region
          %264 = dma.done [#allocation6], 16
        $region44: #{slot_classifier_forward.3} parent=35 // pred_fallthru
          _
        %p265 = scmp.lt.s32.totalorder %s29, 1
        %s266 = scalar_select %p265, %s29, 1
        %s267 = smul.addr %s266, 8
        %s268 = scalar_lea.vmem %s0, %s267
        %p269 = pneg %p58
        %p270 = pneg %p55
        %p271 = scmp.lt.s32.totalorder %s29, 1
        %s272 = scalar_select %p271, %s29, 1
        %p273 = scmp.lt.s32.totalorder %s30, 7
        %s274 = scalar_select %p273, %s30, 7
        %s275 = smul.addr %s274, 10
        %s276 = smul.addr %s272, 80
        %s277 = sadd.s32 %s275, %s276
        %s278 = smul.addr %s277, 8
        %s279 = scalar_lea.vmem %s1, %s278
        %p280 = pneg %p86
        %p281 = pneg %p83
        %p282 = pneg %p107
        %p283 = pneg %p104
        %p284 = pneg %p128
        %p285 = pneg %p125
        %p286 = pneg %p156
        %p287 = pneg %p153
        %s288 = sand.u32 %s143, 1
        %s289 = scalar_lea.sflag [#allocation4], %s288
        %s290 = sand.u32 %s143, 1
        %s291 = smul.addr %s290, 16
        %s292 = scalar_lea.vmem [#allocation7], %s291
        %p293 = pneg %p184
        %p294 = pneg %p181
        %s295 = sand.u32 %s171, 1
        %s296 = scalar_lea.sflag [#allocation9], %s295
        %s297 = sand.u32 %s171, 1
        %s298 = smul.addr %s297, 8
        %s299 = scalar_lea.vmem [#allocation8], %s298
        %p300 = scmp.lt.s32.totalorder %s29, 1
        %s301 = scalar_select %p300, %s29, 1
        %s302 = smul.addr %s301, 8
        %s303 = scalar_lea.vmem %s0, %s302
        %p304 = scmp.lt.s32.totalorder %s29, 1
        %s305 = scalar_select %p304, %s29, 1
        %p306 = scmp.lt.s32.totalorder %s30, 7
        %s307 = scalar_select %p306, %s30, 7
        %s308 = smul.addr %s307, 10
        %s309 = smul.addr %s305, 80
        %s310 = sadd.s32 %s308, %s309
        %s311 = smul.addr %s310, 8
        %s312 = scalar_lea.vmem %s1, %s311
        %v313 = vld [vmem:[%s303] sm:$0xff]
        %v314 = vld [vmem:[%s312] sm:$0xff]
        %v315 = vld [vmem:[%s312 + $0x8] sm:$0xff]
        %v316 = vld [vmem:[%s312 + $0x10] sm:$0xff]
        %v317 = vld [vmem:[%s312 + $0x18] sm:$0xff]
        %v318 = vld [vmem:[%s312 + $0x20] sm:$0xff]
        %v319 = vld [vmem:[%s312 + $0x28] sm:$0xff]
        %v320 = vld [vmem:[%s312 + $0x30] sm:$0xff]
        %v321 = vld [vmem:[%s312 + $0x38] sm:$0xff]
        %v322 = vld [vmem:[%s312 + $0x40] sm:$0xff]
        %v323 = vld [vmem:[%s312 + $0x48] sm:$0xff]
        %vm324 = vcmask 326656
        %v326 = vsel %vm324, %v313, 0
        %328 = vmatpush.msra.mxu0 0.0
        %329 = vmatpush.msra.mxu0 0.0
        %330 = vmatpush.msra.mxu0 0.0
        %331 = vmatpush.msra.mxu0 0.0
        %332 = vmatpush.msra.mxu0 0.0
        %333 = vmatpush.msra.mxu0 0.0
        %334 = vmatpush.msra.mxu0 0.0
        %335 = vmatpush.msra.mxu0 0.0
        %336 = vmatpush.msra.mxu0 0.0
        %337 = vmatpush.msra.mxu0 0.0
        %338 = vmatpush.msra.mxu0 0.0
        %339 = vmatpush.msra.mxu0 %v322
        %340 = vmatpush.msra.mxu0 %v320
        %341 = vmatpush.msra.mxu0 %v318
        %342 = vmatpush.msra.mxu0 %v316
        %343 = vmatpush.msra.mxu0 %v314
        %344 = vmatmul.f32.gmra.mxu0 %v326
        %v345 = vpop.f32.mrf.mxu0
        %v346 = vadd.f32 0.0, %v345
        %347 = vdwg.mxu0
        %348 = vmatpush.msra.mxu0 0.0
        %349 = vmatpush.msra.mxu0 0.0
        %350 = vmatpush.msra.mxu0 0.0
        %351 = vmatpush.msra.mxu0 0.0
        %352 = vmatpush.msra.mxu0 0.0
        %353 = vmatpush.msra.mxu0 0.0
        %354 = vmatpush.msra.mxu0 0.0
        %355 = vmatpush.msra.mxu0 0.0
        %356 = vmatpush.msra.mxu0 0.0
        %357 = vmatpush.msra.mxu0 0.0
        %358 = vmatpush.msra.mxu0 0.0
        %359 = vmatpush.msra.mxu0 %v323
        %360 = vmatpush.msra.mxu0 %v321
        %361 = vmatpush.msra.mxu0 %v319
        %362 = vmatpush.msra.mxu0 %v317
        %363 = vmatpush.msra.mxu0 %v315
        %364 = vmatmul.f32.gmra.mxu0 %v326
        %v365 = vpop.f32.mrf.mxu0
        %v366 = vadd.f32 0.0, %v365
        %367 = vdwg.mxu0
        %368 = vst [vmem:[%s292] sm:$0xff] %v346
        %369 = vst [vmem:[%s292 + $0x8] sm:$0xff] %v366
        %v370 = vld [vmem:[#allocation2] sm:$0xff]
        %v371 = vld [vmem:[#allocation2 + $0x8] sm:$0xff]
        %v372 = vld [vmem:[#allocation2 + $0x10] sm:$0xff]
        %v373 = vld [vmem:[#allocation2 + $0x18] sm:$0xff]
        %v374 = vld [vmem:[#allocation2 + $0x20] sm:$0xff]
        %v375 = vld [vmem:[#allocation2 + $0x28] sm:$0xff]
        %v376 = vld [vmem:[#allocation2 + $0x30] sm:$0xff]
        %v377 = vld [vmem:[#allocation2 + $0x38] sm:$0xff]
        %v378 = vld [vmem:[#allocation2 + $0x40] sm:$0xff]
        %v379 = vld [vmem:[#allocation2 + $0x48] sm:$0xff]
        %v380 = vld [vmem:[#allocation2 + $0x50] sm:$0xff]
        %v381 = vld [vmem:[#allocation2 + $0x58] sm:$0xff]
        %v382 = vld [vmem:[#allocation2 + $0x60] sm:$0xff]
        %v383 = vld [vmem:[#allocation2 + $0x68] sm:$0xff]
        %v384 = vld [vmem:[#allocation2 + $0x70] sm:$0xff]
        %v385 = vld [vmem:[#allocation2 + $0x78] sm:$0xff]
        %v386 = vld [vmem:[#allocation2 + $0x80] sm:$0xff]
        %v387 = vld [vmem:[#allocation2 + $0x88] sm:$0xff]
        %v388 = vld [vmem:[#allocation2 + $0x90] sm:$0xff]
        %v389 = vld [vmem:[#allocation2 + $0x98] sm:$0xff]
        %v390 = vld [vmem:[#allocation2 + $0xa0] sm:$0xff]
        %v391 = vld [vmem:[#allocation2 + $0xa8] sm:$0xff]
        %v392 = vld [vmem:[#allocation2 + $0xb0] sm:$0xff]
        %v393 = vld [vmem:[#allocation2 + $0xb8] sm:$0xff]
        %v394 = vld [vmem:[#allocation2 + $0xc0] sm:$0xff]
        %v395 = vld [vmem:[#allocation2 + $0xc8] sm:$0xff]
        %v396 = vld [vmem:[#allocation2 + $0xd0] sm:$0xff]
        %v397 = vld [vmem:[#allocation2 + $0xd8] sm:$0xff]
        %v398 = vld [vmem:[#allocation2 + $0xe0] sm:$0xff]
        %v399 = vld [vmem:[#allocation2 + $0xe8] sm:$0xff]
        %v400 = vld [vmem:[#allocation2 + $0xf0] sm:$0xff]
        %v401 = vld [vmem:[#allocation2 + $0xf8] sm:$0xff]
        %v402 = vld [vmem:[#allocation5] sm:$0x1]
        %v404 = vperm.slane %v402, 0
        %406 = vmatpush.msra.mxu0 %v385
        %407 = vmatpush.msra.mxu0 %v384
        %408 = vmatpush.msra.mxu0 %v383
        %409 = vmatpush.msra.mxu0 %v382
        %410 = vmatpush.msra.mxu0 %v381
        %411 = vmatpush.msra.mxu0 %v380
        %412 = vmatpush.msra.mxu0 %v379
        %413 = vmatpush.msra.mxu0 %v378
        %414 = vmatpush.msra.mxu0 %v377
        %415 = vmatpush.msra.mxu0 %v376
        %416 = vmatpush.msra.mxu0 %v375
        %417 = vmatpush.msra.mxu0 %v374
        %418 = vmatpush.msra.mxu0 %v373
        %419 = vmatpush.msra.mxu0 %v372
        %420 = vmatpush.msra.mxu0 %v371
        %421 = vmatpush.msra.mxu0 %v370
        %422 = vmatmul.f32.gmra.mxu0 %v346
        %v423 = vpop.f32.mrf.mxu0
        %v424 = vadd.f32 %v404, %v423
        %425 = vdwg.mxu0
        %426 = vmatpush.msra.mxu0 %v401
        %427 = vmatpush.msra.mxu0 %v400
        %428 = vmatpush.msra.mxu0 %v399
        %429 = vmatpush.msra.mxu0 %v398
        %430 = vmatpush.msra.mxu0 %v397
        %431 = vmatpush.msra.mxu0 %v396
        %432 = vmatpush.msra.mxu0 %v395
        %433 = vmatpush.msra.mxu0 %v394
        %434 = vmatpush.msra.mxu0 %v393
        %435 = vmatpush.msra.mxu0 %v392
        %436 = vmatpush.msra.mxu0 %v391
        %437 = vmatpush.msra.mxu0 %v390
        %438 = vmatpush.msra.mxu0 %v389
        %439 = vmatpush.msra.mxu0 %v388
        %440 = vmatpush.msra.mxu0 %v387
        %441 = vmatpush.msra.mxu0 %v386
        %442 = vmatmul.f32.gmra.mxu0 %v366
        %v443 = vpop.f32.mrf.mxu0
        %v444 = vadd.f32 %v424, %v443
        %445 = vdwg.mxu0
        %vm446 = vcmask 64512
        %447 = vst.msk [vmem:[%s299] sm:$0xff] %vm446, %v444
        %s448 = sand.u32 %s143, 1
        %s449 = scalar_lea.sflag [#allocation4], %s448
        %s450 = sand.u32 %s143, 1
        %s451 = smul.addr %s450, 16
        %s452 = scalar_lea.vmem [#allocation7], %s451
        %s453 = sand.u32 %s171, 1
        %s454 = scalar_lea.sflag [#allocation9], %s453
        %s455 = sand.u32 %s171, 1
        %s456 = smul.addr %s455, 8
        %s457 = scalar_lea.vmem [#allocation8], %s456
        // Predicated region
        $region45: #{slot_classifier_forward.3} parent=35 // pred_check
          %p458 = pneg %p153
        $region46: #{slot_classifier_forward.3} parent=35 // pred_check_branch
          %460 = sbr.rel (%p458) target = $region48
        $region47: #{slot_classifier_forward.3} parent=35 // pred_region
          %462 = vsyncadd %s449, 0
          %s463 = smul.addr %s30, 2
          %s464 = smul.addr %s29, 16
          %s465 = sadd.s32 %s463, %s464
          %s466 = smul.addr %s465, 8
          %s467 = scalar_lea.hbm %s4, %s466
          %s469 = sshll.u32 %s452, 4
          %s470 = int_to_ptr.vmem [resolvable:$true] %s469
          %s471 = sshll.u32 %s467, 4
          %s472 = int_to_ptr.hbm [resolvable:$true] %s471
          %474 = dma.vmem_to_hbm [thread:$0]  %s470, 256, %s472, %s449
        $region48: #{slot_classifier_forward.3} parent=35 // pred_fallthru
          _
        // Predicated region
        $region49: #{slot_classifier_forward.3} parent=35 // pred_check
          %p475 = pneg %p181
        $region50: #{slot_classifier_forward.3} parent=35 // pred_check_branch
          %477 = sbr.rel (%p475) target = $region52
        $region51: #{slot_classifier_forward.3} parent=35 // pred_region
          %479 = vsyncadd %s454, 0
          %s480 = smul.addr %s29, 8
          %s481 = sadd.s32 %s30, %s480
          %s482 = smul.addr %s481, 8
          %s483 = scalar_lea.hbm %s5, %s482
          %s485 = sshll.u32 %s457, 4
          %s486 = int_to_ptr.vmem [resolvable:$true] %s485
          %s487 = sshll.u32 %s483, 4
          %s488 = int_to_ptr.hbm [resolvable:$true] %s487
          %490 = dma.vmem_to_hbm [thread:$0]  %s486, 128, %s488, %s454
        $region52: #{slot_classifier_forward.3} parent=35 // pred_fallthru
          _
      $region36: #{slot_classifier_forward.3} parent=5 // pred_fallthru
        _
      %p491 = scmp.le.s32.totalorder 2, %s20
      // Predicated region
      $region53: #{slot_classifier_forward.3} parent=5 // pred_check
        %p492 = pneg %p491
      $region54: #{slot_classifier_forward.3} parent=5 // pred_check_branch
        %494 = sbr.rel (%p492) target = $region56
      $region55: #{slot_classifier_forward.3} parent=5 // pred_region
        %s495 = ssub.s32 %s20, 2
        // Predicated region
        $region57: #{slot_classifier_forward.3} parent=55 // pred_check
          %p496 = pneg %p159
        $region58: #{slot_classifier_forward.3} parent=55 // pred_check_branch
          %498 = sbr.rel (%p496) target = $region60
        $region59: #{slot_classifier_forward.3} parent=55 // pred_region
          %s499 = sand.u32 %s144, 1
          %s500 = scalar_lea.sflag [#allocation4], %s499
          %s501 = sand.u32 %s144, 1
          %s502 = smul.addr %s501, 16
          %s503 = scalar_lea.vmem [#allocation7], %s502
          %505 = dma.done %s500, 256
        $region60: #{slot_classifier_forward.3} parent=55 // pred_fallthru
          _
        // Predicated region
        $region61: #{slot_classifier_forward.3} parent=55 // pred_check
          %p506 = pneg %p187
        $region62: #{slot_classifier_forward.3} parent=55 // pred_check_branch
          %508 = sbr.rel (%p506) target = $region64
        $region63: #{slot_classifier_forward.3} parent=55 // pred_region
          %s509 = sand.u32 %s172, 1
          %s510 = scalar_lea.sflag [#allocation9], %s509
          %s511 = sand.u32 %s172, 1
          %s512 = smul.addr %s511, 8
          %s513 = scalar_lea.vmem [#allocation8], %s512
          %515 = dma.done %s510, 128
        $region64: #{slot_classifier_forward.3} parent=55 // pred_fallthru
          _
      $region56: #{slot_classifier_forward.3} parent=5 // pred_fallthru
        _
    $region6: #{slot_classifier_forward.3} parent=1 // loop_footer
      %s24 = sadd.s32 1, %s20
    $region7: #{slot_classifier_forward.3} parent=1 // loop_footer_branch
      %19 = sbr.rel target = $region3
    $region8: #{slot_classifier_forward.3} parent=1 // loop_exit
      _
    %516 = vsyncpa [#allocation3], 1
    %s517 = scalar_lea.sflag [#allocation3], 1
    %518 = vsyncpa %s517, 1
    %519 = vsyncpa [#allocation6], 1
    %520 = vsyncpa [#allocation4], 1
    %s521 = scalar_lea.sflag [#allocation4], 1
    %522 = vsyncpa %s521, 1
    %523 = vsyncpa [#allocation9], 1
    %s524 = scalar_lea.sflag [#allocation9], 1
    %525 = vsyncpa %s524, 1

// kernel: slot_classifier_forward.2
$region0: #{slot_classifier_forward.2}
  #allocation0 [shape = 'u32[]', space=smem, size = 0x4, offset = 0x4, fixed_abs, tag = 'smem constant byte address 0x4 - core index']
  #allocation1 [shape = 'u32[72,128]{1,0:T(1,128)}', space=vmem, size = 0x9000, scoped, tag = 'internal scratch']
  %s0 = inlined_call_operand.hbm [shape: f32[2,8,32], index: 0, kind: input, shape index: {}]
  %s1 = inlined_call_operand.hbm [shape: f32[32,64], index: 1, kind: input, shape index: {}]
  %s2 = inlined_call_operand.hbm [shape: f32[1,64], index: 2, kind: input, shape index: {}]
  %s3 = inlined_call_operand.hbm [shape: f32[64,40], index: 3, kind: input, shape index: {}]
  %s4 = inlined_call_operand.hbm [shape: f32[1,40], index: 4, kind: input, shape index: {}]
  %s5 = inlined_call_operand.hbm [shape: f32[32,64], index: 5, kind: input, shape index: {}]
  %s6 = inlined_call_operand.hbm [shape: f32[1,64], index: 6, kind: input, shape index: {}]
  %s7 = inlined_call_operand.hbm [shape: f32[64,40], index: 7, kind: input, shape index: {}]
  %s8 = inlined_call_operand.hbm [shape: f32[1,40], index: 8, kind: input, shape index: {}]
  %s9 = inlined_call_operand.hbm [shape: f32[40,10240], index: 9, kind: input, shape index: {}]
  %s10 = inlined_call_operand.vmem [shape: f32[2,8,40], index: 10, kind: output, shape index: {0}]
  %s11 = inlined_call_operand.vmem [shape: f32[2,8,10240], index: 11, kind: output, shape index: {1}]
  %12 = xla_tuple %s10, %s11
  %s13 = sld [smem:[#allocation0]]
  $region121: #{slot_classifier_forward.2} parent=0
    _
  %s15 = ssub.s32 1, %s13
  %s16 = scalar_select 0, %s15, %s13
  $region1: #{slot_classifier_forward.2} parent=0
    #allocation2 [shape = 'u8[8192]{0}', space=vmem, size = 0x2000, scoped, tag = 'input window, operand 0']
    #allocation3 [shape = 's32[2]{0}', space=sflag, size = 0x8, scoped, tag = 'scoped memory for slot_classifier_forward.2']
    #allocation4 [shape = 'u8[16384]{0}', space=vmem, size = 0x4000, scoped, tag = 'input window, operand 1, single buffered']
    #allocation5 [shape = 's32[1]{0}', space=sflag, size = 0x4, scoped, tag = 'scoped memory for slot_classifier_forward.2']
    #allocation6 [shape = 'u8[512]{0}', space=vmem, size = 0x400, scoped, tag = 'input window, operand 2, single buffered']
    #allocation7 [shape = 'u8[32768]{0}', space=vmem, size = 0x8000, scoped, tag = 'input window, operand 3, single buffered']
    #allocation8 [shape = 's32[1]{0}', space=sflag, size = 0x4, scoped, tag = 'scoped memory for slot_classifier_forward.2']
    #allocation9 [shape = 'u8[512]{0}', space=vmem, size = 0x400, scoped, tag = 'input window, operand 4, single buffered']
    #allocation10 [shape = 'u8[16384]{0}', space=vmem, size = 0x4000, scoped, tag = 'input window, operand 5, single buffered']
    #allocation11 [shape = 's32[1]{0}', space=sflag, size = 0x4, scoped, tag = 'scoped memory for slot_classifier_forward.2']
    #allocation12 [shape = 'u8[512]{0}', space=vmem, size = 0x400, scoped, tag = 'input window, operand 6, single buffered']
    #allocation13 [shape = 'u8[32768]{0}', space=vmem, size = 0x8000, scoped, tag = 'input window, operand 7, single buffered']
    #allocation14 [shape = 's32[1]{0}', space=sflag, size = 0x4, scoped, tag = 'scoped memory for slot_classifier_forward.2']
    #allocation15 [shape = 'u8[512]{0}', space=vmem, size = 0x400, scoped, tag = 'input window, operand 8, single buffered']
    #allocation16 [shape = 'u8[1638400]{0}', space=vmem, size = 0x190000, scoped, tag = 'input window, operand 9, single buffered']
    #allocation17 [shape = 's32[1]{0}', space=sflag, size = 0x4, scoped, tag = 'scoped memory for slot_classifier_forward.2']
    %17 = vsyncpa [#allocation3], 0
    %s18 = scalar_lea.sflag [#allocation3], 1
    %19 = vsyncpa %s18, 0
    %20 = vsyncpa [#allocation5], 0
    %21 = vsyncpa [#allocation8], 0
    %22 = vsyncpa [#allocation11], 0
    %23 = vsyncpa [#allocation14], 0
    %24 = vsyncpa [#allocation17], 0
    loop: start=0, step=1, limit=4
    $region2: #{slot_classifier_forward.2} parent=1 // loop_pre_header
      _
    $region3: #{slot_classifier_forward.2} parent=1 // loop_header
      %s26 = sphi 0, %s30
      %p27 = scmp.ge.s32.totalorder %s26, 4
      %s36 = sphi 0, %s38
      %s39 = sphi 0, %s36
      %s40 = sphi 0, %s39
      %s56 = sphi 0, %s40
      %s60 = sphi 0, %s60
      %s62 = sphi 0, %s60
      %s63 = sphi 0, %s62
      %s77 = sphi 0, %s63
      %s81 = sphi 0, %s81
      %s83 = sphi 0, %s81
      %s84 = sphi 0, %s83
      %s98 = sphi 0, %s84
      %s102 = sphi 0, %s102
      %s104 = sphi 0, %s102
      %s105 = sphi 0, %s104
      %s119 = sphi 0, %s105
      %s123 = sphi 0, %s123
      %s125 = sphi 0, %s123
      %s126 = sphi 0, %s125
      %s140 = sphi 0, %s126
      %s144 = sphi 0, %s144
      %s146 = sphi 0, %s144
      %s147 = sphi 0, %s146
      %s161 = sphi 0, %s147
      %s165 = sphi 0, %s165
      %s167 = sphi 0, %s165
      %s168 = sphi 0, %s167
      %s182 = sphi 0, %s168
      %s186 = sphi 0, %s186
      %s188 = sphi 0, %s186
      %s189 = sphi 0, %s188
      %s203 = sphi 0, %s189
      %s207 = sphi 0, %s207
      %s209 = sphi 0, %s207
      %s210 = sphi 0, %s209
      %s224 = sphi 0, %s210
      %s228 = sphi 0, %s228
      %s230 = sphi 0, %s228
      %s231 = sphi 0, %s230
      %s245 = sphi 0, %s231
      %s251 = sphi 0, %s253
      %s254 = sphi 0, %s251
      %s255 = sphi 0, %s254
      %s271 = sphi 0, %s255
      %s277 = sphi 0, %s279
      %s280 = sphi 0, %s277
      %s281 = sphi 0, %s280
      %s297 = sphi 0, %s281
    $region4: #{slot_classifier_forward.2} parent=1 // loop_header_branch
      %29 = sbr.rel (%p27) target = $region8
    $region5: #{slot_classifier_forward.2} parent=1 // loop_body
      %s31 = ssub.s32 %s26, 1
      %s32 = ssub.s32 %s26, 2
      %s33 = sadd.s32 %s26, 1
      %s34 = ssub.s32 %s26, %s33
      %p35 = scmp.eq.s32.totalorder %s34, 0
      %s37 = sadd.s32 %s36, 1
      %s38 = scalar_select %p35, %s36, %s37
      %p41 = pneg %p35
      %p42 = scmp.eq.s32.totalorder %s26, 1
      %p43 = por %p41, %p42
      %p44 = scmp.ne.s32.totalorder %s36, %s39
      %p45 = scmp.eq.s32.totalorder %s26, 0
      %p46 = por %p44, %p45
      %p47 = scmp.ne.s32.totalorder %s36, %s39
      %p48 = scmp.eq.s32.totalorder %s31, 1
      %p49 = por %p47, %p48
      %p50 = scmp.ne.s32.totalorder %s39, %s40
      %p51 = scmp.eq.s32.totalorder %s31, 0
      %p52 = por %p50, %p51
      %p53 = scmp.ne.s32.totalorder %s39, %s40
      %p54 = scmp.eq.s32.totalorder %s32, 1
      %p55 = por %p53, %p54
      %p57 = scmp.ne.s32.totalorder %s40, %s56
      %p58 = scmp.eq.s32.totalorder %s32, 0
      %p59 = por %p57, %p58
      %s61 = sadd.s32 %s60, 1
      %p64 = scmp.eq.s32.totalorder %s26, 1
      %p65 = scmp.ne.s32.totalorder %s60, %s62
      %p66 = scmp.eq.s32.totalorder %s26, 0
      %p67 = por %p65, %p66
      %p68 = scmp.ne.s32.totalorder %s60, %s62
      %p69 = scmp.eq.s32.totalorder %s31, 1
      %p70 = por %p68, %p69
      %p71 = scmp.ne.s32.totalorder %s62, %s63
      %p72 = scmp.eq.s32.totalorder %s31, 0
      %p73 = por %p71, %p72
      %p74 = scmp.ne.s32.totalorder %s62, %s63
      %p75 = scmp.eq.s32.totalorder %s32, 1
      %p76 = por %p74, %p75
      %p78 = scmp.ne.s32.totalorder %s63, %s77
      %p79 = scmp.eq.s32.totalorder %s32, 0
      %p80 = por %p78, %p79
      %s82 = sadd.s32 %s81, 1
      %p85 = scmp.eq.s32.totalorder %s26, 1
      %p86 = scmp.ne.s32.totalorder %s81, %s83
      %p87 = scmp.eq.s32.totalorder %s26, 0
      %p88 = por %p86, %p87
      %p89 = scmp.ne.s32.totalorder %s81, %s83
      %p90 = scmp.eq.s32.totalorder %s31, 1
      %p91 = por %p89, %p90
      %p92 = scmp.ne.s32.totalorder %s83, %s84
      %p93 = scmp.eq.s32.totalorder %s31, 0
      %p94 = por %p92, %p93
      %p95 = scmp.ne.s32.totalorder %s83, %s84
      %p96 = scmp.eq.s32.totalorder %s32, 1
      %p97 = por %p95, %p96
      %p99 = scmp.ne.s32.totalorder %s84, %s98
      %p100 = scmp.eq.s32.totalorder %s32, 0
      %p101 = por %p99, %p100
      %s103 = sadd.s32 %s102, 1
      %p106 = scmp.eq.s32.totalorder %s26, 1
      %p107 = scmp.ne.s32.totalorder %s102, %s104
      %p108 = scmp.eq.s32.totalorder %s26, 0
      %p109 = por %p107, %p108
      %p110 = scmp.ne.s32.totalorder %s102, %s104
      %p111 = scmp.eq.s32.totalorder %s31, 1
      %p112 = por %p110, %p111
      %p113 = scmp.ne.s32.totalorder %s104, %s105
      %p114 = scmp.eq.s32.totalorder %s31, 0
      %p115 = por %p113, %p114
      %p116 = scmp.ne.s32.totalorder %s104, %s105
      %p117 = scmp.eq.s32.totalorder %s32, 1
      %p118 = por %p116, %p117
      %p120 = scmp.ne.s32.totalorder %s105, %s119
      %p121 = scmp.eq.s32.totalorder %s32, 0
      %p122 = por %p120, %p121
      %s124 = sadd.s32 %s123, 1
      %p127 = scmp.eq.s32.totalorder %s26, 1
      %p128 = scmp.ne.s32.totalorder %s123, %s125
      %p129 = scmp.eq.s32.totalorder %s26, 0
      %p130 = por %p128, %p129
      %p131 = scmp.ne.s32.totalorder %s123, %s125
      %p132 = scmp.eq.s32.totalorder %s31, 1
      %p133 = por %p131, %p132
      %p134 = scmp.ne.s32.totalorder %s125, %s126
      %p135 = scmp.eq.s32.totalorder %s31, 0
      %p136 = por %p134, %p135
      %p137 = scmp.ne.s32.totalorder %s125, %s126
      %p138 = scmp.eq.s32.totalorder %s32, 1
      %p139 = por %p137, %p138
      %p141 = scmp.ne.s32.totalorder %s126, %s140
      %p142 = scmp.eq.s32.totalorder %s32, 0
      %p143 = por %p141, %p142
      %s145 = sadd.s32 %s144, 1
      %p148 = scmp.eq.s32.totalorder %s26, 1
      %p149 = scmp.ne.s32.totalorder %s144, %s146
      %p150 = scmp.eq.s32.totalorder %s26, 0
      %p151 = por %p149, %p150
      %p152 = scmp.ne.s32.totalorder %s144, %s146
      %p153 = scmp.eq.s32.totalorder %s31, 1
      %p154 = por %p152, %p153
      %p155 = scmp.ne.s32.totalorder %s146, %s147
      %p156 = scmp.eq.s32.totalorder %s31, 0
      %p157 = por %p155, %p156
      %p158 = scmp.ne.s32.totalorder %s146, %s147
      %p159 = scmp.eq.s32.totalorder %s32, 1
      %p160 = por %p158, %p159
      %p162 = scmp.ne.s32.totalorder %s147, %s161
      %p163 = scmp.eq.s32.totalorder %s32, 0
      %p164 = por %p162, %p163
      %s166 = sadd.s32 %s165, 1
      %p169 = scmp.eq.s32.totalorder %s26, 1
      %p170 = scmp.ne.s32.totalorder %s165, %s167
      %p171 = scmp.eq.s32.totalorder %s26, 0
      %p172 = por %p170, %p171
      %p173 = scmp.ne.s32.totalorder %s165, %s167
      %p174 = scmp.eq.s32.totalorder %s31, 1
      %p175 = por %p173, %p174
      %p176 = scmp.ne.s32.totalorder %s167, %s168
      %p177 = scmp.eq.s32.totalorder %s31, 0
      %p178 = por %p176, %p177
      %p179 = scmp.ne.s32.totalorder %s167, %s168
      %p180 = scmp.eq.s32.totalorder %s32, 1
      %p181 = por %p179, %p180
      %p183 = scmp.ne.s32.totalorder %s168, %s182
      %p184 = scmp.eq.s32.totalorder %s32, 0
      %p185 = por %p183, %p184
      %s187 = sadd.s32 %s186, 1
      %p190 = scmp.eq.s32.totalorder %s26, 1
      %p191 = scmp.ne.s32.totalorder %s186, %s188
      %p192 = scmp.eq.s32.totalorder %s26, 0
      %p193 = por %p191, %p192
      %p194 = scmp.ne.s32.totalorder %s186, %s188
      %p195 = scmp.eq.s32.totalorder %s31, 1
      %p196 = por %p194, %p195
      %p197 = scmp.ne.s32.totalorder %s188, %s189
      %p198 = scmp.eq.s32.totalorder %s31, 0
      %p199 = por %p197, %p198
      %p200 = scmp.ne.s32.totalorder %s188, %s189
      %p201 = scmp.eq.s32.totalorder %s32, 1
      %p202 = por %p200, %p201
      %p204 = scmp.ne.s32.totalorder %s189, %s203
      %p205 = scmp.eq.s32.totalorder %s32, 0
      %p206 = por %p204, %p205
      %s208 = sadd.s32 %s207, 1
      %p211 = scmp.eq.s32.totalorder %s26, 1
      %p212 = scmp.ne.s32.totalorder %s207, %s209
      %p213 = scmp.eq.s32.totalorder %s26, 0
      %p214 = por %p212, %p213
      %p215 = scmp.ne.s32.totalorder %s207, %s209
      %p216 = scmp.eq.s32.totalorder %s31, 1
      %p217 = por %p215, %p216
      %p218 = scmp.ne.s32.totalorder %s209, %s210
      %p219 = scmp.eq.s32.totalorder %s31, 0
      %p220 = por %p218, %p219
      %p221 = scmp.ne.s32.totalorder %s209, %s210
      %p222 = scmp.eq.s32.totalorder %s32, 1
      %p223 = por %p221, %p222
      %p225 = scmp.ne.s32.totalorder %s210, %s224
      %p226 = scmp.eq.s32.totalorder %s32, 0
      %p227 = por %p225, %p226
      %s229 = sadd.s32 %s228, 1
      %p232 = scmp.eq.s32.totalorder %s26, 1
      %p233 = scmp.ne.s32.totalorder %s228, %s230
      %p234 = scmp.eq.s32.totalorder %s26, 0
      %p235 = por %p233, %p234
      %p236 = scmp.ne.s32.totalorder %s228, %s230
      %p237 = scmp.eq.s32.totalorder %s31, 1
      %p238 = por %p236, %p237
      %p239 = scmp.ne.s32.totalorder %s230, %s231
      %p240 = scmp.eq.s32.totalorder %s31, 0
      %p241 = por %p239, %p240
      %p242 = scmp.ne.s32.totalorder %s230, %s231
      %p243 = scmp.eq.s32.totalorder %s32, 1
      %p244 = por %p242, %p243
      %p246 = scmp.ne.s32.totalorder %s231, %s245
      %p247 = scmp.eq.s32.totalorder %s32, 0
      %p248 = por %p246, %p247
      %s249 = ssub.s32 %s26, %s33
      %p250 = scmp.eq.s32.totalorder %s249, 0
      %s252 = sadd.s32 %s251, 1
      %s253 = scalar_select %p250, %s251, %s252
      %p256 = pneg %p250
      %p257 = scmp.eq.s32.totalorder %s26, 1
      %p258 = por %p256, %p257
      %p259 = scmp.ne.s32.totalorder %s251, %s254
      %p260 = scmp.eq.s32.totalorder %s26, 0
      %p261 = por %p259, %p260
      %p262 = scmp.ne.s32.totalorder %s251, %s254
      %p263 = scmp.eq.s32.totalorder %s31, 1
      %p264 = por %p262, %p263
      %p265 = scmp.ne.s32.totalorder %s254, %s255
      %p266 = scmp.eq.s32.totalorder %s31, 0
      %p267 = por %p265, %p266
      %p268 = scmp.ne.s32.totalorder %s254, %s255
      %p269 = scmp.eq.s32.totalorder %s32, 1
      %p270 = por %p268, %p269
      %p272 = scmp.ne.s32.totalorder %s255, %s271
      %p273 = scmp.eq.s32.totalorder %s32, 0
      %p274 = por %p272, %p273
      %s275 = ssub.s32 %s26, %s33
      %p276 = scmp.eq.s32.totalorder %s275, 0
      %s278 = sadd.s32 %s277, 1
      %s279 = scalar_select %p276, %s277, %s278
      %p282 = pneg %p276
      %p283 = scmp.eq.s32.totalorder %s26, 1
      %p284 = por %p282, %p283
      %p285 = scmp.ne.s32.totalorder %s277, %s280
      %p286 = scmp.eq.s32.totalorder %s26, 0
      %p287 = por %p285, %p286
      %p288 = scmp.ne.s32.totalorder %s277, %s280
      %p289 = scmp.eq.s32.totalorder %s31, 1
      %p290 = por %p288, %p289
      %p291 = scmp.ne.s32.totalorder %s280, %s281
      %p292 = scmp.eq.s32.totalorder %s31, 0
      %p293 = por %p291, %p292
      %p294 = scmp.ne.s32.totalorder %s280, %s281
      %p295 = scmp.eq.s32.totalorder %s32, 1
      %p296 = por %p294, %p295
      %p298 = scmp.ne.s32.totalorder %s281, %s297
      %p299 = scmp.eq.s32.totalorder %s32, 0
      %p300 = por %p298, %p299
      %p301 = scmp.le.s32.totalorder 1, %s26
      %p302 = scmp.lt.s32.totalorder %s26, 3
      %p303 = pnand %p301, %p302
      %p304 = pneg %p303
      // Predicated region
      $region9: #{slot_classifier_forward.2} parent=5 // pred_check
        _
      $region10: #{slot_classifier_forward.2} parent=5 // pred_check_branch
        %306 = sbr.rel (%p303) target = $region12
      $region11: #{slot_classifier_forward.2} parent=5 // pred_region
        %s307 = ssub.s32 %s26, 1
        // Predicated region
        $region13: #{slot_classifier_forward.2} parent=11 // pred_check
          %p308 = pneg %p73
        $region14: #{slot_classifier_forward.2} parent=11 // pred_check_branch
          %310 = sbr.rel (%p308) target = $region16
        $region15: #{slot_classifier_forward.2} parent=11 // pred_region
          %312 = vsyncadd [#allocation5], 0
          %s313 = sshll.u32 %s1, 4
          %s314 = int_to_ptr.hbm [resolvable:$true] %s313
          %s315 = sshll.u32 [#allocation4], 4
          %s316 = int_to_ptr.vmem [resolvable:$true] %s315
          %321 = dma.hbm_to_vmem [thread:$0]  %s314, 512, %s316, [#allocation5], 128, 128, 8
        $region16: #{slot_classifier_forward.2} parent=11 // pred_fallthru
          _
        // Predicated region
        $region17: #{slot_classifier_forward.2} parent=11 // pred_check
          %p322 = pneg %p94
        $region18: #{slot_classifier_forward.2} parent=11 // pred_check_branch
          %324 = sbr.rel (%p322) target = $region20
        $region19: #{slot_classifier_forward.2} parent=11 // pred_region
          %326 = vsyncadd [#allocation5], 0
          %s328 = sshll.u32 %s2, 4
          %s329 = int_to_ptr.hbm [resolvable:$true] %s328
          %s330 = sshll.u32 [#allocation6], 4
          %s331 = int_to_ptr.vmem [resolvable:$true] %s330
          %333 = dma.hbm_to_vmem [thread:$0]  %s329, 16, %s331, [#allocation5]
        $region20: #{slot_classifier_forward.2} parent=11 // pred_fallthru
          _
        // Predicated region
        $region21: #{slot_classifier_forward.2} parent=11 // pred_check
          %p334 = pneg %p115
        $region22: #{slot_classifier_forward.2} parent=11 // pred_check_branch
          %336 = sbr.rel (%p334) target = $region24
        $region23: #{slot_classifier_forward.2} parent=11 // pred_region
          %338 = vsyncadd [#allocation8], 0
          %s339 = sshll.u32 %s3, 4
          %s340 = int_to_ptr.hbm [resolvable:$true] %s339
          %s341 = sshll.u32 [#allocation7], 4
          %s342 = int_to_ptr.vmem [resolvable:$true] %s341
          %347 = dma.hbm_to_vmem [thread:$0]  %s340, 1024, %s342, [#allocation8], 128, 128, 8
        $region24: #{slot_classifier_forward.2} parent=11 // pred_fallthru
          _
        // Predicated region
        $region25: #{slot_classifier_forward.2} parent=11 // pred_check
          %p348 = pneg %p136
        $region26: #{slot_classifier_forward.2} parent=11 // pred_check_branch
          %350 = sbr.rel (%p348) target = $region28
        $region27: #{slot_classifier_forward.2} parent=11 // pred_region
          %352 = vsyncadd [#allocation8], 0
          %s354 = sshll.u32 %s4, 4
          %s355 = int_to_ptr.hbm [resolvable:$true] %s354
          %s356 = sshll.u32 [#allocation9], 4
          %s357 = int_to_ptr.vmem [resolvable:$true] %s356
          %359 = dma.hbm_to_vmem [thread:$0]  %s355, 16, %s357, [#allocation8]
        $region28: #{slot_classifier_forward.2} parent=11 // pred_fallthru
          _
        // Predicated region
        $region29: #{slot_classifier_forward.2} parent=11 // pred_check
          %p360 = pneg %p157
        $region30: #{slot_classifier_forward.2} parent=11 // pred_check_branch
          %362 = sbr.rel (%p360) target = $region32
        $region31: #{slot_classifier_forward.2} parent=11 // pred_region
          %364 = vsyncadd [#allocation11], 0
          %s365 = sshll.u32 %s5, 4
          %s366 = int_to_ptr.hbm [resolvable:$true] %s365
          %s367 = sshll.u32 [#allocation10], 4
          %s368 = int_to_ptr.vmem [resolvable:$true] %s367
          %373 = dma.hbm_to_vmem [thread:$0]  %s366, 512, %s368, [#allocation11], 128, 128, 8
        $region32: #{slot_classifier_forward.2} parent=11 // pred_fallthru
          _
        // Predicated region
        $region33: #{slot_classifier_forward.2} parent=11 // pred_check
          %p374 = pneg %p178
        $region34: #{slot_classifier_forward.2} parent=11 // pred_check_branch
          %376 = sbr.rel (%p374) target = $region36
        $region35: #{slot_classifier_forward.2} parent=11 // pred_region
          %378 = vsyncadd [#allocation11], 0
          %s380 = sshll.u32 %s6, 4
          %s381 = int_to_ptr.hbm [resolvable:$true] %s380
          %s382 = sshll.u32 [#allocation12], 4
          %s383 = int_to_ptr.vmem [resolvable:$true] %s382
          %385 = dma.hbm_to_vmem [thread:$0]  %s381, 16, %s383, [#allocation11]
        $region36: #{slot_classifier_forward.2} parent=11 // pred_fallthru
          _
        // Predicated region
        $region37: #{slot_classifier_forward.2} parent=11 // pred_check
          %p386 = pneg %p199
        $region38: #{slot_classifier_forward.2} parent=11 // pred_check_branch
          %388 = sbr.rel (%p386) target = $region40
        $region39: #{slot_classifier_forward.2} parent=11 // pred_region
          %390 = vsyncadd [#allocation14], 0
          %s391 = sshll.u32 %s7, 4
          %s392 = int_to_ptr.hbm [resolvable:$true] %s391
          %s393 = sshll.u32 [#allocation13], 4
          %s394 = int_to_ptr.vmem [resolvable:$true] %s393
          %399 = dma.hbm_to_vmem [thread:$0]  %s392, 1024, %s394, [#allocation14], 128, 128, 8
        $region40: #{slot_classifier_forward.2} parent=11 // pred_fallthru
          _
        // Predicated region
        $region41: #{slot_classifier_forward.2} parent=11 // pred_check
          %p400 = pneg %p220
        $region42: #{slot_classifier_forward.2} parent=11 // pred_check_branch
          %402 = sbr.rel (%p400) target = $region44
        $region43: #{slot_classifier_forward.2} parent=11 // pred_region
          %404 = vsyncadd [#allocation14], 0
          %s406 = sshll.u32 %s8, 4
          %s407 = int_to_ptr.hbm [resolvable:$true] %s406
          %s408 = sshll.u32 [#allocation15], 4
          %s409 = int_to_ptr.vmem [resolvable:$true] %s408
          %411 = dma.hbm_to_vmem [thread:$0]  %s407, 16, %s409, [#allocation14]
        $region44: #{slot_classifier_forward.2} parent=11 // pred_fallthru
          _
        // Predicated region
        $region45: #{slot_classifier_forward.2} parent=11 // pred_check
          %p412 = pneg %p241
        $region46: #{slot_classifier_forward.2} parent=11 // pred_check_branch
          %414 = sbr.rel (%p412) target = $region48
        $region47: #{slot_classifier_forward.2} parent=11 // pred_region
          %416 = vsyncadd [#allocation17], 0
          %s417 = sshll.u32 %s9, 4
          %s418 = int_to_ptr.hbm [resolvable:$true] %s417
          %s419 = sshll.u32 [#allocation16], 4
          %s420 = int_to_ptr.vmem [resolvable:$true] %s419
          %425 = dma.hbm_to_vmem [thread:$0]  %s418, 51200, %s420, [#allocation17], 10240, 10240, 640
        $region48: #{slot_classifier_forward.2} parent=11 // pred_fallthru
          _
      $region12: #{slot_classifier_forward.2} parent=5 // pred_fallthru
        _
      %p426 = scmp.lt.s32.totalorder %s26, 2
      // Predicated region
      $region49: #{slot_classifier_forward.2} parent=5 // pred_check
        %p427 = pneg %p426
      $region50: #{slot_classifier_forward.2} parent=5 // pred_check_branch
        %429 = sbr.rel (%p427) target = $region52
      $region51: #{slot_classifier_forward.2} parent=5 // pred_region
        // Predicated region
        $region53: #{slot_classifier_forward.2} parent=51 // pred_check
          %p430 = pneg %p46
        $region54: #{slot_classifier_forward.2} parent=51 // pred_check_branch
          %432 = sbr.rel (%p430) target = $region56
        $region55: #{slot_classifier_forward.2} parent=51 // pred_region
          %s433 = sand.u32 %s36, 1
          %s434 = scalar_lea.sflag [#allocation3], %s433
          %s435 = sand.u32 %s36, 1
          %s436 = smul.addr %s435, 8
          %s437 = scalar_lea.vmem [#allocation2], %s436
          %439 = vsyncadd %s434, 0
          %s440 = smul.addr %s26, 8
          %s441 = scalar_lea.hbm %s0, %s440
          %s443 = sshll.u32 %s441, 4
          %s444 = int_to_ptr.hbm [resolvable:$true] %s443
          %s445 = sshll.u32 %s437, 4
          %s446 = int_to_ptr.vmem [resolvable:$true] %s445
          %448 = dma.hbm_to_vmem [thread:$0]  %s444, 128, %s446, %s434
        $region56: #{slot_classifier_forward.2} parent=51 // pred_fallthru
          _
      $region52: #{slot_classifier_forward.2} parent=5 // pred_fallthru
        _
      %p449 = scmp.le.s32.totalorder 1, %s26
      %p450 = scmp.lt.s32.totalorder %s26, 3
      %p451 = pnand %p449, %p450
      %p452 = pneg %p451
      // Predicated region
      $region57: #{slot_classifier_forward.2} parent=5 // pred_check
        _
      $region58: #{slot_classifier_forward.2} parent=5 // pred_check_branch
        %454 = sbr.rel (%p451) target = $region60
      $region59: #{slot_classifier_forward.2} parent=5 // pred_region
        %s455 = ssub.s32 %s26, 1
        %s456 = sand.u32 %s39, 1
        %s457 = scalar_lea.sflag [#allocation3], %s456
        %s458 = sand.u32 %s39, 1
        %s459 = smul.addr %s458, 8
        %s460 = scalar_lea.vmem [#allocation2], %s459
        // Predicated region
        $region61: #{slot_classifier_forward.2} parent=59 // pred_check
          %p461 = pneg %p52
        $region62: #{slot_classifier_forward.2} parent=59 // pred_check_branch
          %463 = sbr.rel (%p461) target = $region64
        $region63: #{slot_classifier_forward.2} parent=59 // pred_region
          %465 = dma.done %s457, 128
        $region64: #{slot_classifier_forward.2} parent=59 // pred_fallthru
          _
        // Predicated region
        $region65: #{slot_classifier_forward.2} parent=59 // pred_check
          %p466 = pneg %p73
        $region66: #{slot_classifier_forward.2} parent=59 // pred_check_branch
          %468 = sbr.rel (%p466) target = $region68
        $region67: #{slot_classifier_forward.2} parent=59 // pred_region
          %470 = dma.done [#allocation5], 512
        $region68: #{slot_classifier_forward.2} parent=59 // pred_fallthru
          _
        // Predicated region
        $region69: #{slot_classifier_forward.2} parent=59 // pred_check
          %p471 = pneg %p94
        $region70: #{slot_classifier_forward.2} parent=59 // pred_check_branch
          %473 = sbr.rel (%p471) target = $region72
        $region71: #{slot_classifier_forward.2} parent=59 // pred_region
          %475 = dma.done [#allocation5], 16
        $region72: #{slot_classifier_forward.2} parent=59 // pred_fallthru
          _
        // Predicated region
        $region73: #{slot_classifier_forward.2} parent=59 // pred_check
          %p476 = pneg %p115
        $region74: #{slot_classifier_forward.2} parent=59 // pred_check_branch
          %478 = sbr.rel (%p476) target = $region76
        $region75: #{slot_classifier_forward.2} parent=59 // pred_region
          %480 = dma.done [#allocation8], 1024
        $region76: #{slot_classifier_forward.2} parent=59 // pred_fallthru
          _
        // Predicated region
        $region77: #{slot_classifier_forward.2} parent=59 // pred_check
          %p481 = pneg %p136
        $region78: #{slot_classifier_forward.2} parent=59 // pred_check_branch
          %483 = sbr.rel (%p481) target = $region80
        $region79: #{slot_classifier_forward.2} parent=59 // pred_region
          %485 = dma.done [#allocation8], 16
        $region80: #{slot_classifier_forward.2} parent=59 // pred_fallthru
          _
        // Predicated region
        $region81: #{slot_classifier_forward.2} parent=59 // pred_check
          %p486 = pneg %p157
        $region82: #{slot_classifier_forward.2} parent=59 // pred_check_branch
          %488 = sbr.rel (%p486) target = $region84
        $region83: #{slot_classifier_forward.2} parent=59 // pred_region
          %490 = dma.done [#allocation11], 512
        $region84: #{slot_classifier_forward.2} parent=59 // pred_fallthru
          _
        // Predicated region
        $region85: #{slot_classifier_forward.2} parent=59 // pred_check
          %p491 = pneg %p178
        $region86: #{slot_classifier_forward.2} parent=59 // pred_check_branch
          %493 = sbr.rel (%p491) target = $region88
        $region87: #{slot_classifier_forward.2} parent=59 // pred_region
          %495 = dma.done [#allocation11], 16
        $region88: #{slot_classifier_forward.2} parent=59 // pred_fallthru
          _
        // Predicated region
        $region89: #{slot_classifier_forward.2} parent=59 // pred_check
          %p496 = pneg %p199
        $region90: #{slot_classifier_forward.2} parent=59 // pred_check_branch
          %498 = sbr.rel (%p496) target = $region92
        $region91: #{slot_classifier_forward.2} parent=59 // pred_region
          %500 = dma.done [#allocation14], 1024
        $region92: #{slot_classifier_forward.2} parent=59 // pred_fallthru
          _
        // Predicated region
        $region93: #{slot_classifier_forward.2} parent=59 // pred_check
          %p501 = pneg %p220
        $region94: #{slot_classifier_forward.2} parent=59 // pred_check_branch
          %503 = sbr.rel (%p501) target = $region96
        $region95: #{slot_classifier_forward.2} parent=59 // pred_region
          %505 = dma.done [#allocation14], 16
        $region96: #{slot_classifier_forward.2} parent=59 // pred_fallthru
          _
        // Predicated region
        $region97: #{slot_classifier_forward.2} parent=59 // pred_check
          %p506 = pneg %p241
        $region98: #{slot_classifier_forward.2} parent=59 // pred_check_branch
          %508 = sbr.rel (%p506) target = $region100
        $region99: #{slot_classifier_forward.2} parent=59 // pred_region
          %510 = dma.done [#allocation17], 51200
        $region100: #{slot_classifier_forward.2} parent=59 // pred_fallthru
          _
        %s511 = sand.u32 %s39, 1
        %s512 = scalar_lea.sflag [#allocation3], %s511
        %s513 = sand.u32 %s39, 1
        %s514 = smul.addr %s513, 8
        %s515 = scalar_lea.vmem [#allocation2], %s514
        %p516 = pneg %p52
        %p517 = pneg %p49
        %p518 = pneg %p73
        %p519 = pneg %p70
        %p520 = pneg %p94
        %p521 = pneg %p91
        %p522 = pneg %p115
        %p523 = pneg %p112
        %p524 = pneg %p136
        %p525 = pneg %p133
        %p526 = pneg %p157
        %p527 = pneg %p154
        %p528 = pneg %p178
        %p529 = pneg %p175
        %p530 = pneg %p199
        %p531 = pneg %p196
        %p532 = pneg %p220
        %p533 = pneg %p217
        %p534 = pneg %p241
        %p535 = pneg %p238
        %p536 = pneg %p267
        %p537 = pneg %p264
        %p538 = scmp.lt.s32.totalorder %s31, 1
        %s539 = scalar_select %p538, %s31, 1
        %s540 = smul.addr %s539, 8
        %s541 = scalar_lea.vmem %s10, %s540
        %p542 = pneg %p293
        %p543 = pneg %p290
        %p544 = scmp.lt.s32.totalorder %s31, 1
        %s545 = scalar_select %p544, %s31, 1
        %s546 = smul.addr %s545, 80
        %s547 = smul.addr %s546, 8
        %s548 = scalar_lea.vmem %s11, %s547
        %p549 = scmp.lt.s32.totalorder %s31, 1
        %s550 = scalar_select %p549, %s31, 1
        %s551 = smul.addr %s550, 8
        %s552 = scalar_lea.vmem %s10, %s551
        %p553 = scmp.lt.s32.totalorder %s31, 1
        %s554 = scalar_select %p553, %s31, 1
        %s555 = smul.addr %s554, 80
        %s556 = smul.addr %s555, 8
        %s557 = scalar_lea.vmem %s11, %s556
        %v558 = vld [vmem:[%s460] sm:$0xff]
        %v559 = vld [vmem:[#allocation4] sm:$0xff]
        %v560 = vld [vmem:[#allocation4 + $0x8] sm:$0xff]
        %v561 = vld [vmem:[#allocation4 + $0x10] sm:$0xff]
        %v562 = vld [vmem:[#allocation4 + $0x18] sm:$0xff]
        %v563 = vld [vmem:[#allocation6] sm:$0x1]
        %v565 = vperm.slane %v563, 0
        %vm567 = vcmask 261120
        %v569 = vsel %vm567, %v558, 0
        %571 = vmatpush.msra.mxu0 0.0
        %572 = vmatpush.msra.mxu0 0.0
        %573 = vmatpush.msra.mxu0 0.0
        %574 = vmatpush.msra.mxu0 0.0
        %575 = vmatpush.msra.mxu0 0.0
        %576 = vmatpush.msra.mxu0 0.0
        %577 = vmatpush.msra.mxu0 0.0
        %578 = vmatpush.msra.mxu0 0.0
        %579 = vmatpush.msra.mxu0 0.0
        %580 = vmatpush.msra.mxu0 0.0
        %581 = vmatpush.msra.mxu0 0.0
        %582 = vmatpush.msra.mxu0 0.0
        %583 = vmatpush.msra.mxu0 %v562
        %584 = vmatpush.msra.mxu0 %v561
        %585 = vmatpush.msra.mxu0 %v560
        %586 = vmatpush.msra.mxu0 %v559
        %587 = vmatmul.f32.gmra.mxu0 %v569
        %v588 = vpop.f32.mrf.mxu0
        %v589 = vadd.f32 %v565, %v588
        %590 = vdwg.mxu0
        %v591 = vmax.f32 %v589, 0.0
        %v592 = vld [vmem:[#allocation7] sm:$0xff]
        %v593 = vld [vmem:[#allocation7 + $0x8] sm:$0xff]
        %v594 = vld [vmem:[#allocation7 + $0x10] sm:$0xff]
        %v595 = vld [vmem:[#allocation7 + $0x18] sm:$0xff]
        %v596 = vld [vmem:[#allocation7 + $0x20] sm:$0xff]
        %v597 = vld [vmem:[#allocation7 + $0x28] sm:$0xff]
        %v598 = vld [vmem:[#allocation7 + $0x30] sm:$0xff]
        %v599 = vld [vmem:[#allocation7 + $0x38] sm:$0xff]
        %v600 = vld [vmem:[#allocation9] sm:$0x1]
        %v602 = vperm.slane %v600, 0
        %vm604 = vcmask 523264
        %v606 = vsel %vm604, %v591, 0
        %608 = vmatpush.msra.mxu0 0.0
        %609 = vmatpush.msra.mxu0 0.0
        %610 = vmatpush.msra.mxu0 0.0
        %611 = vmatpush.msra.mxu0 0.0
        %612 = vmatpush.msra.mxu0 0.0
        %613 = vmatpush.msra.mxu0 0.0
        %614 = vmatpush.msra.mxu0 0.0
        %615 = vmatpush.msra.mxu0 0.0
        %616 = vmatpush.msra.mxu0 %v599
        %617 = vmatpush.msra.mxu0 %v598
        %618 = vmatpush.msra.mxu0 %v597
        %619 = vmatpush.msra.mxu0 %v596
        %620 = vmatpush.msra.mxu0 %v595
        %621 = vmatpush.msra.mxu0 %v594
        %622 = vmatpush.msra.mxu0 %v593
        %623 = vmatpush.msra.mxu0 %v592
        %624 = vmatmul.f32.gmra.mxu0 %v606
        %v625 = vpop.f32.mrf.mxu0
        %v626 = vadd.f32 %v602, %v625
        %627 = vdwg.mxu0
        %v628 = vld [vmem:[#allocation10] sm:$0xff]
        %v629 = vld [vmem:[#allocation10 + $0x8] sm:$0xff]
        %v630 = vld [vmem:[#allocation10 + $0x10] sm:$0xff]
        %v631 = vld [vmem:[#allocation10 + $0x18] sm:$0xff]
        %v632 = vld [vmem:[#allocation12] sm:$0x1]
        %v634 = vperm.slane %v632, 0
        %636 = vmatpush.msra.mxu0 0.0
        %637 = vmatpush.msra.mxu0 0.0
        %638 = vmatpush.msra.mxu0 0.0
        %639 = vmatpush.msra.mxu0 0.0
        %640 = vmatpush.msra.mxu0 0.0
        %641 = vmatpush.msra.mxu0 0.0
        %642 = vmatpush.msra.mxu0 0.0
        %643 = vmatpush.msra.mxu0 0.0
        %644 = vmatpush.msra.mxu0 0.0
        %645 = vmatpush.msra.mxu0 0.0
        %646 = vmatpush.msra.mxu0 0.0
        %647 = vmatpush.msra.mxu0 0.0
        %648 = vmatpush.msra.mxu0 %v631
        %649 = vmatpush.msra.mxu0 %v630
        %650 = vmatpush.msra.mxu0 %v629
        %651 = vmatpush.msra.mxu0 %v628
        %652 = vmatmul.f32.gmra.mxu0 %v569
        %v653 = vpop.f32.mrf.mxu0
        %v654 = vadd.f32 %v634, %v653
        %655 = vdwg.mxu0
        %v656 = vmax.f32 %v654, 0.0
        %v657 = vld [vmem:[#allocation13] sm:$0xff]
        %v658 = vld [vmem:[#allocation13 + $0x8] sm:$0xff]
        %v659 = vld [vmem:[#allocation13 + $0x10] sm:$0xff]
        %v660 = vld [vmem:[#allocation13 + $0x18] sm:$0xff]
        %v661 = vld [vmem:[#allocation13 + $0x20] sm:$0xff]
        %v662 = vld [vmem:[#allocation13 + $0x28] sm:$0xff]
        %v663 = vld [vmem:[#allocation13 + $0x30] sm:$0xff]
        %v664 = vld [vmem:[#allocation13 + $0x38] sm:$0xff]
        %v665 = vld [vmem:[#allocation15] sm:$0x1]
        %v667 = vperm.slane %v665, 0
        %v670 = vsel %vm604, %v656, 0
        %672 = vmatpush.msra.mxu0 0.0
        %673 = vmatpush.msra.mxu0 0.0
        %674 = vmatpush.msra.mxu0 0.0
        %675 = vmatpush.msra.mxu0 0.0
        %676 = vmatpush.msra.mxu0 0.0
        %677 = vmatpush.msra.mxu0 0.0
        %678 = vmatpush.msra.mxu0 0.0
        %679 = vmatpush.msra.mxu0 0.0
        %680 = vmatpush.msra.mxu0 %v664
        %681 = vmatpush.msra.mxu0 %v663
        %682 = vmatpush.msra.mxu0 %v662
        %683 = vmatpush.msra.mxu0 %v661
        %684 = vmatpush.msra.mxu0 %v660
        %685 = vmatpush.msra.mxu0 %v659
        %686 = vmatpush.msra.mxu0 %v658
        %687 = vmatpush.msra.mxu0 %v657
        %688 = vmatmul.f32.gmra.mxu0 %v670
        %v689 = vpop.f32.mrf.mxu0
        %v690 = vadd.f32 %v667, %v689
        %691 = vdwg.mxu0
        %vm692 = vcmask 326656
        %693 = vst.msk [vmem:[%s552] sm:$0xff] %vm692, %v690
        %v694 = vld [vmem:[#allocation16] sm:$0xff]
        %v695 = vld [vmem:[#allocation16 + $0x8] sm:$0xff]
        %v696 = vld [vmem:[#allocation16 + $0x10] sm:$0xff]
        %v697 = vld [vmem:[#allocation16 + $0x18] sm:$0xff]
        %v698 = vld [vmem:[#allocation16 + $0x20] sm:$0xff]
        %v699 = vld [vmem:[#allocation16 + $0x28] sm:$0xff]
        %v700 = vld [vmem:[#allocation16 + $0x30] sm:$0xff]
        %v701 = vld [vmem:[#allocation16 + $0x38] sm:$0xff]
        %v702 = vld [vmem:[#allocation16 + $0x40] sm:$0xff]
        %v703 = vld [vmem:[#allocation16 + $0x48] sm:$0xff]
        %v704 = vld [vmem:[#allocation16 + $0x50] sm:$0xff]
        %v705 = vld [vmem:[#allocation16 + $0x58] sm:$0xff]
        %v706 = vld [vmem:[#allocation16 + $0x60] sm:$0xff]
        %v707 = vld [vmem:[#allocation16 + $0x68] sm:$0xff]
        %v708 = vld [vmem:[#allocation16 + $0x70] sm:$0xff]
        %v709 = vld [vmem:[#allocation16 + $0x78] sm:$0xff]
        %v710 = vld [vmem:[#allocation16 + $0x80] sm:$0xff]
        %v711 = vld [vmem:[#allocation16 + $0x88] sm:$0xff]
        %v712 = vld [vmem:[#allocation16 + $0x90] sm:$0xff]
        %v713 = vld [vmem:[#allocation16 + $0x98] sm:$0xff]
        %v714 = vld [vmem:[#allocation16 + $0xa0] sm:$0xff]
        %v715 = vld [vmem:[#allocation16 + $0xa8] sm:$0xff]
        %v716 = vld [vmem:[#allocation16 + $0xb0] sm:$0xff]
        %v717 = vld [vmem:[#allocation16 + $0xb8] sm:$0xff]
        %v718 = vld [vmem:[#allocation16 + $0xc0] sm:$0xff]
        %v719 = vld [vmem:[#allocation16 + $0xc8] sm:$0xff]
        %v720 = vld [vmem:[#allocation16 + $0xd0] sm:$0xff]
        %v721 = vld [vmem:[#allocation16 + $0xd8] sm:$0xff]
        %v722 = vld [vmem:[#allocation16 + $0xe0] sm:$0xff]
        %v723 = vld [vmem:[#allocation16 + $0xe8] sm:$0xff]
        %v724 = vld [vmem:[#allocation16 + $0xf0] sm:$0xff]
        %v725 = vld [vmem:[#allocation16 + $0xf8] sm:$0xff]
        %v726 = vld [vmem:[#allocation16 + $0x100] sm:$0xff]
        %v727 = vld [vmem:[#allocation16 + $0x108] sm:$0xff]
        %v728 = vld [vmem:[#allocation16 + $0x110] sm:$0xff]
        %v729 = vld [vmem:[#allocation16 + $0x118] sm:$0xff]
        %v730 = vld [vmem:[#allocation16 + $0x120] sm:$0xff]
        %v731 = vld [vmem:[#allocation16 + $0x128] sm:$0xff]
        %v732 = vld [vmem:[#allocation16 + $0x130] sm:$0xff]
        %v733 = vld [vmem:[#allocation16 + $0x138] sm:$0xff]
        %v734 = vld [vmem:[#allocation16 + $0x140] sm:$0xff]
        %v735 = vld [vmem:[#allocation16 + $0x148] sm:$0xff]
        %v736 = vld [vmem:[#allocation16 + $0x150] sm:$0xff]
        %v737 = vld [vmem:[#allocation16 + $0x158] sm:$0xff]
        %v738 = vld [vmem:[#allocation16 + $0x160] sm:$0xff]
        %v739 = vld [vmem:[#allocation16 + $0x168] sm:$0xff]
        %v740 = vld [vmem:[#allocation16 + $0x170] sm:$0xff]
        %v741 = vld [vmem:[#allocation16 + $0x178] sm:$0xff]
        %v742 = vld [vmem:[#allocation16 + $0x180] sm:$0xff]
        %v743 = vld [vmem:[#allocation16 + $0x188] sm:$0xff]
        %v744 = vld [vmem:[#allocation16 + $0x190] sm:$0xff]
        %v745 = vld [vmem:[#allocation16 + $0x198] sm:$0xff]
        %v746 = vld [vmem:[#allocation16 + $0x1a0] sm:$0xff]
        %v747 = vld [vmem:[#allocation16 + $0x1a8] sm:$0xff]
        %v748 = vld [vmem:[#allocation16 + $0x1b0] sm:$0xff]
        %v749 = vld [vmem:[#allocation16 + $0x1b8] sm:$0xff]
        %v750 = vld [vmem:[#allocation16 + $0x1c0] sm:$0xff]
        %v751 = vld [vmem:[#allocation16 + $0x1c8] sm:$0xff]
        %v752 = vld [vmem:[#allocation16 + $0x1d0] sm:$0xff]
        %v753 = vld [vmem:[#allocation16 + $0x1d8] sm:$0xff]
        %v754 = vld [vmem:[#allocation16 + $0x1e0] sm:$0xff]
        %v755 = vld [vmem:[#allocation16 + $0x1e8] sm:$0xff]
        %v756 = vld [vmem:[#allocation16 + $0x1f0] sm:$0xff]
        %v757 = vld [vmem:[#allocation16 + $0x1f8] sm:$0xff]
        %v758 = vld [vmem:[#allocation16 + $0x200] sm:$0xff]
        %v759 = vld [vmem:[#allocation16 + $0x208] sm:$0xff]
        %v760 = vld [vmem:[#allocation16 + $0x210] sm:$0xff]
        %v761 = vld [vmem:[#allocation16 + $0x218] sm:$0xff]
        %v762 = vld [vmem:[#allocation16 + $0x220] sm:$0xff]
        %v763 = vld [vmem:[#allocation16 + $0x228] sm:$0xff]
        %v764 = vld [vmem:[#allocation16 + $0x230] sm:$0xff]
        %v765 = vld [vmem:[#allocation16 + $0x238] sm:$0xff]
        %v766 = vld [vmem:[#allocation16 + $0x240] sm:$0xff]
        %v767 = vld [vmem:[#allocation16 + $0x248] sm:$0xff]
        %v768 = vld [vmem:[#allocation16 + $0x250] sm:$0xff]
        %v769 = vld [vmem:[#allocation16 + $0x258] sm:$0xff]
        %v770 = vld [vmem:[#allocation16 + $0x260] sm:$0xff]
        %v771 = vld [vmem:[#allocation16 + $0x268] sm:$0xff]
        %v772 = vld [vmem:[#allocation16 + $0x270] sm:$0xff]
        %v773 = vld [vmem:[#allocation16 + $0x278] sm:$0xff]
        %v774 = vld [vmem:[#allocation16 + $0x280] sm:$0xff]
        %v775 = vld [vmem:[#allocation16 + $0x288] sm:$0xff]
        %v776 = vld [vmem:[#allocation16 + $0x290] sm:$0xff]
        %v777 = vld [vmem:[#allocation16 + $0x298] sm:$0xff]
        %v778 = vld [vmem:[#allocation16 + $0x2a0] sm:$0xff]
        %v779 = vld [vmem:[#allocation16 + $0x2a8] sm:$0xff]
        %v780 = vld [vmem:[#allocation16 + $0x2b0] sm:$0xff]
        %v781 = vld [vmem:[#allocation16 + $0x2b8] sm:$0xff]
        %v782 = vld [vmem:[#allocation16 + $0x2c0] sm:$0xff]
        %v783 = vld [vmem:[#allocation16 + $0x2c8] sm:$0xff]
        %v784 = vld [vmem:[#allocation16 + $0x2d0] sm:$0xff]
        %v785 = vld [vmem:[#allocation16 + $0x2d8] sm:$0xff]
        %v786 = vld [vmem:[#allocation16 + $0x2e0] sm:$0xff]
        %v787 = vld [vmem:[#allocation16 + $0x2e8] sm:$0xff]
        %v788 = vld [vmem:[#allocation16 + $0x2f0] sm:$0xff]
        %v789 = vld [vmem:[#allocation16 + $0x2f8] sm:$0xff]
        %v790 = vld [vmem:[#allocation16 + $0x300] sm:$0xff]
        %v791 = vld [vmem:[#allocation16 + $0x308] sm:$0xff]
        %v792 = vld [vmem:[#allocation16 + $0x310] sm:$0xff]
        %v793 = vld [vmem:[#allocation16 + $0x318] sm:$0xff]
        %v794 = vld [vmem:[#allocation16 + $0x320] sm:$0xff]
        %v795 = vld [vmem:[#allocation16 + $0x328] sm:$0xff]
        %v796 = vld [vmem:[#allocation16 + $0x330] sm:$0xff]
        %v797 = vld [vmem:[#allocation16 + $0x338] sm:$0xff]
        %v798 = vld [vmem:[#allocation16 + $0x340] sm:$0xff]
        %v799 = vld [vmem:[#allocation16 + $0x348] sm:$0xff]
        %v800 = vld [vmem:[#allocation16 + $0x350] sm:$0xff]
        %v801 = vld [vmem:[#allocation16 + $0x358] sm:$0xff]
        %v802 = vld [vmem:[#allocation16 + $0x360] sm:$0xff]
        %v803 = vld [vmem:[#allocation16 + $0x368] sm:$0xff]
        %v804 = vld [vmem:[#allocation16 + $0x370] sm:$0xff]
        %v805 = vld [vmem:[#allocation16 + $0x378] sm:$0xff]
        %v806 = vld [vmem:[#allocation16 + $0x380] sm:$0xff]
        %v807 = vld [vmem:[#allocation16 + $0x388] sm:$0xff]
        %v808 = vld [vmem:[#allocation16 + $0x390] sm:$0xff]
        %v809 = vld [vmem:[#allocation16 + $0x398] sm:$0xff]
        %v810 = vld [vmem:[#allocation16 + $0x3a0] sm:$0xff]
        %v811 = vld [vmem:[#allocation16 + $0x3a8] sm:$0xff]
        %v812 = vld [vmem:[#allocation16 + $0x3b0] sm:$0xff]
        %v813 = vld [vmem:[#allocation16 + $0x3b8] sm:$0xff]
        %v814 = vld [vmem:[#allocation16 + $0x3c0] sm:$0xff]
        %v815 = vld [vmem:[#allocation16 + $0x3c8] sm:$0xff]
        %v816 = vld [vmem:[#allocation16 + $0x3d0] sm:$0xff]
        %v817 = vld [vmem:[#allocation16 + $0x3d8] sm:$0xff]
        %v818 = vld [vmem:[#allocation16 + $0x3e0] sm:$0xff]
        %v819 = vld [vmem:[#allocation16 + $0x3e8] sm:$0xff]
        %v820 = vld [vmem:[#allocation16 + $0x3f0] sm:$0xff]
        %v821 = vld [vmem:[#allocation16 + $0x3f8] sm:$0xff]
        %v822 = vld [vmem:[#allocation16 + $0x400] sm:$0xff]
        %v823 = vld [vmem:[#allocation16 + $0x408] sm:$0xff]
        %v824 = vld [vmem:[#allocation16 + $0x410] sm:$0xff]
        %v825 = vld [vmem:[#allocation16 + $0x418] sm:$0xff]
        %v826 = vld [vmem:[#allocation16 + $0x420] sm:$0xff]
        %v827 = vld [vmem:[#allocation16 + $0x428] sm:$0xff]
        %v828 = vld [vmem:[#allocation16 + $0x430] sm:$0xff]
        %v829 = vld [vmem:[#allocation16 + $0x438] sm:$0xff]
        %v830 = vld [vmem:[#allocation16 + $0x440] sm:$0xff]
        %v831 = vld [vmem:[#allocation16 + $0x448] sm:$0xff]
        %v832 = vld [vmem:[#allocation16 + $0x450] sm:$0xff]
        %v833 = vld [vmem:[#allocation16 + $0x458] sm:$0xff]
        %v834 = vld [vmem:[#allocation16 + $0x460] sm:$0xff]
        %v835 = vld [vmem:[#allocation16 + $0x468] sm:$0xff]
        %v836 = vld [vmem:[#allocation16 + $0x470] sm:$0xff]
        %v837 = vld [vmem:[#allocation16 + $0x478] sm:$0xff]
        %v838 = vld [vmem:[#allocation16 + $0x480] sm:$0xff]
        %v839 = vld [vmem:[#allocation16 + $0x488] sm:$0xff]
        %v840 = vld [vmem:[#allocation16 + $0x490] sm:$0xff]
        %v841 = vld [vmem:[#allocation16 + $0x498] sm:$0xff]
        %v842 = vld [vmem:[#allocation16 + $0x4a0] sm:$0xff]
        %v843 = vld [vmem:[#allocation16 + $0x4a8] sm:$0xff]
        %v844 = vld [vmem:[#allocation16 + $0x4b0] sm:$0xff]
        %v845 = vld [vmem:[#allocation16 + $0x4b8] sm:$0xff]
        %v846 = vld [vmem:[#allocation16 + $0x4c0] sm:$0xff]
        %v847 = vld [vmem:[#allocation16 + $0x4c8] sm:$0xff]
        %v848 = vld [vmem:[#allocation16 + $0x4d0] sm:$0xff]
        %v849 = vld [vmem:[#allocation16 + $0x4d8] sm:$0xff]
        %v850 = vld [vmem:[#allocation16 + $0x4e0] sm:$0xff]
        %v851 = vld [vmem:[#allocation16 + $0x4e8] sm:$0xff]
        %v852 = vld [vmem:[#allocation16 + $0x4f0] sm:$0xff]
        %v853 = vld [vmem:[#allocation16 + $0x4f8] sm:$0xff]
        %v854 = vld [vmem:[#allocation16 + $0x500] sm:$0xff]
        %v855 = vld [vmem:[#allocation16 + $0x508] sm:$0xff]
        %v856 = vld [vmem:[#allocation16 + $0x510] sm:$0xff]
        %v857 = vld [vmem:[#allocation16 + $0x518] sm:$0xff]
        %v858 = vld [vmem:[#allocation16 + $0x520] sm:$0xff]
        %v859 = vld [vmem:[#allocation16 + $0x528] sm:$0xff]
        %v860 = vld [vmem:[#allocation16 + $0x530] sm:$0xff]
        %v861 = vld [vmem:[#allocation16 + $0x538] sm:$0xff]
        %v862 = vld [vmem:[#allocation16 + $0x540] sm:$0xff]
        %v863 = vld [vmem:[#allocation16 + $0x548] sm:$0xff]
        %v864 = vld [vmem:[#allocation16 + $0x550] sm:$0xff]
        %v865 = vld [vmem:[#allocation16 + $0x558] sm:$0xff]
        %v866 = vld [vmem:[#allocation16 + $0x560] sm:$0xff]
        %v867 = vld [vmem:[#allocation16 + $0x568] sm:$0xff]
        %v868 = vld [vmem:[#allocation16 + $0x570] sm:$0xff]
        %v869 = vld [vmem:[#allocation16 + $0x578] sm:$0xff]
        %v870 = vld [vmem:[#allocation16 + $0x580] sm:$0xff]
        %v871 = vld [vmem:[#allocation16 + $0x588] sm:$0xff]
        %v872 = vld [vmem:[#allocation16 + $0x590] sm:$0xff]
        %v873 = vld [vmem:[#allocation16 + $0x598] sm:$0xff]
        %v874 = vld [vmem:[#allocation16 + $0x5a0] sm:$0xff]
        %v875 = vld [vmem:[#allocation16 + $0x5a8] sm:$0xff]
        %v876 = vld [vmem:[#allocation16 + $0x5b0] sm:$0xff]
        %v877 = vld [vmem:[#allocation16 + $0x5b8] sm:$0xff]
        %v878 = vld [vmem:[#allocation16 + $0x5c0] sm:$0xff]
        %v879 = vld [vmem:[#allocation16 + $0x5c8] sm:$0xff]
        %v880 = vld [vmem:[#allocation16 + $0x5d0] sm:$0xff]
        %v881 = vld [vmem:[#allocation16 + $0x5d8] sm:$0xff]
        %v882 = vld [vmem:[#allocation16 + $0x5e0] sm:$0xff]
        %v883 = vld [vmem:[#allocation16 + $0x5e8] sm:$0xff]
        %v884 = vld [vmem:[#allocation16 + $0x5f0] sm:$0xff]
        %v885 = vld [vmem:[#allocation16 + $0x5f8] sm:$0xff]
        %v886 = vld [vmem:[#allocation16 + $0x600] sm:$0xff]
        %v887 = vld [vmem:[#allocation16 + $0x608] sm:$0xff]
        %v888 = vld [vmem:[#allocation16 + $0x610] sm:$0xff]
        %v889 = vld [vmem:[#allocation16 + $0x618] sm:$0xff]
        %v890 = vld [vmem:[#allocation16 + $0x620] sm:$0xff]
        %v891 = vld [vmem:[#allocation16 + $0x628] sm:$0xff]
        %v892 = vld [vmem:[#allocation16 + $0x630] sm:$0xff]
        %v893 = vld [vmem:[#allocation16 + $0x638] sm:$0xff]
        %v894 = vld [vmem:[#allocation16 + $0x640] sm:$0xff]
        %v895 = vld [vmem:[#allocation16 + $0x648] sm:$0xff]
        %v896 = vld [vmem:[#allocation16 + $0x650] sm:$0xff]
        %v897 = vld [vmem:[#allocation16 + $0x658] sm:$0xff]
        %v898 = vld [vmem:[#allocation16 + $0x660] sm:$0xff]
        %v899 = vld [vmem:[#allocation16 + $0x668] sm:$0xff]
        %v900 = vld [vmem:[#allocation16 + $0x670] sm:$0xff]
        %v901 = vld [vmem:[#allocation16 + $0x678] sm:$0xff]
        %v902 = vld [vmem:[#allocation16 + $0x680] sm:$0xff]
        %v903 = vld [vmem:[#allocation16 + $0x688] sm:$0xff]
        %v904 = vld [vmem:[#allocation16 + $0x690] sm:$0xff]
        %v905 = vld [vmem:[#allocation16 + $0x698] sm:$0xff]
        %v906 = vld [vmem:[#allocation16 + $0x6a0] sm:$0xff]
        %v907 = vld [vmem:[#allocation16 + $0x6a8] sm:$0xff]
        %v908 = vld [vmem:[#allocation16 + $0x6b0] sm:$0xff]
        %v909 = vld [vmem:[#allocation16 + $0x6b8] sm:$0xff]
        %v910 = vld [vmem:[#allocation16 + $0x6c0] sm:$0xff]
        %v911 = vld [vmem:[#allocation16 + $0x6c8] sm:$0xff]
        %v912 = vld [vmem:[#allocation16 + $0x6d0] sm:$0xff]
        %v913 = vld [vmem:[#allocation16 + $0x6d8] sm:$0xff]
        %v914 = vld [vmem:[#allocation16 + $0x6e0] sm:$0xff]
        %v915 = vld [vmem:[#allocation16 + $0x6e8] sm:$0xff]
        %v916 = vld [vmem:[#allocation16 + $0x6f0] sm:$0xff]
        %v917 = vld [vmem:[#allocation16 + $0x6f8] sm:$0xff]
        %v918 = vld [vmem:[#allocation16 + $0x700] sm:$0xff]
        %v919 = vld [vmem:[#allocation16 + $0x708] sm:$0xff]
        %v920 = vld [vmem:[#allocation16 + $0x710] sm:$0xff]
        %v921 = vld [vmem:[#allocation16 + $0x718] sm:$0xff]
        %v922 = vld [vmem:[#allocation16 + $0x720] sm:$0xff]
        %v923 = vld [vmem:[#allocation16 + $0x728] sm:$0xff]
        %v924 = vld [vmem:[#allocation16 + $0x730] sm:$0xff]
        %v925 = vld [vmem:[#allocation16 + $0x738] sm:$0xff]
        %v926 = vld [vmem:[#allocation16 + $0x740] sm:$0xff]
        %v927 = vld [vmem:[#allocation16 + $0x748] sm:$0xff]
        %v928 = vld [vmem:[#allocation16 + $0x750] sm:$0xff]
        %v929 = vld [vmem:[#allocation16 + $0x758] sm:$0xff]
        %v930 = vld [vmem:[#allocation16 + $0x760] sm:$0xff]
        %v931 = vld [vmem:[#allocation16 + $0x768] sm:$0xff]
        %v932 = vld [vmem:[#allocation16 + $0x770] sm:$0xff]
        %v933 = vld [vmem:[#allocation16 + $0x778] sm:$0xff]
        %v934 = vld [vmem:[#allocation16 + $0x780] sm:$0xff]
        %v935 = vld [vmem:[#allocation16 + $0x788] sm:$0xff]
        %v936 = vld [vmem:[#allocation16 + $0x790] sm:$0xff]
        %v937 = vld [vmem:[#allocation16 + $0x798] sm:$0xff]
        %v938 = vld [vmem:[#allocation16 + $0x7a0] sm:$0xff]
        %v939 = vld [vmem:[#allocation16 + $0x7a8] sm:$0xff]
        %v940 = vld [vmem:[#allocation16 + $0x7b0] sm:$0xff]
        %v941 = vld [vmem:[#allocation16 + $0x7b8] sm:$0xff]
        %v942 = vld [vmem:[#allocation16 + $0x7c0] sm:$0xff]
        %v943 = vld [vmem:[#allocation16 + $0x7c8] sm:$0xff]
        %v944 = vld [vmem:[#allocation16 + $0x7d0] sm:$0xff]
        %v945 = vld [vmem:[#allocation16 + $0x7d8] sm:$0xff]
        %v946 = vld [vmem:[#allocation16 + $0x7e0] sm:$0xff]
        %v947 = vld [vmem:[#allocation16 + $0x7e8] sm:$0xff]
        %v948 = vld [vmem:[#allocation16 + $0x7f0] sm:$0xff]
        %v949 = vld [vmem:[#allocation16 + $0x7f8] sm:$0xff]
        %v950 = vld [vmem:[#allocation16 + $0x800] sm:$0xff]
        %v951 = vld [vmem:[#allocation16 + $0x808] sm:$0xff]
        %v952 = vld [vmem:[#allocation16 + $0x810] sm:$0xff]
        %v953 = vld [vmem:[#allocation16 + $0x818] sm:$0xff]
        %v954 = vld [vmem:[#allocation16 + $0x820] sm:$0xff]
        %v955 = vld [vmem:[#allocation16 + $0x828] sm:$0xff]
        %v956 = vld [vmem:[#allocation16 + $0x830] sm:$0xff]
        %v957 = vld [vmem:[#allocation16 + $0x838] sm:$0xff]
        %v958 = vld [vmem:[#allocation16 + $0x840] sm:$0xff]
        %v959 = vld [vmem:[#allocation16 + $0x848] sm:$0xff]
        %v960 = vld [vmem:[#allocation16 + $0x850] sm:$0xff]
        %v961 = vld [vmem:[#allocation16 + $0x858] sm:$0xff]
        %v962 = vld [vmem:[#allocation16 + $0x860] sm:$0xff]
        %v963 = vld [vmem:[#allocation16 + $0x868] sm:$0xff]
        %v964 = vld [vmem:[#allocation16 + $0x870] sm:$0xff]
        %v965 = vld [vmem:[#allocation16 + $0x878] sm:$0xff]
        %v966 = vld [vmem:[#allocation16 + $0x880] sm:$0xff]
        %v967 = vld [vmem:[#allocation16 + $0x888] sm:$0xff]
        %v968 = vld [vmem:[#allocation16 + $0x890] sm:$0xff]
        %v969 = vld [vmem:[#allocation16 + $0x898] sm:$0xff]
        %v970 = vld [vmem:[#allocation16 + $0x8a0] sm:$0xff]
        %v971 = vld [vmem:[#allocation16 + $0x8a8] sm:$0xff]
        %v972 = vld [vmem:[#allocation16 + $0x8b0] sm:$0xff]
        %v973 = vld [vmem:[#allocation16 + $0x8b8] sm:$0xff]
        %v974 = vld [vmem:[#allocation16 + $0x8c0] sm:$0xff]
        %v975 = vld [vmem:[#allocation16 + $0x8c8] sm:$0xff]
        %v976 = vld [vmem:[#allocation16 + $0x8d0] sm:$0xff]
        %v977 = vld [vmem:[#allocation16 + $0x8d8] sm:$0xff]
        %v978 = vld [vmem:[#allocation16 + $0x8e0] sm:$0xff]
        %v979 = vld [vmem:[#allocation16 + $0x8e8] sm:$0xff]
        %v980 = vld [vmem:[#allocation16 + $0x8f0] sm:$0xff]
        %v981 = vld [vmem:[#allocation16 + $0x8f8] sm:$0xff]
        %v982 = vld [vmem:[#allocation16 + $0x900] sm:$0xff]
        %v983 = vld [vmem:[#allocation16 + $0x908] sm:$0xff]
        %v984 = vld [vmem:[#allocation16 + $0x910] sm:$0xff]
        %v985 = vld [vmem:[#allocation16 + $0x918] sm:$0xff]
        %v986 = vld [vmem:[#allocation16 + $0x920] sm:$0xff]
        %v987 = vld [vmem:[#allocation16 + $0x928] sm:$0xff]
        %v988 = vld [vmem:[#allocation16 + $0x930] sm:$0xff]
        %v989 = vld [vmem:[#allocation16 + $0x938] sm:$0xff]
        %v990 = vld [vmem:[#allocation16 + $0x940] sm:$0xff]
        %v991 = vld [vmem:[#allocation16 + $0x948] sm:$0xff]
        %v992 = vld [vmem:[#allocation16 + $0x950] sm:$0xff]
        %v993 = vld [vmem:[#allocation16 + $0x958] sm:$0xff]
        %v994 = vld [vmem:[#allocation16 + $0x960] sm:$0xff]
        %v995 = vld [vmem:[#allocation16 + $0x968] sm:$0xff]
        %v996 = vld [vmem:[#allocation16 + $0x970] sm:$0xff]
        %v997 = vld [vmem:[#allocation16 + $0x978] sm:$0xff]
        %v998 = vld [vmem:[#allocation16 + $0x980] sm:$0xff]
        %v999 = vld [vmem:[#allocation16 + $0x988] sm:$0xff]
        %v1000 = vld [vmem:[#allocation16 + $0x990] sm:$0xff]
        %v1001 = vld [vmem:[#allocation16 + $0x998] sm:$0xff]
        %v1002 = vld [vmem:[#allocation16 + $0x9a0] sm:$0xff]
        %v1003 = vld [vmem:[#allocation16 + $0x9a8] sm:$0xff]
        %v1004 = vld [vmem:[#allocation16 + $0x9b0] sm:$0xff]
        %v1005 = vld [vmem:[#allocation16 + $0x9b8] sm:$0xff]
        %v1006 = vld [vmem:[#allocation16 + $0x9c0] sm:$0xff]
        %v1007 = vld [vmem:[#allocation16 + $0x9c8] sm:$0xff]
        %v1008 = vld [vmem:[#allocation16 + $0x9d0] sm:$0xff]
        %v1009 = vld [vmem:[#allocation16 + $0x9d8] sm:$0xff]
        %v1010 = vld [vmem:[#allocation16 + $0x9e0] sm:$0xff]
        %v1011 = vld [vmem:[#allocation16 + $0x9e8] sm:$0xff]
        %v1012 = vld [vmem:[#allocation16 + $0x9f0] sm:$0xff]
        %v1013 = vld [vmem:[#allocation16 + $0x9f8] sm:$0xff]
        %v1014 = vld [vmem:[#allocation16 + $0xa00] sm:$0xff]
        %v1015 = vld [vmem:[#allocation16 + $0xa08] sm:$0xff]
        %v1016 = vld [vmem:[#allocation16 + $0xa10] sm:$0xff]
        %v1017 = vld [vmem:[#allocation16 + $0xa18] sm:$0xff]
        %v1018 = vld [vmem:[#allocation16 + $0xa20] sm:$0xff]
        %v1019 = vld [vmem:[#allocation16 + $0xa28] sm:$0xff]
        %v1020 = vld [vmem:[#allocation16 + $0xa30] sm:$0xff]
        %v1021 = vld [vmem:[#allocation16 + $0xa38] sm:$0xff]
        %v1022 = vld [vmem:[#allocation16 + $0xa40] sm:$0xff]
        %v1023 = vld [vmem:[#allocation16 + $0xa48] sm:$0xff]
        %v1024 = vld [vmem:[#allocation16 + $0xa50] sm:$0xff]
        %v1025 = vld [vmem:[#allocation16 + $0xa58] sm:$0xff]
        %v1026 = vld [vmem:[#allocation16 + $0xa60] sm:$0xff]
        %v1027 = vld [vmem:[#allocation16 + $0xa68] sm:$0xff]
        %v1028 = vld [vmem:[#allocation16 + $0xa70] sm:$0xff]
        %v1029 = vld [vmem:[#allocation16 + $0xa78] sm:$0xff]
        %v1030 = vld [vmem:[#allocation16 + $0xa80] sm:$0xff]
        %v1031 = vld [vmem:[#allocation16 + $0xa88] sm:$0xff]
        %v1032 = vld [vmem:[#allocation16 + $0xa90] sm:$0xff]
        %v1033 = vld [vmem:[#allocation16 + $0xa98] sm:$0xff]
        %v1034 = vld [vmem:[#allocation16 + $0xaa0] sm:$0xff]
        %v1035 = vld [vmem:[#allocation16 + $0xaa8] sm:$0xff]
        %v1036 = vld [vmem:[#allocation16 + $0xab0] sm:$0xff]
        %v1037 = vld [vmem:[#allocation16 + $0xab8] sm:$0xff]
        %v1038 = vld [vmem:[#allocation16 + $0xac0] sm:$0xff]
        %v1039 = vld [vmem:[#allocation16 + $0xac8] sm:$0xff]
        %v1040 = vld [vmem:[#allocation16 + $0xad0] sm:$0xff]
        %v1041 = vld [vmem:[#allocation16 + $0xad8] sm:$0xff]
        %v1042 = vld [vmem:[#allocation16 + $0xae0] sm:$0xff]
        %v1043 = vld [vmem:[#allocation16 + $0xae8] sm:$0xff]
        %v1044 = vld [vmem:[#allocation16 + $0xaf0] sm:$0xff]
        %v1045 = vld [vmem:[#allocation16 + $0xaf8] sm:$0xff]
        %v1046 = vld [vmem:[#allocation16 + $0xb00] sm:$0xff]
        %v1047 = vld [vmem:[#allocation16 + $0xb08] sm:$0xff]
        %v1048 = vld [vmem:[#allocation16 + $0xb10] sm:$0xff]
        %v1049 = vld [vmem:[#allocation16 + $0xb18] sm:$0xff]
        %v1050 = vld [vmem:[#allocation16 + $0xb20] sm:$0xff]
        %v1051 = vld [vmem:[#allocation16 + $0xb28] sm:$0xff]
        %v1052 = vld [vmem:[#allocation16 + $0xb30] sm:$0xff]
        %v1053 = vld [vmem:[#allocation16 + $0xb38] sm:$0xff]
        %v1054 = vld [vmem:[#allocation16 + $0xb40] sm:$0xff]
        %v1055 = vld [vmem:[#allocation16 + $0xb48] sm:$0xff]
        %v1056 = vld [vmem:[#allocation16 + $0xb50] sm:$0xff]
        %v1057 = vld [vmem:[#allocation16 + $0xb58] sm:$0xff]
        %v1058 = vld [vmem:[#allocation16 + $0xb60] sm:$0xff]
        %v1059 = vld [vmem:[#allocation16 + $0xb68] sm:$0xff]
        %v1060 = vld [vmem:[#allocation16 + $0xb70] sm:$0xff]
        %v1061 = vld [vmem:[#allocation16 + $0xb78] sm:$0xff]
        %v1062 = vld [vmem:[#allocation16 + $0xb80] sm:$0xff]
        %v1063 = vld [vmem:[#allocation16 + $0xb88] sm:$0xff]
        %v1064 = vld [vmem:[#allocation16 + $0xb90] sm:$0xff]
        %v1065 = vld [vmem:[#allocation16 + $0xb98] sm:$0xff]
        %v1066 = vld [vmem:[#allocation16 + $0xba0] sm:$0xff]
        %v1067 = vld [vmem:[#allocation16 + $0xba8] sm:$0xff]
        %v1068 = vld [vmem:[#allocation16 + $0xbb0] sm:$0xff]
        %v1069 = vld [vmem:[#allocation16 + $0xbb8] sm:$0xff]
        %v1070 = vld [vmem:[#allocation16 + $0xbc0] sm:$0xff]
        %v1071 = vld [vmem:[#allocation16 + $0xbc8] sm:$0xff]
        %v1072 = vld [vmem:[#allocation16 + $0xbd0] sm:$0xff]
        %v1073 = vld [vmem:[#allocation16 + $0xbd8] sm:$0xff]
        %v1074 = vld [vmem:[#allocation16 + $0xbe0] sm:$0xff]
        %v1075 = vld [vmem:[#allocation16 + $0xbe8] sm:$0xff]
        %v1076 = vld [vmem:[#allocation16 + $0xbf0] sm:$0xff]
        %v1077 = vld [vmem:[#allocation16 + $0xbf8] sm:$0xff]
        %v1078 = vld [vmem:[#allocation16 + $0xc00] sm:$0xff]
        %v1079 = vld [vmem:[#allocation16 + $0xc08] sm:$0xff]
        %v1080 = vld [vmem:[#allocation16 + $0xc10] sm:$0xff]
        %v1081 = vld [vmem:[#allocation16 + $0xc18] sm:$0xff]
        %v1082 = vld [vmem:[#allocation16 + $0xc20] sm:$0xff]
        %v1083 = vld [vmem:[#allocation16 + $0xc28] sm:$0xff]
        %v1084 = vld [vmem:[#allocation16 + $0xc30] sm:$0xff]
        %v1085 = vld [vmem:[#allocation16 + $0xc38] sm:$0xff]
        %v1086 = vld [vmem:[#allocation16 + $0xc40] sm:$0xff]
        %v1087 = vld [vmem:[#allocation16 + $0xc48] sm:$0xff]
        %v1088 = vld [vmem:[#allocation16 + $0xc50] sm:$0xff]
        %v1089 = vld [vmem:[#allocation16 + $0xc58] sm:$0xff]
        %v1090 = vld [vmem:[#allocation16 + $0xc60] sm:$0xff]
        %v1091 = vld [vmem:[#allocation16 + $0xc68] sm:$0xff]
        %v1092 = vld [vmem:[#allocation16 + $0xc70] sm:$0xff]
        %v1093 = vld [vmem:[#allocation16 + $0xc78] sm:$0xff]
        %v1095 = vsel %vm692, %v626, 0
        %1097 = vmatpush.msra.mxu0 0.0
        %1098 = vmatpush.msra.mxu0 0.0
        %1099 = vmatpush.msra.mxu0 0.0
        %1100 = vmatpush.msra.mxu0 0.0
        %1101 = vmatpush.msra.mxu0 0.0
        %1102 = vmatpush.msra.mxu0 0.0
        %1103 = vmatpush.msra.mxu0 0.0
        %1104 = vmatpush.msra.mxu0 0.0
        %1105 = vmatpush.msra.mxu0 0.0
        %1106 = vmatpush.msra.mxu0 0.0
        %1107 = vmatpush.msra.mxu0 0.0
        %1108 = vmatpush.msra.mxu0 %v1014
        %1109 = vmatpush.msra.mxu0 %v934
        %1110 = vmatpush.msra.mxu0 %v854
        %1111 = vmatpush.msra.mxu0 %v774
        %1112 = vmatpush.msra.mxu0 %v694
        %1113 = vmatmul.f32.gmra.mxu0 %v1095
        %v1114 = vpop.f32.mrf.mxu0
        %v1115 = vadd.f32 0.0, %v1114
        %1116 = vdwg.mxu0
        %1117 = vmatpush.msra.mxu0 0.0
        %1118 = vmatpush.msra.mxu0 0.0
        %1119 = vmatpush.msra.mxu0 0.0
        %1120 = vmatpush.msra.mxu0 0.0
        %1121 = vmatpush.msra.mxu0 0.0
        %1122 = vmatpush.msra.mxu0 0.0
        %1123 = vmatpush.msra.mxu0 0.0
        %1124 = vmatpush.msra.mxu0 0.0
        %1125 = vmatpush.msra.mxu0 0.0
        %1126 = vmatpush.msra.mxu0 0.0
        %1127 = vmatpush.msra.mxu0 0.0
        %1128 = vmatpush.msra.mxu0 %v1015
        %1129 = vmatpush.msra.mxu0 %v935
        %1130 = vmatpush.msra.mxu0 %v855
        %1131 = vmatpush.msra.mxu0 %v775
        %1132 = vmatpush.msra.mxu0 %v695
        %1133 = vmatmul.f32.gmra.mxu0 %v1095
        %v1134 = vpop.f32.mrf.mxu0
        %v1135 = vadd.f32 0.0, %v1134
        %1136 = vdwg.mxu0
        %1137 = vmatpush.msra.mxu0 0.0
        %1138 = vmatpush.msra.mxu0 0.0
        %1139 = vmatpush.msra.mxu0 0.0
        %1140 = vmatpush.msra.mxu0 0.0
        %1141 = vmatpush.msra.mxu0 0.0
        %1142 = vmatpush.msra.mxu0 0.0
        %1143 = vmatpush.msra.mxu0 0.0
        %1144 = vmatpush.msra.mxu0 0.0
        %1145 = vmatpush.msra.mxu0 0.0
        %1146 = vmatpush.msra.mxu0 0.0
        %1147 = vmatpush.msra.mxu0 0.0
        %1148 = vmatpush.msra.mxu0 %v1016
        %1149 = vmatpush.msra.mxu0 %v936
        %1150 = vmatpush.msra.mxu0 %v856
        %1151 = vmatpush.msra.mxu0 %v776
        %1152 = vmatpush.msra.mxu0 %v696
        %1153 = vmatmul.f32.gmra.mxu0 %v1095
        %v1154 = vpop.f32.mrf.mxu0
        %v1155 = vadd.f32 0.0, %v1154
        %1156 = vdwg.mxu0
        %1157 = vmatpush.msra.mxu0 0.0
        %1158 = vmatpush.msra.mxu0 0.0
        %1159 = vmatpush.msra.mxu0 0.0
        %1160 = vmatpush.msra.mxu0 0.0
        %1161 = vmatpush.msra.mxu0 0.0
        %1162 = vmatpush.msra.mxu0 0.0
        %1163 = vmatpush.msra.mxu0 0.0
        %1164 = vmatpush.msra.mxu0 0.0
        %1165 = vmatpush.msra.mxu0 0.0
        %1166 = vmatpush.msra.mxu0 0.0
        %1167 = vmatpush.msra.mxu0 0.0
        %1168 = vmatpush.msra.mxu0 %v1017
        %1169 = vmatpush.msra.mxu0 %v937
        %1170 = vmatpush.msra.mxu0 %v857
        %1171 = vmatpush.msra.mxu0 %v777
        %1172 = vmatpush.msra.mxu0 %v697
        %1173 = vmatmul.f32.gmra.mxu0 %v1095
        %v1174 = vpop.f32.mrf.mxu0
        %v1175 = vadd.f32 0.0, %v1174
        %1176 = vdwg.mxu0
        %1177 = vmatpush.msra.mxu0 0.0
        %1178 = vmatpush.msra.mxu0 0.0
        %1179 = vmatpush.msra.mxu0 0.0
        %1180 = vmatpush.msra.mxu0 0.0
        %1181 = vmatpush.msra.mxu0 0.0
        %1182 = vmatpush.msra.mxu0 0.0
        %1183 = vmatpush.msra.mxu0 0.0
        %1184 = vmatpush.msra.mxu0 0.0
        %1185 = vmatpush.msra.mxu0 0.0
        %1186 = vmatpush.msra.mxu0 0.0
        %1187 = vmatpush.msra.mxu0 0.0
        %1188 = vmatpush.msra.mxu0 %v1018
        %1189 = vmatpush.msra.mxu0 %v938
        %1190 = vmatpush.msra.mxu0 %v858
        %1191 = vmatpush.msra.mxu0 %v778
        %1192 = vmatpush.msra.mxu0 %v698
        %1193 = vmatmul.f32.gmra.mxu0 %v1095
        %v1194 = vpop.f32.mrf.mxu0
        %v1195 = vadd.f32 0.0, %v1194
        %1196 = vdwg.mxu0
        %1197 = vmatpush.msra.mxu0 0.0
        %1198 = vmatpush.msra.mxu0 0.0
        %1199 = vmatpush.msra.mxu0 0.0
        %1200 = vmatpush.msra.mxu0 0.0
        %1201 = vmatpush.msra.mxu0 0.0
        %1202 = vmatpush.msra.mxu0 0.0
        %1203 = vmatpush.msra.mxu0 0.0
        %1204 = vmatpush.msra.mxu0 0.0
        %1205 = vmatpush.msra.mxu0 0.0
        %1206 = vmatpush.msra.mxu0 0.0
        %1207 = vmatpush.msra.mxu0 0.0
        %1208 = vmatpush.msra.mxu0 %v1019
        %1209 = vmatpush.msra.mxu0 %v939
        %1210 = vmatpush.msra.mxu0 %v859
        %1211 = vmatpush.msra.mxu0 %v779
        %1212 = vmatpush.msra.mxu0 %v699
        %1213 = vmatmul.f32.gmra.mxu0 %v1095
        %v1214 = vpop.f32.mrf.mxu0
        %v1215 = vadd.f32 0.0, %v1214
        %1216 = vdwg.mxu0
        %1217 = vmatpush.msra.mxu0 0.0
        %1218 = vmatpush.msra.mxu0 0.0
        %1219 = vmatpush.msra.mxu0 0.0
        %1220 = vmatpush.msra.mxu0 0.0
        %1221 = vmatpush.msra.mxu0 0.0
        %1222 = vmatpush.msra.mxu0 0.0
        %1223 = vmatpush.msra.mxu0 0.0
        %1224 = vmatpush.msra.mxu0 0.0
        %1225 = vmatpush.msra.mxu0 0.0
        %1226 = vmatpush.msra.mxu0 0.0
        %1227 = vmatpush.msra.mxu0 0.0
        %1228 = vmatpush.msra.mxu0 %v1020
        %1229 = vmatpush.msra.mxu0 %v940
        %1230 = vmatpush.msra.mxu0 %v860
        %1231 = vmatpush.msra.mxu0 %v780
        %1232 = vmatpush.msra.mxu0 %v700
        %1233 = vmatmul.f32.gmra.mxu0 %v1095
        %v1234 = vpop.f32.mrf.mxu0
        %v1235 = vadd.f32 0.0, %v1234
        %1236 = vdwg.mxu0
        %1237 = vmatpush.msra.mxu0 0.0
        %1238 = vmatpush.msra.mxu0 0.0
        %1239 = vmatpush.msra.mxu0 0.0
        %1240 = vmatpush.msra.mxu0 0.0
        %1241 = vmatpush.msra.mxu0 0.0
        %1242 = vmatpush.msra.mxu0 0.0
        %1243 = vmatpush.msra.mxu0 0.0
        %1244 = vmatpush.msra.mxu0 0.0
        %1245 = vmatpush.msra.mxu0 0.0
        %1246 = vmatpush.msra.mxu0 0.0
        %1247 = vmatpush.msra.mxu0 0.0
        %1248 = vmatpush.msra.mxu0 %v1021
        %1249 = vmatpush.msra.mxu0 %v941
        %1250 = vmatpush.msra.mxu0 %v861
        %1251 = vmatpush.msra.mxu0 %v781
        %1252 = vmatpush.msra.mxu0 %v701
        %1253 = vmatmul.f32.gmra.mxu0 %v1095
        %v1254 = vpop.f32.mrf.mxu0
        %v1255 = vadd.f32 0.0, %v1254
        %1256 = vdwg.mxu0
        %1257 = vmatpush.msra.mxu0 0.0
        %1258 = vmatpush.msra.mxu0 0.0
        %1259 = vmatpush.msra.mxu0 0.0
        %1260 = vmatpush.msra.mxu0 0.0
        %1261 = vmatpush.msra.mxu0 0.0
        %1262 = vmatpush.msra.mxu0 0.0
        %1263 = vmatpush.msra.mxu0 0.0
        %1264 = vmatpush.msra.mxu0 0.0
        %1265 = vmatpush.msra.mxu0 0.0
        %1266 = vmatpush.msra.mxu0 0.0
        %1267 = vmatpush.msra.mxu0 0.0
        %1268 = vmatpush.msra.mxu0 %v1022
        %1269 = vmatpush.msra.mxu0 %v942
        %1270 = vmatpush.msra.mxu0 %v862
        %1271 = vmatpush.msra.mxu0 %v782
        %1272 = vmatpush.msra.mxu0 %v702
        %1273 = vmatmul.f32.gmra.mxu0 %v1095
        %v1274 = vpop.f32.mrf.mxu0
        %v1275 = vadd.f32 0.0, %v1274
        %1276 = vdwg.mxu0
        %1277 = vmatpush.msra.mxu0 0.0
        %1278 = vmatpush.msra.mxu0 0.0
        %1279 = vmatpush.msra.mxu0 0.0
        %1280 = vmatpush.msra.mxu0 0.0
        %1281 = vmatpush.msra.mxu0 0.0
        %1282 = vmatpush.msra.mxu0 0.0
        %1283 = vmatpush.msra.mxu0 0.0
        %1284 = vmatpush.msra.mxu0 0.0
        %1285 = vmatpush.msra.mxu0 0.0
        %1286 = vmatpush.msra.mxu0 0.0
        %1287 = vmatpush.msra.mxu0 0.0
        %1288 = vmatpush.msra.mxu0 %v1023
        %1289 = vmatpush.msra.mxu0 %v943
        %1290 = vmatpush.msra.mxu0 %v863
        %1291 = vmatpush.msra.mxu0 %v783
        %1292 = vmatpush.msra.mxu0 %v703
        %1293 = vmatmul.f32.gmra.mxu0 %v1095
        %v1294 = vpop.f32.mrf.mxu0
        %v1295 = vadd.f32 0.0, %v1294
        %1296 = vdwg.mxu0
        %1297 = vmatpush.msra.mxu0 0.0
        %1298 = vmatpush.msra.mxu0 0.0
        %1299 = vmatpush.msra.mxu0 0.0
        %1300 = vmatpush.msra.mxu0 0.0
        %1301 = vmatpush.msra.mxu0 0.0
        %1302 = vmatpush.msra.mxu0 0.0
        %1303 = vmatpush.msra.mxu0 0.0
        %1304 = vmatpush.msra.mxu0 0.0
        %1305 = vmatpush.msra.mxu0 0.0
        %1306 = vmatpush.msra.mxu0 0.0
        %1307 = vmatpush.msra.mxu0 0.0
        %1308 = vmatpush.msra.mxu0 %v1024
        %1309 = vmatpush.msra.mxu0 %v944
        %1310 = vmatpush.msra.mxu0 %v864
        %1311 = vmatpush.msra.mxu0 %v784
        %1312 = vmatpush.msra.mxu0 %v704
        %1313 = vmatmul.f32.gmra.mxu0 %v1095
        %v1314 = vpop.f32.mrf.mxu0
        %v1315 = vadd.f32 0.0, %v1314
        %1316 = vdwg.mxu0
        %1317 = vmatpush.msra.mxu0 0.0
        %1318 = vmatpush.msra.mxu0 0.0
        %1319 = vmatpush.msra.mxu0 0.0
        %1320 = vmatpush.msra.mxu0 0.0
        %1321 = vmatpush.msra.mxu0 0.0
        %1322 = vmatpush.msra.mxu0 0.0
        %1323 = vmatpush.msra.mxu0 0.0
        %1324 = vmatpush.msra.mxu0 0.0
        %1325 = vmatpush.msra.mxu0 0.0
        %1326 = vmatpush.msra.mxu0 0.0
        %1327 = vmatpush.msra.mxu0 0.0
        %1328 = vmatpush.msra.mxu0 %v1025
        %1329 = vmatpush.msra.mxu0 %v945
        %1330 = vmatpush.msra.mxu0 %v865
        %1331 = vmatpush.msra.mxu0 %v785
        %1332 = vmatpush.msra.mxu0 %v705
        %1333 = vmatmul.f32.gmra.mxu0 %v1095
        %v1334 = vpop.f32.mrf.mxu0
        %v1335 = vadd.f32 0.0, %v1334
        %1336 = vdwg.mxu0
        %1337 = vmatpush.msra.mxu0 0.0
        %1338 = vmatpush.msra.mxu0 0.0
        %1339 = vmatpush.msra.mxu0 0.0
        %1340 = vmatpush.msra.mxu0 0.0
        %1341 = vmatpush.msra.mxu0 0.0
        %1342 = vmatpush.msra.mxu0 0.0
        %1343 = vmatpush.msra.mxu0 0.0
        %1344 = vmatpush.msra.mxu0 0.0
        %1345 = vmatpush.msra.mxu0 0.0
        %1346 = vmatpush.msra.mxu0 0.0
        %1347 = vmatpush.msra.mxu0 0.0
        %1348 = vmatpush.msra.mxu0 %v1026
        %1349 = vmatpush.msra.mxu0 %v946
        %1350 = vmatpush.msra.mxu0 %v866
        %1351 = vmatpush.msra.mxu0 %v786
        %1352 = vmatpush.msra.mxu0 %v706
        %1353 = vmatmul.f32.gmra.mxu0 %v1095
        %v1354 = vpop.f32.mrf.mxu0
        %v1355 = vadd.f32 0.0, %v1354
        %1356 = vdwg.mxu0
        %1357 = vmatpush.msra.mxu0 0.0
        %1358 = vmatpush.msra.mxu0 0.0
        %1359 = vmatpush.msra.mxu0 0.0
        %1360 = vmatpush.msra.mxu0 0.0
        %1361 = vmatpush.msra.mxu0 0.0
        %1362 = vmatpush.msra.mxu0 0.0
        %1363 = vmatpush.msra.mxu0 0.0
        %1364 = vmatpush.msra.mxu0 0.0
        %1365 = vmatpush.msra.mxu0 0.0
        %1366 = vmatpush.msra.mxu0 0.0
        %1367 = vmatpush.msra.mxu0 0.0
        %1368 = vmatpush.msra.mxu0 %v1027
        %1369 = vmatpush.msra.mxu0 %v947
        %1370 = vmatpush.msra.mxu0 %v867
        %1371 = vmatpush.msra.mxu0 %v787
        %1372 = vmatpush.msra.mxu0 %v707
        %1373 = vmatmul.f32.gmra.mxu0 %v1095
        %v1374 = vpop.f32.mrf.mxu0
        %v1375 = vadd.f32 0.0, %v1374
        %1376 = vdwg.mxu0
        %1377 = vmatpush.msra.mxu0 0.0
        %1378 = vmatpush.msra.mxu0 0.0
        %1379 = vmatpush.msra.mxu0 0.0
        %1380 = vmatpush.msra.mxu0 0.0
        %1381 = vmatpush.msra.mxu0 0.0
        %1382 = vmatpush.msra.mxu0 0.0
        %1383 = vmatpush.msra.mxu0 0.0
        %1384 = vmatpush.msra.mxu0 0.0
        %1385 = vmatpush.msra.mxu0 0.0
        %1386 = vmatpush.msra.mxu0 0.0
        %1387 = vmatpush.msra.mxu0 0.0
        %1388 = vmatpush.msra.mxu0 %v1028
        %1389 = vmatpush.msra.mxu0 %v948
        %1390 = vmatpush.msra.mxu0 %v868
        %1391 = vmatpush.msra.mxu0 %v788
        %1392 = vmatpush.msra.mxu0 %v708
        %1393 = vmatmul.f32.gmra.mxu0 %v1095
        %v1394 = vpop.f32.mrf.mxu0
        %v1395 = vadd.f32 0.0, %v1394
        %1396 = vdwg.mxu0
        %1397 = vmatpush.msra.mxu0 0.0
        %1398 = vmatpush.msra.mxu0 0.0
        %1399 = vmatpush.msra.mxu0 0.0
        %1400 = vmatpush.msra.mxu0 0.0
        %1401 = vmatpush.msra.mxu0 0.0
        %1402 = vmatpush.msra.mxu0 0.0
        %1403 = vmatpush.msra.mxu0 0.0
        %1404 = vmatpush.msra.mxu0 0.0
        %1405 = vmatpush.msra.mxu0 0.0
        %1406 = vmatpush.msra.mxu0 0.0
        %1407 = vmatpush.msra.mxu0 0.0
        %1408 = vmatpush.msra.mxu0 %v1029
        %1409 = vmatpush.msra.mxu0 %v949
        %1410 = vmatpush.msra.mxu0 %v869
        %1411 = vmatpush.msra.mxu0 %v789
        %1412 = vmatpush.msra.mxu0 %v709
        %1413 = vmatmul.f32.gmra.mxu0 %v1095
        %v1414 = vpop.f32.mrf.mxu0
        %v1415 = vadd.f32 0.0, %v1414
        %1416 = vdwg.mxu0
        %1417 = vmatpush.msra.mxu0 0.0
        %1418 = vmatpush.msra.mxu0 0.0
        %1419 = vmatpush.msra.mxu0 0.0
        %1420 = vmatpush.msra.mxu0 0.0
        %1421 = vmatpush.msra.mxu0 0.0
        %1422 = vmatpush.msra.mxu0 0.0
        %1423 = vmatpush.msra.mxu0 0.0
        %1424 = vmatpush.msra.mxu0 0.0
        %1425 = vmatpush.msra.mxu0 0.0
        %1426 = vmatpush.msra.mxu0 0.0
        %1427 = vmatpush.msra.mxu0 0.0
        %1428 = vmatpush.msra.mxu0 %v1030
        %1429 = vmatpush.msra.mxu0 %v950
        %1430 = vmatpush.msra.mxu0 %v870
        %1431 = vmatpush.msra.mxu0 %v790
        %1432 = vmatpush.msra.mxu0 %v710
        %1433 = vmatmul.f32.gmra.mxu0 %v1095
        %v1434 = vpop.f32.mrf.mxu0
        %v1435 = vadd.f32 0.0, %v1434
        %1436 = vdwg.mxu0
        %1437 = vmatpush.msra.mxu0 0.0
        %1438 = vmatpush.msra.mxu0 0.0
        %1439 = vmatpush.msra.mxu0 0.0
        %1440 = vmatpush.msra.mxu0 0.0
        %1441 = vmatpush.msra.mxu0 0.0
        %1442 = vmatpush.msra.mxu0 0.0
        %1443 = vmatpush.msra.mxu0 0.0
        %1444 = vmatpush.msra.mxu0 0.0
        %1445 = vmatpush.msra.mxu0 0.0
        %1446 = vmatpush.msra.mxu0 0.0
        %1447 = vmatpush.msra.mxu0 0.0
        %1448 = vmatpush.msra.mxu0 %v1031
        %1449 = vmatpush.msra.mxu0 %v951
        %1450 = vmatpush.msra.mxu0 %v871
        %1451 = vmatpush.msra.mxu0 %v791
        %1452 = vmatpush.msra.mxu0 %v711
        %1453 = vmatmul.f32.gmra.mxu0 %v1095
        %v1454 = vpop.f32.mrf.mxu0
        %v1455 = vadd.f32 0.0, %v1454
        %1456 = vdwg.mxu0
        %1457 = vmatpush.msra.mxu0 0.0
        %1458 = vmatpush.msra.mxu0 0.0
        %1459 = vmatpush.msra.mxu0 0.0
        %1460 = vmatpush.msra.mxu0 0.0
        %1461 = vmatpush.msra.mxu0 0.0
        %1462 = vmatpush.msra.mxu0 0.0
        %1463 = vmatpush.msra.mxu0 0.0
        %1464 = vmatpush.msra.mxu0 0.0
        %1465 = vmatpush.msra.mxu0 0.0
        %1466 = vmatpush.msra.mxu0 0.0
        %1467 = vmatpush.msra.mxu0 0.0
        %1468 = vmatpush.msra.mxu0 %v1032
        %1469 = vmatpush.msra.mxu0 %v952
        %1470 = vmatpush.msra.mxu0 %v872
        %1471 = vmatpush.msra.mxu0 %v792
        %1472 = vmatpush.msra.mxu0 %v712
        %1473 = vmatmul.f32.gmra.mxu0 %v1095
        %v1474 = vpop.f32.mrf.mxu0
        %v1475 = vadd.f32 0.0, %v1474
        %1476 = vdwg.mxu0
        %1477 = vmatpush.msra.mxu0 0.0
        %1478 = vmatpush.msra.mxu0 0.0
        %1479 = vmatpush.msra.mxu0 0.0
        %1480 = vmatpush.msra.mxu0 0.0
        %1481 = vmatpush.msra.mxu0 0.0
        %1482 = vmatpush.msra.mxu0 0.0
        %1483 = vmatpush.msra.mxu0 0.0
        %1484 = vmatpush.msra.mxu0 0.0
        %1485 = vmatpush.msra.mxu0 0.0
        %1486 = vmatpush.msra.mxu0 0.0
        %1487 = vmatpush.msra.mxu0 0.0
        %1488 = vmatpush.msra.mxu0 %v1033
        %1489 = vmatpush.msra.mxu0 %v953
        %1490 = vmatpush.msra.mxu0 %v873
        %1491 = vmatpush.msra.mxu0 %v793
        %1492 = vmatpush.msra.mxu0 %v713
        %1493 = vmatmul.f32.gmra.mxu0 %v1095
        %v1494 = vpop.f32.mrf.mxu0
        %v1495 = vadd.f32 0.0, %v1494
        %1496 = vdwg.mxu0
        %1497 = vmatpush.msra.mxu0 0.0
        %1498 = vmatpush.msra.mxu0 0.0
        %1499 = vmatpush.msra.mxu0 0.0
        %1500 = vmatpush.msra.mxu0 0.0
        %1501 = vmatpush.msra.mxu0 0.0
        %1502 = vmatpush.msra.mxu0 0.0
        %1503 = vmatpush.msra.mxu0 0.0
        %1504 = vmatpush.msra.mxu0 0.0
        %1505 = vmatpush.msra.mxu0 0.0
        %1506 = vmatpush.msra.mxu0 0.0
        %1507 = vmatpush.msra.mxu0 0.0
        %1508 = vmatpush.msra.mxu0 %v1034
        %1509 = vmatpush.msra.mxu0 %v954
        %1510 = vmatpush.msra.mxu0 %v874
        %1511 = vmatpush.msra.mxu0 %v794
        %1512 = vmatpush.msra.mxu0 %v714
        %1513 = vmatmul.f32.gmra.mxu0 %v1095
        %v1514 = vpop.f32.mrf.mxu0
        %v1515 = vadd.f32 0.0, %v1514
        %1516 = vdwg.mxu0
        %1517 = vmatpush.msra.mxu0 0.0
        %1518 = vmatpush.msra.mxu0 0.0
        %1519 = vmatpush.msra.mxu0 0.0
        %1520 = vmatpush.msra.mxu0 0.0
        %1521 = vmatpush.msra.mxu0 0.0
        %1522 = vmatpush.msra.mxu0 0.0
        %1523 = vmatpush.msra.mxu0 0.0
        %1524 = vmatpush.msra.mxu0 0.0
        %1525 = vmatpush.msra.mxu0 0.0
        %1526 = vmatpush.msra.mxu0 0.0
        %1527 = vmatpush.msra.mxu0 0.0
        %1528 = vmatpush.msra.mxu0 %v1035
        %1529 = vmatpush.msra.mxu0 %v955
        %1530 = vmatpush.msra.mxu0 %v875
        %1531 = vmatpush.msra.mxu0 %v795
        %1532 = vmatpush.msra.mxu0 %v715
        %1533 = vmatmul.f32.gmra.mxu0 %v1095
        %v1534 = vpop.f32.mrf.mxu0
        %v1535 = vadd.f32 0.0, %v1534
        %1536 = vdwg.mxu0
        %1537 = vmatpush.msra.mxu0 0.0
        %1538 = vmatpush.msra.mxu0 0.0
        %1539 = vmatpush.msra.mxu0 0.0
        %1540 = vmatpush.msra.mxu0 0.0
        %1541 = vmatpush.msra.mxu0 0.0
        %1542 = vmatpush.msra.mxu0 0.0
        %1543 = vmatpush.msra.mxu0 0.0
        %1544 = vmatpush.msra.mxu0 0.0
        %1545 = vmatpush.msra.mxu0 0.0
        %1546 = vmatpush.msra.mxu0 0.0
        %1547 = vmatpush.msra.mxu0 0.0
        %1548 = vmatpush.msra.mxu0 %v1036
        %1549 = vmatpush.msra.mxu0 %v956
        %1550 = vmatpush.msra.mxu0 %v876
        %1551 = vmatpush.msra.mxu0 %v796
        %1552 = vmatpush.msra.mxu0 %v716
        %1553 = vmatmul.f32.gmra.mxu0 %v1095
        %v1554 = vpop.f32.mrf.mxu0
        %v1555 = vadd.f32 0.0, %v1554
        %1556 = vdwg.mxu0
        %1557 = vmatpush.msra.mxu0 0.0
        %1558 = vmatpush.msra.mxu0 0.0
        %1559 = vmatpush.msra.mxu0 0.0
        %1560 = vmatpush.msra.mxu0 0.0
        %1561 = vmatpush.msra.mxu0 0.0
        %1562 = vmatpush.msra.mxu0 0.0
        %1563 = vmatpush.msra.mxu0 0.0
        %1564 = vmatpush.msra.mxu0 0.0
        %1565 = vmatpush.msra.mxu0 0.0
        %1566 = vmatpush.msra.mxu0 0.0
        %1567 = vmatpush.msra.mxu0 0.0
        %1568 = vmatpush.msra.mxu0 %v1037
        %1569 = vmatpush.msra.mxu0 %v957
        %1570 = vmatpush.msra.mxu0 %v877
        %1571 = vmatpush.msra.mxu0 %v797
        %1572 = vmatpush.msra.mxu0 %v717
        %1573 = vmatmul.f32.gmra.mxu0 %v1095
        %v1574 = vpop.f32.mrf.mxu0
        %v1575 = vadd.f32 0.0, %v1574
        %1576 = vdwg.mxu0
        %1577 = vmatpush.msra.mxu0 0.0
        %1578 = vmatpush.msra.mxu0 0.0
        %1579 = vmatpush.msra.mxu0 0.0
        %1580 = vmatpush.msra.mxu0 0.0
        %1581 = vmatpush.msra.mxu0 0.0
        %1582 = vmatpush.msra.mxu0 0.0
        %1583 = vmatpush.msra.mxu0 0.0
        %1584 = vmatpush.msra.mxu0 0.0
        %1585 = vmatpush.msra.mxu0 0.0
        %1586 = vmatpush.msra.mxu0 0.0
        %1587 = vmatpush.msra.mxu0 0.0
        %1588 = vmatpush.msra.mxu0 %v1038
        %1589 = vmatpush.msra.mxu0 %v958
        %1590 = vmatpush.msra.mxu0 %v878
        %1591 = vmatpush.msra.mxu0 %v798
        %1592 = vmatpush.msra.mxu0 %v718
        %1593 = vmatmul.f32.gmra.mxu0 %v1095
        %v1594 = vpop.f32.mrf.mxu0
        %v1595 = vadd.f32 0.0, %v1594
        %1596 = vdwg.mxu0
        %1597 = vmatpush.msra.mxu0 0.0
        %1598 = vmatpush.msra.mxu0 0.0
        %1599 = vmatpush.msra.mxu0 0.0
        %1600 = vmatpush.msra.mxu0 0.0
        %1601 = vmatpush.msra.mxu0 0.0
        %1602 = vmatpush.msra.mxu0 0.0
        %1603 = vmatpush.msra.mxu0 0.0
        %1604 = vmatpush.msra.mxu0 0.0
        %1605 = vmatpush.msra.mxu0 0.0
        %1606 = vmatpush.msra.mxu0 0.0
        %1607 = vmatpush.msra.mxu0 0.0
        %1608 = vmatpush.msra.mxu0 %v1039
        %1609 = vmatpush.msra.mxu0 %v959
        %1610 = vmatpush.msra.mxu0 %v879
        %1611 = vmatpush.msra.mxu0 %v799
        %1612 = vmatpush.msra.mxu0 %v719
        %1613 = vmatmul.f32.gmra.mxu0 %v1095
        %v1614 = vpop.f32.mrf.mxu0
        %v1615 = vadd.f32 0.0, %v1614
        %1616 = vdwg.mxu0
        %1617 = vmatpush.msra.mxu0 0.0
        %1618 = vmatpush.msra.mxu0 0.0
        %1619 = vmatpush.msra.mxu0 0.0
        %1620 = vmatpush.msra.mxu0 0.0
        %1621 = vmatpush.msra.mxu0 0.0
        %1622 = vmatpush.msra.mxu0 0.0
        %1623 = vmatpush.msra.mxu0 0.0
        %1624 = vmatpush.msra.mxu0 0.0
        %1625 = vmatpush.msra.mxu0 0.0
        %1626 = vmatpush.msra.mxu0 0.0
        %1627 = vmatpush.msra.mxu0 0.0
        %1628 = vmatpush.msra.mxu0 %v1040
        %1629 = vmatpush.msra.mxu0 %v960
        %1630 = vmatpush.msra.mxu0 %v880
        %1631 = vmatpush.msra.mxu0 %v800
        %1632 = vmatpush.msra.mxu0 %v720
        %1633 = vmatmul.f32.gmra.mxu0 %v1095
        %v1634 = vpop.f32.mrf.mxu0
        %v1635 = vadd.f32 0.0, %v1634
        %1636 = vdwg.mxu0
        %1637 = vmatpush.msra.mxu0 0.0
        %1638 = vmatpush.msra.mxu0 0.0
        %1639 = vmatpush.msra.mxu0 0.0
        %1640 = vmatpush.msra.mxu0 0.0
        %1641 = vmatpush.msra.mxu0 0.0
        %1642 = vmatpush.msra.mxu0 0.0
        %1643 = vmatpush.msra.mxu0 0.0
        %1644 = vmatpush.msra.mxu0 0.0
        %1645 = vmatpush.msra.mxu0 0.0
        %1646 = vmatpush.msra.mxu0 0.0
        %1647 = vmatpush.msra.mxu0 0.0
        %1648 = vmatpush.msra.mxu0 %v1041
        %1649 = vmatpush.msra.mxu0 %v961
        %1650 = vmatpush.msra.mxu0 %v881
        %1651 = vmatpush.msra.mxu0 %v801
        %1652 = vmatpush.msra.mxu0 %v721
        %1653 = vmatmul.f32.gmra.mxu0 %v1095
        %v1654 = vpop.f32.mrf.mxu0
        %v1655 = vadd.f32 0.0, %v1654
        %1656 = vdwg.mxu0
        %1657 = vmatpush.msra.mxu0 0.0
        %1658 = vmatpush.msra.mxu0 0.0
        %1659 = vmatpush.msra.mxu0 0.0
        %1660 = vmatpush.msra.mxu0 0.0
        %1661 = vmatpush.msra.mxu0 0.0
        %1662 = vmatpush.msra.mxu0 0.0
        %1663 = vmatpush.msra.mxu0 0.0
        %1664 = vmatpush.msra.mxu0 0.0
        %1665 = vmatpush.msra.mxu0 0.0
        %1666 = vmatpush.msra.mxu0 0.0
        %1667 = vmatpush.msra.mxu0 0.0
        %1668 = vmatpush.msra.mxu0 %v1042
        %1669 = vmatpush.msra.mxu0 %v962
        %1670 = vmatpush.msra.mxu0 %v882
        %1671 = vmatpush.msra.mxu0 %v802
        %1672 = vmatpush.msra.mxu0 %v722
        %1673 = vmatmul.f32.gmra.mxu0 %v1095
        %v1674 = vpop.f32.mrf.mxu0
        %v1675 = vadd.f32 0.0, %v1674
        %1676 = vdwg.mxu0
        %1677 = vmatpush.msra.mxu0 0.0
        %1678 = vmatpush.msra.mxu0 0.0
        %1679 = vmatpush.msra.mxu0 0.0
        %1680 = vmatpush.msra.mxu0 0.0
        %1681 = vmatpush.msra.mxu0 0.0
        %1682 = vmatpush.msra.mxu0 0.0
        %1683 = vmatpush.msra.mxu0 0.0
        %1684 = vmatpush.msra.mxu0 0.0
        %1685 = vmatpush.msra.mxu0 0.0
        %1686 = vmatpush.msra.mxu0 0.0
        %1687 = vmatpush.msra.mxu0 0.0
        %1688 = vmatpush.msra.mxu0 %v1043
        %1689 = vmatpush.msra.mxu0 %v963
        %1690 = vmatpush.msra.mxu0 %v883
        %1691 = vmatpush.msra.mxu0 %v803
        %1692 = vmatpush.msra.mxu0 %v723
        %1693 = vmatmul.f32.gmra.mxu0 %v1095
        %v1694 = vpop.f32.mrf.mxu0
        %v1695 = vadd.f32 0.0, %v1694
        %1696 = vdwg.mxu0
        %1697 = vmatpush.msra.mxu0 0.0
        %1698 = vmatpush.msra.mxu0 0.0
        %1699 = vmatpush.msra.mxu0 0.0
        %1700 = vmatpush.msra.mxu0 0.0
        %1701 = vmatpush.msra.mxu0 0.0
        %1702 = vmatpush.msra.mxu0 0.0
        %1703 = vmatpush.msra.mxu0 0.0
        %1704 = vmatpush.msra.mxu0 0.0
        %1705 = vmatpush.msra.mxu0 0.0
        %1706 = vmatpush.msra.mxu0 0.0
        %1707 = vmatpush.msra.mxu0 0.0
        %1708 = vmatpush.msra.mxu0 %v1044
        %1709 = vmatpush.msra.mxu0 %v964
        %1710 = vmatpush.msra.mxu0 %v884
        %1711 = vmatpush.msra.mxu0 %v804
        %1712 = vmatpush.msra.mxu0 %v724
        %1713 = vmatmul.f32.gmra.mxu0 %v1095
        %v1714 = vpop.f32.mrf.mxu0
        %v1715 = vadd.f32 0.0, %v1714
        %1716 = vdwg.mxu0
        %1717 = vmatpush.msra.mxu0 0.0
        %1718 = vmatpush.msra.mxu0 0.0
        %1719 = vmatpush.msra.mxu0 0.0
        %1720 = vmatpush.msra.mxu0 0.0
        %1721 = vmatpush.msra.mxu0 0.0
        %1722 = vmatpush.msra.mxu0 0.0
        %1723 = vmatpush.msra.mxu0 0.0
        %1724 = vmatpush.msra.mxu0 0.0
        %1725 = vmatpush.msra.mxu0 0.0
        %1726 = vmatpush.msra.mxu0 0.0
        %1727 = vmatpush.msra.mxu0 0.0
        %1728 = vmatpush.msra.mxu0 %v1045
        %1729 = vmatpush.msra.mxu0 %v965
        %1730 = vmatpush.msra.mxu0 %v885
        %1731 = vmatpush.msra.mxu0 %v805
        %1732 = vmatpush.msra.mxu0 %v725
        %1733 = vmatmul.f32.gmra.mxu0 %v1095
        %v1734 = vpop.f32.mrf.mxu0
        %v1735 = vadd.f32 0.0, %v1734
        %1736 = vdwg.mxu0
        %1737 = vmatpush.msra.mxu0 0.0
        %1738 = vmatpush.msra.mxu0 0.0
        %1739 = vmatpush.msra.mxu0 0.0
        %1740 = vmatpush.msra.mxu0 0.0
        %1741 = vmatpush.msra.mxu0 0.0
        %1742 = vmatpush.msra.mxu0 0.0
        %1743 = vmatpush.msra.mxu0 0.0
        %1744 = vmatpush.msra.mxu0 0.0
        %1745 = vmatpush.msra.mxu0 0.0
        %1746 = vmatpush.msra.mxu0 0.0
        %1747 = vmatpush.msra.mxu0 0.0
        %1748 = vmatpush.msra.mxu0 %v1046
        %1749 = vmatpush.msra.mxu0 %v966
        %1750 = vmatpush.msra.mxu0 %v886
        %1751 = vmatpush.msra.mxu0 %v806
        %1752 = vmatpush.msra.mxu0 %v726
        %1753 = vmatmul.f32.gmra.mxu0 %v1095
        %v1754 = vpop.f32.mrf.mxu0
        %v1755 = vadd.f32 0.0, %v1754
        %1756 = vdwg.mxu0
        %1757 = vmatpush.msra.mxu0 0.0
        %1758 = vmatpush.msra.mxu0 0.0
        %1759 = vmatpush.msra.mxu0 0.0
        %1760 = vmatpush.msra.mxu0 0.0
        %1761 = vmatpush.msra.mxu0 0.0
        %1762 = vmatpush.msra.mxu0 0.0
        %1763 = vmatpush.msra.mxu0 0.0
        %1764 = vmatpush.msra.mxu0 0.0
        %1765 = vmatpush.msra.mxu0 0.0
        %1766 = vmatpush.msra.mxu0 0.0
        %1767 = vmatpush.msra.mxu0 0.0
        %1768 = vmatpush.msra.mxu0 %v1047
        %1769 = vmatpush.msra.mxu0 %v967
        %1770 = vmatpush.msra.mxu0 %v887
        %1771 = vmatpush.msra.mxu0 %v807
        %1772 = vmatpush.msra.mxu0 %v727
        %1773 = vmatmul.f32.gmra.mxu0 %v1095
        %v1774 = vpop.f32.mrf.mxu0
        %v1775 = vadd.f32 0.0, %v1774
        %1776 = vdwg.mxu0
        %1777 = vmatpush.msra.mxu0 0.0
        %1778 = vmatpush.msra.mxu0 0.0
        %1779 = vmatpush.msra.mxu0 0.0
        %1780 = vmatpush.msra.mxu0 0.0
        %1781 = vmatpush.msra.mxu0 0.0
        %1782 = vmatpush.msra.mxu0 0.0
        %1783 = vmatpush.msra.mxu0 0.0
        %1784 = vmatpush.msra.mxu0 0.0
        %1785 = vmatpush.msra.mxu0 0.0
        %1786 = vmatpush.msra.mxu0 0.0
        %1787 = vmatpush.msra.mxu0 0.0
        %1788 = vmatpush.msra.mxu0 %v1048
        %1789 = vmatpush.msra.mxu0 %v968
        %1790 = vmatpush.msra.mxu0 %v888
        %1791 = vmatpush.msra.mxu0 %v808
        %1792 = vmatpush.msra.mxu0 %v728
        %1793 = vmatmul.f32.gmra.mxu0 %v1095
        %v1794 = vpop.f32.mrf.mxu0
        %v1795 = vadd.f32 0.0, %v1794
        %1796 = vdwg.mxu0
        %1797 = vmatpush.msra.mxu0 0.0
        %1798 = vmatpush.msra.mxu0 0.0
        %1799 = vmatpush.msra.mxu0 0.0
        %1800 = vmatpush.msra.mxu0 0.0
        %1801 = vmatpush.msra.mxu0 0.0
        %1802 = vmatpush.msra.mxu0 0.0
        %1803 = vmatpush.msra.mxu0 0.0
        %1804 = vmatpush.msra.mxu0 0.0
        %1805 = vmatpush.msra.mxu0 0.0
        %1806 = vmatpush.msra.mxu0 0.0
        %1807 = vmatpush.msra.mxu0 0.0
        %1808 = vmatpush.msra.mxu0 %v1049
        %1809 = vmatpush.msra.mxu0 %v969
        %1810 = vmatpush.msra.mxu0 %v889
        %1811 = vmatpush.msra.mxu0 %v809
        %1812 = vmatpush.msra.mxu0 %v729
        %1813 = vmatmul.f32.gmra.mxu0 %v1095
        %v1814 = vpop.f32.mrf.mxu0
        %v1815 = vadd.f32 0.0, %v1814
        %1816 = vdwg.mxu0
        %1817 = vmatpush.msra.mxu0 0.0
        %1818 = vmatpush.msra.mxu0 0.0
        %1819 = vmatpush.msra.mxu0 0.0
        %1820 = vmatpush.msra.mxu0 0.0
        %1821 = vmatpush.msra.mxu0 0.0
        %1822 = vmatpush.msra.mxu0 0.0
        %1823 = vmatpush.msra.mxu0 0.0
        %1824 = vmatpush.msra.mxu0 0.0
        %1825 = vmatpush.msra.mxu0 0.0
        %1826 = vmatpush.msra.mxu0 0.0
        %1827 = vmatpush.msra.mxu0 0.0
        %1828 = vmatpush.msra.mxu0 %v1050
        %1829 = vmatpush.msra.mxu0 %v970
        %1830 = vmatpush.msra.mxu0 %v890
        %1831 = vmatpush.msra.mxu0 %v810
        %1832 = vmatpush.msra.mxu0 %v730
        %1833 = vmatmul.f32.gmra.mxu0 %v1095
        %v1834 = vpop.f32.mrf.mxu0
        %v1835 = vadd.f32 0.0, %v1834
        %1836 = vdwg.mxu0
        %1837 = vmatpush.msra.mxu0 0.0
        %1838 = vmatpush.msra.mxu0 0.0
        %1839 = vmatpush.msra.mxu0 0.0
        %1840 = vmatpush.msra.mxu0 0.0
        %1841 = vmatpush.msra.mxu0 0.0
        %1842 = vmatpush.msra.mxu0 0.0
        %1843 = vmatpush.msra.mxu0 0.0
        %1844 = vmatpush.msra.mxu0 0.0
        %1845 = vmatpush.msra.mxu0 0.0
        %1846 = vmatpush.msra.mxu0 0.0
        %1847 = vmatpush.msra.mxu0 0.0
        %1848 = vmatpush.msra.mxu0 %v1051
        %1849 = vmatpush.msra.mxu0 %v971
        %1850 = vmatpush.msra.mxu0 %v891
        %1851 = vmatpush.msra.mxu0 %v811
        %1852 = vmatpush.msra.mxu0 %v731
        %1853 = vmatmul.f32.gmra.mxu0 %v1095
        %v1854 = vpop.f32.mrf.mxu0
        %v1855 = vadd.f32 0.0, %v1854
        %1856 = vdwg.mxu0
        %1857 = vmatpush.msra.mxu0 0.0
        %1858 = vmatpush.msra.mxu0 0.0
        %1859 = vmatpush.msra.mxu0 0.0
        %1860 = vmatpush.msra.mxu0 0.0
        %1861 = vmatpush.msra.mxu0 0.0
        %1862 = vmatpush.msra.mxu0 0.0
        %1863 = vmatpush.msra.mxu0 0.0
        %1864 = vmatpush.msra.mxu0 0.0
        %1865 = vmatpush.msra.mxu0 0.0
        %1866 = vmatpush.msra.mxu0 0.0
        %1867 = vmatpush.msra.mxu0 0.0
        %1868 = vmatpush.msra.mxu0 %v1052
        %1869 = vmatpush.msra.mxu0 %v972
        %1870 = vmatpush.msra.mxu0 %v892
        %1871 = vmatpush.msra.mxu0 %v812
        %1872 = vmatpush.msra.mxu0 %v732
        %1873 = vmatmul.f32.gmra.mxu0 %v1095
        %v1874 = vpop.f32.mrf.mxu0
        %v1875 = vadd.f32 0.0, %v1874
        %1876 = vdwg.mxu0
        %1877 = vmatpush.msra.mxu0 0.0
        %1878 = vmatpush.msra.mxu0 0.0
        %1879 = vmatpush.msra.mxu0 0.0
        %1880 = vmatpush.msra.mxu0 0.0
        %1881 = vmatpush.msra.mxu0 0.0
        %1882 = vmatpush.msra.mxu0 0.0
        %1883 = vmatpush.msra.mxu0 0.0
        %1884 = vmatpush.msra.mxu0 0.0
        %1885 = vmatpush.msra.mxu0 0.0
        %1886 = vmatpush.msra.mxu0 0.0
        %1887 = vmatpush.msra.mxu0 0.0
        %1888 = vmatpush.msra.mxu0 %v1053
        %1889 = vmatpush.msra.mxu0 %v973
        %1890 = vmatpush.msra.mxu0 %v893
        %1891 = vmatpush.msra.mxu0 %v813
        %1892 = vmatpush.msra.mxu0 %v733
        %1893 = vmatmul.f32.gmra.mxu0 %v1095
        %v1894 = vpop.f32.mrf.mxu0
        %v1895 = vadd.f32 0.0, %v1894
        %1896 = vdwg.mxu0
        %1897 = vmatpush.msra.mxu0 0.0
        %1898 = vmatpush.msra.mxu0 0.0
        %1899 = vmatpush.msra.mxu0 0.0
        %1900 = vmatpush.msra.mxu0 0.0
        %1901 = vmatpush.msra.mxu0 0.0
        %1902 = vmatpush.msra.mxu0 0.0
        %1903 = vmatpush.msra.mxu0 0.0
        %1904 = vmatpush.msra.mxu0 0.0
        %1905 = vmatpush.msra.mxu0 0.0
        %1906 = vmatpush.msra.mxu0 0.0
        %1907 = vmatpush.msra.mxu0 0.0
        %1908 = vmatpush.msra.mxu0 %v1054
        %1909 = vmatpush.msra.mxu0 %v974
        %1910 = vmatpush.msra.mxu0 %v894
        %1911 = vmatpush.msra.mxu0 %v814
        %1912 = vmatpush.msra.mxu0 %v734
        %1913 = vmatmul.f32.gmra.mxu0 %v1095
        %v1914 = vpop.f32.mrf.mxu0
        %v1915 = vadd.f32 0.0, %v1914
        %1916 = vdwg.mxu0
        %1917 = vmatpush.msra.mxu0 0.0
        %1918 = vmatpush.msra.mxu0 0.0
        %1919 = vmatpush.msra.mxu0 0.0
        %1920 = vmatpush.msra.mxu0 0.0
        %1921 = vmatpush.msra.mxu0 0.0
        %1922 = vmatpush.msra.mxu0 0.0
        %1923 = vmatpush.msra.mxu0 0.0
        %1924 = vmatpush.msra.mxu0 0.0
        %1925 = vmatpush.msra.mxu0 0.0
        %1926 = vmatpush.msra.mxu0 0.0
        %1927 = vmatpush.msra.mxu0 0.0
        %1928 = vmatpush.msra.mxu0 %v1055
        %1929 = vmatpush.msra.mxu0 %v975
        %1930 = vmatpush.msra.mxu0 %v895
        %1931 = vmatpush.msra.mxu0 %v815
        %1932 = vmatpush.msra.mxu0 %v735
        %1933 = vmatmul.f32.gmra.mxu0 %v1095
        %v1934 = vpop.f32.mrf.mxu0
        %v1935 = vadd.f32 0.0, %v1934
        %1936 = vdwg.mxu0
        %1937 = vmatpush.msra.mxu0 0.0
        %1938 = vmatpush.msra.mxu0 0.0
        %1939 = vmatpush.msra.mxu0 0.0
        %1940 = vmatpush.msra.mxu0 0.0
        %1941 = vmatpush.msra.mxu0 0.0
        %1942 = vmatpush.msra.mxu0 0.0
        %1943 = vmatpush.msra.mxu0 0.0
        %1944 = vmatpush.msra.mxu0 0.0
        %1945 = vmatpush.msra.mxu0 0.0
        %1946 = vmatpush.msra.mxu0 0.0
        %1947 = vmatpush.msra.mxu0 0.0
        %1948 = vmatpush.msra.mxu0 %v1056
        %1949 = vmatpush.msra.mxu0 %v976
        %1950 = vmatpush.msra.mxu0 %v896
        %1951 = vmatpush.msra.mxu0 %v816
        %1952 = vmatpush.msra.mxu0 %v736
        %1953 = vmatmul.f32.gmra.mxu0 %v1095
        %v1954 = vpop.f32.mrf.mxu0
        %v1955 = vadd.f32 0.0, %v1954
        %1956 = vdwg.mxu0
        %1957 = vmatpush.msra.mxu0 0.0
        %1958 = vmatpush.msra.mxu0 0.0
        %1959 = vmatpush.msra.mxu0 0.0
        %1960 = vmatpush.msra.mxu0 0.0
        %1961 = vmatpush.msra.mxu0 0.0
        %1962 = vmatpush.msra.mxu0 0.0
        %1963 = vmatpush.msra.mxu0 0.0
        %1964 = vmatpush.msra.mxu0 0.0
        %1965 = vmatpush.msra.mxu0 0.0
        %1966 = vmatpush.msra.mxu0 0.0
        %1967 = vmatpush.msra.mxu0 0.0
        %1968 = vmatpush.msra.mxu0 %v1057
        %1969 = vmatpush.msra.mxu0 %v977
        %1970 = vmatpush.msra.mxu0 %v897
        %1971 = vmatpush.msra.mxu0 %v817
        %1972 = vmatpush.msra.mxu0 %v737
        %1973 = vmatmul.f32.gmra.mxu0 %v1095
        %v1974 = vpop.f32.mrf.mxu0
        %v1975 = vadd.f32 0.0, %v1974
        %1976 = vdwg.mxu0
        %1977 = vmatpush.msra.mxu0 0.0
        %1978 = vmatpush.msra.mxu0 0.0
        %1979 = vmatpush.msra.mxu0 0.0
        %1980 = vmatpush.msra.mxu0 0.0
        %1981 = vmatpush.msra.mxu0 0.0
        %1982 = vmatpush.msra.mxu0 0.0
        %1983 = vmatpush.msra.mxu0 0.0
        %1984 = vmatpush.msra.mxu0 0.0
        %1985 = vmatpush.msra.mxu0 0.0
        %1986 = vmatpush.msra.mxu0 0.0
        %1987 = vmatpush.msra.mxu0 0.0
        %1988 = vmatpush.msra.mxu0 %v1058
        %1989 = vmatpush.msra.mxu0 %v978
        %1990 = vmatpush.msra.mxu0 %v898
        %1991 = vmatpush.msra.mxu0 %v818
        %1992 = vmatpush.msra.mxu0 %v738
        %1993 = vmatmul.f32.gmra.mxu0 %v1095
        %v1994 = vpop.f32.mrf.mxu0
        %v1995 = vadd.f32 0.0, %v1994
        %1996 = vdwg.mxu0
        %1997 = vmatpush.msra.mxu0 0.0
        %1998 = vmatpush.msra.mxu0 0.0
        %1999 = vmatpush.msra.mxu0 0.0
        %2000 = vmatpush.msra.mxu0 0.0
        %2001 = vmatpush.msra.mxu0 0.0
        %2002 = vmatpush.msra.mxu0 0.0
        %2003 = vmatpush.msra.mxu0 0.0
        %2004 = vmatpush.msra.mxu0 0.0
        %2005 = vmatpush.msra.mxu0 0.0
        %2006 = vmatpush.msra.mxu0 0.0
        %2007 = vmatpush.msra.mxu0 0.0
        %2008 = vmatpush.msra.mxu0 %v1059
        %2009 = vmatpush.msra.mxu0 %v979
        %2010 = vmatpush.msra.mxu0 %v899
        %2011 = vmatpush.msra.mxu0 %v819
        %2012 = vmatpush.msra.mxu0 %v739
        %2013 = vmatmul.f32.gmra.mxu0 %v1095
        %v2014 = vpop.f32.mrf.mxu0
        %v2015 = vadd.f32 0.0, %v2014
        %2016 = vdwg.mxu0
        %2017 = vmatpush.msra.mxu0 0.0
        %2018 = vmatpush.msra.mxu0 0.0
        %2019 = vmatpush.msra.mxu0 0.0
        %2020 = vmatpush.msra.mxu0 0.0
        %2021 = vmatpush.msra.mxu0 0.0
        %2022 = vmatpush.msra.mxu0 0.0
        %2023 = vmatpush.msra.mxu0 0.0
        %2024 = vmatpush.msra.mxu0 0.0
        %2025 = vmatpush.msra.mxu0 0.0
        %2026 = vmatpush.msra.mxu0 0.0
        %2027 = vmatpush.msra.mxu0 0.0
        %2028 = vmatpush.msra.mxu0 %v1060
        %2029 = vmatpush.msra.mxu0 %v980
        %2030 = vmatpush.msra.mxu0 %v900
        %2031 = vmatpush.msra.mxu0 %v820
        %2032 = vmatpush.msra.mxu0 %v740
        %2033 = vmatmul.f32.gmra.mxu0 %v1095
        %v2034 = vpop.f32.mrf.mxu0
        %v2035 = vadd.f32 0.0, %v2034
        %2036 = vdwg.mxu0
        %2037 = vmatpush.msra.mxu0 0.0
        %2038 = vmatpush.msra.mxu0 0.0
        %2039 = vmatpush.msra.mxu0 0.0
        %2040 = vmatpush.msra.mxu0 0.0
        %2041 = vmatpush.msra.mxu0 0.0
        %2042 = vmatpush.msra.mxu0 0.0
        %2043 = vmatpush.msra.mxu0 0.0
        %2044 = vmatpush.msra.mxu0 0.0
        %2045 = vmatpush.msra.mxu0 0.0
        %2046 = vmatpush.msra.mxu0 0.0
        %2047 = vmatpush.msra.mxu0 0.0
        %2048 = vmatpush.msra.mxu0 %v1061
        %2049 = vmatpush.msra.mxu0 %v981
        %2050 = vmatpush.msra.mxu0 %v901
        %2051 = vmatpush.msra.mxu0 %v821
        %2052 = vmatpush.msra.mxu0 %v741
        %2053 = vmatmul.f32.gmra.mxu0 %v1095
        %v2054 = vpop.f32.mrf.mxu0
        %v2055 = vadd.f32 0.0, %v2054
        %2056 = vdwg.mxu0
        %2057 = vmatpush.msra.mxu0 0.0
        %2058 = vmatpush.msra.mxu0 0.0
        %2059 = vmatpush.msra.mxu0 0.0
        %2060 = vmatpush.msra.mxu0 0.0
        %2061 = vmatpush.msra.mxu0 0.0
        %2062 = vmatpush.msra.mxu0 0.0
        %2063 = vmatpush.msra.mxu0 0.0
        %2064 = vmatpush.msra.mxu0 0.0
        %2065 = vmatpush.msra.mxu0 0.0
        %2066 = vmatpush.msra.mxu0 0.0
        %2067 = vmatpush.msra.mxu0 0.0
        %2068 = vmatpush.msra.mxu0 %v1062
        %2069 = vmatpush.msra.mxu0 %v982
        %2070 = vmatpush.msra.mxu0 %v902
        %2071 = vmatpush.msra.mxu0 %v822
        %2072 = vmatpush.msra.mxu0 %v742
        %2073 = vmatmul.f32.gmra.mxu0 %v1095
        %v2074 = vpop.f32.mrf.mxu0
        %v2075 = vadd.f32 0.0, %v2074
        %2076 = vdwg.mxu0
        %2077 = vmatpush.msra.mxu0 0.0
        %2078 = vmatpush.msra.mxu0 0.0
        %2079 = vmatpush.msra.mxu0 0.0
        %2080 = vmatpush.msra.mxu0 0.0
        %2081 = vmatpush.msra.mxu0 0.0
        %2082 = vmatpush.msra.mxu0 0.0
        %2083 = vmatpush.msra.mxu0 0.0
        %2084 = vmatpush.msra.mxu0 0.0
        %2085 = vmatpush.msra.mxu0 0.0
        %2086 = vmatpush.msra.mxu0 0.0
        %2087 = vmatpush.msra.mxu0 0.0
        %2088 = vmatpush.msra.mxu0 %v1063
        %2089 = vmatpush.msra.mxu0 %v983
        %2090 = vmatpush.msra.mxu0 %v903
        %2091 = vmatpush.msra.mxu0 %v823
        %2092 = vmatpush.msra.mxu0 %v743
        %2093 = vmatmul.f32.gmra.mxu0 %v1095
        %v2094 = vpop.f32.mrf.mxu0
        %v2095 = vadd.f32 0.0, %v2094
        %2096 = vdwg.mxu0
        %2097 = vmatpush.msra.mxu0 0.0
        %2098 = vmatpush.msra.mxu0 0.0
        %2099 = vmatpush.msra.mxu0 0.0
        %2100 = vmatpush.msra.mxu0 0.0
        %2101 = vmatpush.msra.mxu0 0.0
        %2102 = vmatpush.msra.mxu0 0.0
        %2103 = vmatpush.msra.mxu0 0.0
        %2104 = vmatpush.msra.mxu0 0.0
        %2105 = vmatpush.msra.mxu0 0.0
        %2106 = vmatpush.msra.mxu0 0.0
        %2107 = vmatpush.msra.mxu0 0.0
        %2108 = vmatpush.msra.mxu0 %v1064
        %2109 = vmatpush.msra.mxu0 %v984
        %2110 = vmatpush.msra.mxu0 %v904
        %2111 = vmatpush.msra.mxu0 %v824
        %2112 = vmatpush.msra.mxu0 %v744
        %2113 = vmatmul.f32.gmra.mxu0 %v1095
        %v2114 = vpop.f32.mrf.mxu0
        %v2115 = vadd.f32 0.0, %v2114
        %2116 = vdwg.mxu0
        %2117 = vmatpush.msra.mxu0 0.0
        %2118 = vmatpush.msra.mxu0 0.0
        %2119 = vmatpush.msra.mxu0 0.0
        %2120 = vmatpush.msra.mxu0 0.0
        %2121 = vmatpush.msra.mxu0 0.0
        %2122 = vmatpush.msra.mxu0 0.0
        %2123 = vmatpush.msra.mxu0 0.0
        %2124 = vmatpush.msra.mxu0 0.0
        %2125 = vmatpush.msra.mxu0 0.0
        %2126 = vmatpush.msra.mxu0 0.0
        %2127 = vmatpush.msra.mxu0 0.0
        %2128 = vmatpush.msra.mxu0 %v1065
        %2129 = vmatpush.msra.mxu0 %v985
        %2130 = vmatpush.msra.mxu0 %v905
        %2131 = vmatpush.msra.mxu0 %v825
        %2132 = vmatpush.msra.mxu0 %v745
        %2133 = vmatmul.f32.gmra.mxu0 %v1095
        %v2134 = vpop.f32.mrf.mxu0
        %v2135 = vadd.f32 0.0, %v2134
        %2136 = vdwg.mxu0
        %2137 = vmatpush.msra.mxu0 0.0
        %2138 = vmatpush.msra.mxu0 0.0
        %2139 = vmatpush.msra.mxu0 0.0
        %2140 = vmatpush.msra.mxu0 0.0
        %2141 = vmatpush.msra.mxu0 0.0
        %2142 = vmatpush.msra.mxu0 0.0
        %2143 = vmatpush.msra.mxu0 0.0
        %2144 = vmatpush.msra.mxu0 0.0
        %2145 = vmatpush.msra.mxu0 0.0
        %2146 = vmatpush.msra.mxu0 0.0
        %2147 = vmatpush.msra.mxu0 0.0
        %2148 = vmatpush.msra.mxu0 %v1066
        %2149 = vmatpush.msra.mxu0 %v986
        %2150 = vmatpush.msra.mxu0 %v906
        %2151 = vmatpush.msra.mxu0 %v826
        %2152 = vmatpush.msra.mxu0 %v746
        %2153 = vmatmul.f32.gmra.mxu0 %v1095
        %v2154 = vpop.f32.mrf.mxu0
        %v2155 = vadd.f32 0.0, %v2154
        %2156 = vdwg.mxu0
        %2157 = vmatpush.msra.mxu0 0.0
        %2158 = vmatpush.msra.mxu0 0.0
        %2159 = vmatpush.msra.mxu0 0.0
        %2160 = vmatpush.msra.mxu0 0.0
        %2161 = vmatpush.msra.mxu0 0.0
        %2162 = vmatpush.msra.mxu0 0.0
        %2163 = vmatpush.msra.mxu0 0.0
        %2164 = vmatpush.msra.mxu0 0.0
        %2165 = vmatpush.msra.mxu0 0.0
        %2166 = vmatpush.msra.mxu0 0.0
        %2167 = vmatpush.msra.mxu0 0.0
        %2168 = vmatpush.msra.mxu0 %v1067
        %2169 = vmatpush.msra.mxu0 %v987
        %2170 = vmatpush.msra.mxu0 %v907
        %2171 = vmatpush.msra.mxu0 %v827
        %2172 = vmatpush.msra.mxu0 %v747
        %2173 = vmatmul.f32.gmra.mxu0 %v1095
        %v2174 = vpop.f32.mrf.mxu0
        %v2175 = vadd.f32 0.0, %v2174
        %2176 = vdwg.mxu0
        %2177 = vmatpush.msra.mxu0 0.0
        %2178 = vmatpush.msra.mxu0 0.0
        %2179 = vmatpush.msra.mxu0 0.0
        %2180 = vmatpush.msra.mxu0 0.0
        %2181 = vmatpush.msra.mxu0 0.0
        %2182 = vmatpush.msra.mxu0 0.0
        %2183 = vmatpush.msra.mxu0 0.0
        %2184 = vmatpush.msra.mxu0 0.0
        %2185 = vmatpush.msra.mxu0 0.0
        %2186 = vmatpush.msra.mxu0 0.0
        %2187 = vmatpush.msra.mxu0 0.0
        %2188 = vmatpush.msra.mxu0 %v1068
        %2189 = vmatpush.msra.mxu0 %v988
        %2190 = vmatpush.msra.mxu0 %v908
        %2191 = vmatpush.msra.mxu0 %v828
        %2192 = vmatpush.msra.mxu0 %v748
        %2193 = vmatmul.f32.gmra.mxu0 %v1095
        %v2194 = vpop.f32.mrf.mxu0
        %v2195 = vadd.f32 0.0, %v2194
        %2196 = vdwg.mxu0
        %2197 = vmatpush.msra.mxu0 0.0
        %2198 = vmatpush.msra.mxu0 0.0
        %2199 = vmatpush.msra.mxu0 0.0
        %2200 = vmatpush.msra.mxu0 0.0
        %2201 = vmatpush.msra.mxu0 0.0
        %2202 = vmatpush.msra.mxu0 0.0
        %2203 = vmatpush.msra.mxu0 0.0
        %2204 = vmatpush.msra.mxu0 0.0
        %2205 = vmatpush.msra.mxu0 0.0
        %2206 = vmatpush.msra.mxu0 0.0
        %2207 = vmatpush.msra.mxu0 0.0
        %2208 = vmatpush.msra.mxu0 %v1069
        %2209 = vmatpush.msra.mxu0 %v989
        %2210 = vmatpush.msra.mxu0 %v909
        %2211 = vmatpush.msra.mxu0 %v829
        %2212 = vmatpush.msra.mxu0 %v749
        %2213 = vmatmul.f32.gmra.mxu0 %v1095
        %v2214 = vpop.f32.mrf.mxu0
        %v2215 = vadd.f32 0.0, %v2214
        %2216 = vdwg.mxu0
        %2217 = vmatpush.msra.mxu0 0.0
        %2218 = vmatpush.msra.mxu0 0.0
        %2219 = vmatpush.msra.mxu0 0.0
        %2220 = vmatpush.msra.mxu0 0.0
        %2221 = vmatpush.msra.mxu0 0.0
        %2222 = vmatpush.msra.mxu0 0.0
        %2223 = vmatpush.msra.mxu0 0.0
        %2224 = vmatpush.msra.mxu0 0.0
        %2225 = vmatpush.msra.mxu0 0.0
        %2226 = vmatpush.msra.mxu0 0.0
        %2227 = vmatpush.msra.mxu0 0.0
        %2228 = vmatpush.msra.mxu0 %v1070
        %2229 = vmatpush.msra.mxu0 %v990
        %2230 = vmatpush.msra.mxu0 %v910
        %2231 = vmatpush.msra.mxu0 %v830
        %2232 = vmatpush.msra.mxu0 %v750
        %2233 = vmatmul.f32.gmra.mxu0 %v1095
        %v2234 = vpop.f32.mrf.mxu0
        %v2235 = vadd.f32 0.0, %v2234
        %2236 = vdwg.mxu0
        %2237 = vmatpush.msra.mxu0 0.0
        %2238 = vmatpush.msra.mxu0 0.0
        %2239 = vmatpush.msra.mxu0 0.0
        %2240 = vmatpush.msra.mxu0 0.0
        %2241 = vmatpush.msra.mxu0 0.0
        %2242 = vmatpush.msra.mxu0 0.0
        %2243 = vmatpush.msra.mxu0 0.0
        %2244 = vmatpush.msra.mxu0 0.0
        %2245 = vmatpush.msra.mxu0 0.0
        %2246 = vmatpush.msra.mxu0 0.0
        %2247 = vmatpush.msra.mxu0 0.0
        %2248 = vmatpush.msra.mxu0 %v1071
        %2249 = vmatpush.msra.mxu0 %v991
        %2250 = vmatpush.msra.mxu0 %v911
        %2251 = vmatpush.msra.mxu0 %v831
        %2252 = vmatpush.msra.mxu0 %v751
        %2253 = vmatmul.f32.gmra.mxu0 %v1095
        %v2254 = vpop.f32.mrf.mxu0
        %v2255 = vadd.f32 0.0, %v2254
        %2256 = vdwg.mxu0
        %2257 = vmatpush.msra.mxu0 0.0
        %2258 = vmatpush.msra.mxu0 0.0
        %2259 = vmatpush.msra.mxu0 0.0
        %2260 = vmatpush.msra.mxu0 0.0
        %2261 = vmatpush.msra.mxu0 0.0
        %2262 = vmatpush.msra.mxu0 0.0
        %2263 = vmatpush.msra.mxu0 0.0
        %2264 = vmatpush.msra.mxu0 0.0
        %2265 = vmatpush.msra.mxu0 0.0
        %2266 = vmatpush.msra.mxu0 0.0
        %2267 = vmatpush.msra.mxu0 0.0
        %2268 = vmatpush.msra.mxu0 %v1072
        %2269 = vmatpush.msra.mxu0 %v992
        %2270 = vmatpush.msra.mxu0 %v912
        %2271 = vmatpush.msra.mxu0 %v832
        %2272 = vmatpush.msra.mxu0 %v752
        %2273 = vmatmul.f32.gmra.mxu0 %v1095
        %v2274 = vpop.f32.mrf.mxu0
        %v2275 = vadd.f32 0.0, %v2274
        %2276 = vdwg.mxu0
        %2277 = vmatpush.msra.mxu0 0.0
        %2278 = vmatpush.msra.mxu0 0.0
        %2279 = vmatpush.msra.mxu0 0.0
        %2280 = vmatpush.msra.mxu0 0.0
        %2281 = vmatpush.msra.mxu0 0.0
        %2282 = vmatpush.msra.mxu0 0.0
        %2283 = vmatpush.msra.mxu0 0.0
        %2284 = vmatpush.msra.mxu0 0.0
        %2285 = vmatpush.msra.mxu0 0.0
        %2286 = vmatpush.msra.mxu0 0.0
        %2287 = vmatpush.msra.mxu0 0.0
        %2288 = vmatpush.msra.mxu0 %v1073
        %2289 = vmatpush.msra.mxu0 %v993
        %2290 = vmatpush.msra.mxu0 %v913
        %2291 = vmatpush.msra.mxu0 %v833
        %2292 = vmatpush.msra.mxu0 %v753
        %2293 = vmatmul.f32.gmra.mxu0 %v1095
        %v2294 = vpop.f32.mrf.mxu0
        %v2295 = vadd.f32 0.0, %v2294
        %2296 = vdwg.mxu0
        %2297 = vmatpush.msra.mxu0 0.0
        %2298 = vmatpush.msra.mxu0 0.0
        %2299 = vmatpush.msra.mxu0 0.0
        %2300 = vmatpush.msra.mxu0 0.0
        %2301 = vmatpush.msra.mxu0 0.0
        %2302 = vmatpush.msra.mxu0 0.0
        %2303 = vmatpush.msra.mxu0 0.0
        %2304 = vmatpush.msra.mxu0 0.0
        %2305 = vmatpush.msra.mxu0 0.0
        %2306 = vmatpush.msra.mxu0 0.0
        %2307 = vmatpush.msra.mxu0 0.0
        %2308 = vmatpush.msra.mxu0 %v1074
        %2309 = vmatpush.msra.mxu0 %v994
        %2310 = vmatpush.msra.mxu0 %v914
        %2311 = vmatpush.msra.mxu0 %v834
        %2312 = vmatpush.msra.mxu0 %v754
        %2313 = vmatmul.f32.gmra.mxu0 %v1095
        %v2314 = vpop.f32.mrf.mxu0
        %v2315 = vadd.f32 0.0, %v2314
        %2316 = vdwg.mxu0
        %2317 = vmatpush.msra.mxu0 0.0
        %2318 = vmatpush.msra.mxu0 0.0
        %2319 = vmatpush.msra.mxu0 0.0
        %2320 = vmatpush.msra.mxu0 0.0
        %2321 = vmatpush.msra.mxu0 0.0
        %2322 = vmatpush.msra.mxu0 0.0
        %2323 = vmatpush.msra.mxu0 0.0
        %2324 = vmatpush.msra.mxu0 0.0
        %2325 = vmatpush.msra.mxu0 0.0
        %2326 = vmatpush.msra.mxu0 0.0
        %2327 = vmatpush.msra.mxu0 0.0
        %2328 = vmatpush.msra.mxu0 %v1075
        %2329 = vmatpush.msra.mxu0 %v995
        %2330 = vmatpush.msra.mxu0 %v915
        %2331 = vmatpush.msra.mxu0 %v835
        %2332 = vmatpush.msra.mxu0 %v755
        %2333 = vmatmul.f32.gmra.mxu0 %v1095
        %v2334 = vpop.f32.mrf.mxu0
        %v2335 = vadd.f32 0.0, %v2334
        %2336 = vdwg.mxu0
        %2337 = vmatpush.msra.mxu0 0.0
        %2338 = vmatpush.msra.mxu0 0.0
        %2339 = vmatpush.msra.mxu0 0.0
        %2340 = vmatpush.msra.mxu0 0.0
        %2341 = vmatpush.msra.mxu0 0.0
        %2342 = vmatpush.msra.mxu0 0.0
        %2343 = vmatpush.msra.mxu0 0.0
        %2344 = vmatpush.msra.mxu0 0.0
        %2345 = vmatpush.msra.mxu0 0.0
        %2346 = vmatpush.msra.mxu0 0.0
        %2347 = vmatpush.msra.mxu0 0.0
        %2348 = vmatpush.msra.mxu0 %v1076
        %2349 = vmatpush.msra.mxu0 %v996
        %2350 = vmatpush.msra.mxu0 %v916
        %2351 = vmatpush.msra.mxu0 %v836
        %2352 = vmatpush.msra.mxu0 %v756
        %2353 = vmatmul.f32.gmra.mxu0 %v1095
        %v2354 = vpop.f32.mrf.mxu0
        %v2355 = vadd.f32 0.0, %v2354
        %2356 = vdwg.mxu0
        %2357 = vmatpush.msra.mxu0 0.0
        %2358 = vmatpush.msra.mxu0 0.0
        %2359 = vmatpush.msra.mxu0 0.0
        %2360 = vmatpush.msra.mxu0 0.0
        %2361 = vmatpush.msra.mxu0 0.0
        %2362 = vmatpush.msra.mxu0 0.0
        %2363 = vmatpush.msra.mxu0 0.0
        %2364 = vmatpush.msra.mxu0 0.0
        %2365 = vmatpush.msra.mxu0 0.0
        %2366 = vmatpush.msra.mxu0 0.0
        %2367 = vmatpush.msra.mxu0 0.0
        %2368 = vmatpush.msra.mxu0 %v1077
        %2369 = vmatpush.msra.mxu0 %v997
        %2370 = vmatpush.msra.mxu0 %v917
        %2371 = vmatpush.msra.mxu0 %v837
        %2372 = vmatpush.msra.mxu0 %v757
        %2373 = vmatmul.f32.gmra.mxu0 %v1095
        %v2374 = vpop.f32.mrf.mxu0
        %v2375 = vadd.f32 0.0, %v2374
        %2376 = vdwg.mxu0
        %2377 = vmatpush.msra.mxu0 0.0
        %2378 = vmatpush.msra.mxu0 0.0
        %2379 = vmatpush.msra.mxu0 0.0
        %2380 = vmatpush.msra.mxu0 0.0
        %2381 = vmatpush.msra.mxu0 0.0
        %2382 = vmatpush.msra.mxu0 0.0
        %2383 = vmatpush.msra.mxu0 0.0
        %2384 = vmatpush.msra.mxu0 0.0
        %2385 = vmatpush.msra.mxu0 0.0
        %2386 = vmatpush.msra.mxu0 0.0
        %2387 = vmatpush.msra.mxu0 0.0
        %2388 = vmatpush.msra.mxu0 %v1078
        %2389 = vmatpush.msra.mxu0 %v998
        %2390 = vmatpush.msra.mxu0 %v918
        %2391 = vmatpush.msra.mxu0 %v838
        %2392 = vmatpush.msra.mxu0 %v758
        %2393 = vmatmul.f32.gmra.mxu0 %v1095
        %v2394 = vpop.f32.mrf.mxu0
        %v2395 = vadd.f32 0.0, %v2394
        %2396 = vdwg.mxu0
        %2397 = vmatpush.msra.mxu0 0.0
        %2398 = vmatpush.msra.mxu0 0.0
        %2399 = vmatpush.msra.mxu0 0.0
        %2400 = vmatpush.msra.mxu0 0.0
        %2401 = vmatpush.msra.mxu0 0.0
        %2402 = vmatpush.msra.mxu0 0.0
        %2403 = vmatpush.msra.mxu0 0.0
        %2404 = vmatpush.msra.mxu0 0.0
        %2405 = vmatpush.msra.mxu0 0.0
        %2406 = vmatpush.msra.mxu0 0.0
        %2407 = vmatpush.msra.mxu0 0.0
        %2408 = vmatpush.msra.mxu0 %v1079
        %2409 = vmatpush.msra.mxu0 %v999
        %2410 = vmatpush.msra.mxu0 %v919
        %2411 = vmatpush.msra.mxu0 %v839
        %2412 = vmatpush.msra.mxu0 %v759
        %2413 = vmatmul.f32.gmra.mxu0 %v1095
        %v2414 = vpop.f32.mrf.mxu0
        %v2415 = vadd.f32 0.0, %v2414
        %2416 = vdwg.mxu0
        %2417 = vmatpush.msra.mxu0 0.0
        %2418 = vmatpush.msra.mxu0 0.0
        %2419 = vmatpush.msra.mxu0 0.0
        %2420 = vmatpush.msra.mxu0 0.0
        %2421 = vmatpush.msra.mxu0 0.0
        %2422 = vmatpush.msra.mxu0 0.0
        %2423 = vmatpush.msra.mxu0 0.0
        %2424 = vmatpush.msra.mxu0 0.0
        %2425 = vmatpush.msra.mxu0 0.0
        %2426 = vmatpush.msra.mxu0 0.0
        %2427 = vmatpush.msra.mxu0 0.0
        %2428 = vmatpush.msra.mxu0 %v1080
        %2429 = vmatpush.msra.mxu0 %v1000
        %2430 = vmatpush.msra.mxu0 %v920
        %2431 = vmatpush.msra.mxu0 %v840
        %2432 = vmatpush.msra.mxu0 %v760
        %2433 = vmatmul.f32.gmra.mxu0 %v1095
        %v2434 = vpop.f32.mrf.mxu0
        %v2435 = vadd.f32 0.0, %v2434
        %2436 = vdwg.mxu0
        %2437 = vmatpush.msra.mxu0 0.0
        %2438 = vmatpush.msra.mxu0 0.0
        %2439 = vmatpush.msra.mxu0 0.0
        %2440 = vmatpush.msra.mxu0 0.0
        %2441 = vmatpush.msra.mxu0 0.0
        %2442 = vmatpush.msra.mxu0 0.0
        %2443 = vmatpush.msra.mxu0 0.0
        %2444 = vmatpush.msra.mxu0 0.0
        %2445 = vmatpush.msra.mxu0 0.0
        %2446 = vmatpush.msra.mxu0 0.0
        %2447 = vmatpush.msra.mxu0 0.0
        %2448 = vmatpush.msra.mxu0 %v1081
        %2449 = vmatpush.msra.mxu0 %v1001
        %2450 = vmatpush.msra.mxu0 %v921
        %2451 = vmatpush.msra.mxu0 %v841
        %2452 = vmatpush.msra.mxu0 %v761
        %2453 = vmatmul.f32.gmra.mxu0 %v1095
        %v2454 = vpop.f32.mrf.mxu0
        %v2455 = vadd.f32 0.0, %v2454
        %2456 = vdwg.mxu0
        %2457 = vmatpush.msra.mxu0 0.0
        %2458 = vmatpush.msra.mxu0 0.0
        %2459 = vmatpush.msra.mxu0 0.0
        %2460 = vmatpush.msra.mxu0 0.0
        %2461 = vmatpush.msra.mxu0 0.0
        %2462 = vmatpush.msra.mxu0 0.0
        %2463 = vmatpush.msra.mxu0 0.0
        %2464 = vmatpush.msra.mxu0 0.0
        %2465 = vmatpush.msra.mxu0 0.0
        %2466 = vmatpush.msra.mxu0 0.0
        %2467 = vmatpush.msra.mxu0 0.0
        %2468 = vmatpush.msra.mxu0 %v1082
        %2469 = vmatpush.msra.mxu0 %v1002
        %2470 = vmatpush.msra.mxu0 %v922
        %2471 = vmatpush.msra.mxu0 %v842
        %2472 = vmatpush.msra.mxu0 %v762
        %2473 = vmatmul.f32.gmra.mxu0 %v1095
        %v2474 = vpop.f32.mrf.mxu0
        %v2475 = vadd.f32 0.0, %v2474
        %2476 = vdwg.mxu0
        %2477 = vmatpush.msra.mxu0 0.0
        %2478 = vmatpush.msra.mxu0 0.0
        %2479 = vmatpush.msra.mxu0 0.0
        %2480 = vmatpush.msra.mxu0 0.0
        %2481 = vmatpush.msra.mxu0 0.0
        %2482 = vmatpush.msra.mxu0 0.0
        %2483 = vmatpush.msra.mxu0 0.0
        %2484 = vmatpush.msra.mxu0 0.0
        %2485 = vmatpush.msra.mxu0 0.0
        %2486 = vmatpush.msra.mxu0 0.0
        %2487 = vmatpush.msra.mxu0 0.0
        %2488 = vmatpush.msra.mxu0 %v1083
        %2489 = vmatpush.msra.mxu0 %v1003
        %2490 = vmatpush.msra.mxu0 %v923
        %2491 = vmatpush.msra.mxu0 %v843
        %2492 = vmatpush.msra.mxu0 %v763
        %2493 = vmatmul.f32.gmra.mxu0 %v1095
        %v2494 = vpop.f32.mrf.mxu0
        %v2495 = vadd.f32 0.0, %v2494
        %2496 = vdwg.mxu0
        %2497 = vmatpush.msra.mxu0 0.0
        %2498 = vmatpush.msra.mxu0 0.0
        %2499 = vmatpush.msra.mxu0 0.0
        %2500 = vmatpush.msra.mxu0 0.0
        %2501 = vmatpush.msra.mxu0 0.0
        %2502 = vmatpush.msra.mxu0 0.0
        %2503 = vmatpush.msra.mxu0 0.0
        %2504 = vmatpush.msra.mxu0 0.0
        %2505 = vmatpush.msra.mxu0 0.0
        %2506 = vmatpush.msra.mxu0 0.0
        %2507 = vmatpush.msra.mxu0 0.0
        %2508 = vmatpush.msra.mxu0 %v1084
        %2509 = vmatpush.msra.mxu0 %v1004
        %2510 = vmatpush.msra.mxu0 %v924
        %2511 = vmatpush.msra.mxu0 %v844
        %2512 = vmatpush.msra.mxu0 %v764
        %2513 = vmatmul.f32.gmra.mxu0 %v1095
        %v2514 = vpop.f32.mrf.mxu0
        %v2515 = vadd.f32 0.0, %v2514
        %2516 = vdwg.mxu0
        %2517 = vmatpush.msra.mxu0 0.0
        %2518 = vmatpush.msra.mxu0 0.0
        %2519 = vmatpush.msra.mxu0 0.0
        %2520 = vmatpush.msra.mxu0 0.0
        %2521 = vmatpush.msra.mxu0 0.0
        %2522 = vmatpush.msra.mxu0 0.0
        %2523 = vmatpush.msra.mxu0 0.0
        %2524 = vmatpush.msra.mxu0 0.0
        %2525 = vmatpush.msra.mxu0 0.0
        %2526 = vmatpush.msra.mxu0 0.0
        %2527 = vmatpush.msra.mxu0 0.0
        %2528 = vmatpush.msra.mxu0 %v1085
        %2529 = vmatpush.msra.mxu0 %v1005
        %2530 = vmatpush.msra.mxu0 %v925
        %2531 = vmatpush.msra.mxu0 %v845
        %2532 = vmatpush.msra.mxu0 %v765
        %2533 = vmatmul.f32.gmra.mxu0 %v1095
        %v2534 = vpop.f32.mrf.mxu0
        %v2535 = vadd.f32 0.0, %v2534
        %2536 = vdwg.mxu0
        %2537 = vmatpush.msra.mxu0 0.0
        %2538 = vmatpush.msra.mxu0 0.0
        %2539 = vmatpush.msra.mxu0 0.0
        %2540 = vmatpush.msra.mxu0 0.0
        %2541 = vmatpush.msra.mxu0 0.0
        %2542 = vmatpush.msra.mxu0 0.0
        %2543 = vmatpush.msra.mxu0 0.0
        %2544 = vmatpush.msra.mxu0 0.0
        %2545 = vmatpush.msra.mxu0 0.0
        %2546 = vmatpush.msra.mxu0 0.0
        %2547 = vmatpush.msra.mxu0 0.0
        %2548 = vmatpush.msra.mxu0 %v1086
        %2549 = vmatpush.msra.mxu0 %v1006
        %2550 = vmatpush.msra.mxu0 %v926
        %2551 = vmatpush.msra.mxu0 %v846
        %2552 = vmatpush.msra.mxu0 %v766
        %2553 = vmatmul.f32.gmra.mxu0 %v1095
        %v2554 = vpop.f32.mrf.mxu0
        %v2555 = vadd.f32 0.0, %v2554
        %2556 = vdwg.mxu0
        %2557 = vmatpush.msra.mxu0 0.0
        %2558 = vmatpush.msra.mxu0 0.0
        %2559 = vmatpush.msra.mxu0 0.0
        %2560 = vmatpush.msra.mxu0 0.0
        %2561 = vmatpush.msra.mxu0 0.0
        %2562 = vmatpush.msra.mxu0 0.0
        %2563 = vmatpush.msra.mxu0 0.0
        %2564 = vmatpush.msra.mxu0 0.0
        %2565 = vmatpush.msra.mxu0 0.0
        %2566 = vmatpush.msra.mxu0 0.0
        %2567 = vmatpush.msra.mxu0 0.0
        %2568 = vmatpush.msra.mxu0 %v1087
        %2569 = vmatpush.msra.mxu0 %v1007
        %2570 = vmatpush.msra.mxu0 %v927
        %2571 = vmatpush.msra.mxu0 %v847
        %2572 = vmatpush.msra.mxu0 %v767
        %2573 = vmatmul.f32.gmra.mxu0 %v1095
        %v2574 = vpop.f32.mrf.mxu0
        %v2575 = vadd.f32 0.0, %v2574
        %2576 = vdwg.mxu0
        %2577 = vmatpush.msra.mxu0 0.0
        %2578 = vmatpush.msra.mxu0 0.0
        %2579 = vmatpush.msra.mxu0 0.0
        %2580 = vmatpush.msra.mxu0 0.0
        %2581 = vmatpush.msra.mxu0 0.0
        %2582 = vmatpush.msra.mxu0 0.0
        %2583 = vmatpush.msra.mxu0 0.0
        %2584 = vmatpush.msra.mxu0 0.0
        %2585 = vmatpush.msra.mxu0 0.0
        %2586 = vmatpush.msra.mxu0 0.0
        %2587 = vmatpush.msra.mxu0 0.0
        %2588 = vmatpush.msra.mxu0 %v1088
        %2589 = vmatpush.msra.mxu0 %v1008
        %2590 = vmatpush.msra.mxu0 %v928
        %2591 = vmatpush.msra.mxu0 %v848
        %2592 = vmatpush.msra.mxu0 %v768
        %2593 = vmatmul.f32.gmra.mxu0 %v1095
        %v2594 = vpop.f32.mrf.mxu0
        %v2595 = vadd.f32 0.0, %v2594
        %2596 = vdwg.mxu0
        %2597 = vmatpush.msra.mxu0 0.0
        %2598 = vmatpush.msra.mxu0 0.0
        %2599 = vmatpush.msra.mxu0 0.0
        %2600 = vmatpush.msra.mxu0 0.0
        %2601 = vmatpush.msra.mxu0 0.0
        %2602 = vmatpush.msra.mxu0 0.0
        %2603 = vmatpush.msra.mxu0 0.0
        %2604 = vmatpush.msra.mxu0 0.0
        %2605 = vmatpush.msra.mxu0 0.0
        %2606 = vmatpush.msra.mxu0 0.0
        %2607 = vmatpush.msra.mxu0 0.0
        %2608 = vmatpush.msra.mxu0 %v1089
        %2609 = vmatpush.msra.mxu0 %v1009
        %2610 = vmatpush.msra.mxu0 %v929
        %2611 = vmatpush.msra.mxu0 %v849
        %2612 = vmatpush.msra.mxu0 %v769
        %2613 = vmatmul.f32.gmra.mxu0 %v1095
        %v2614 = vpop.f32.mrf.mxu0
        %v2615 = vadd.f32 0.0, %v2614
        %2616 = vdwg.mxu0
        %2617 = vmatpush.msra.mxu0 0.0
        %2618 = vmatpush.msra.mxu0 0.0
        %2619 = vmatpush.msra.mxu0 0.0
        %2620 = vmatpush.msra.mxu0 0.0
        %2621 = vmatpush.msra.mxu0 0.0
        %2622 = vmatpush.msra.mxu0 0.0
        %2623 = vmatpush.msra.mxu0 0.0
        %2624 = vmatpush.msra.mxu0 0.0
        %2625 = vmatpush.msra.mxu0 0.0
        %2626 = vmatpush.msra.mxu0 0.0
        %2627 = vmatpush.msra.mxu0 0.0
        %2628 = vmatpush.msra.mxu0 %v1090
        %2629 = vmatpush.msra.mxu0 %v1010
        %2630 = vmatpush.msra.mxu0 %v930
        %2631 = vmatpush.msra.mxu0 %v850
        %2632 = vmatpush.msra.mxu0 %v770
        %2633 = vmatmul.f32.gmra.mxu0 %v1095
        %v2634 = vpop.f32.mrf.mxu0
        %v2635 = vadd.f32 0.0, %v2634
        %2636 = vdwg.mxu0
        %2637 = vmatpush.msra.mxu0 0.0
        %2638 = vmatpush.msra.mxu0 0.0
        %2639 = vmatpush.msra.mxu0 0.0
        %2640 = vmatpush.msra.mxu0 0.0
        %2641 = vmatpush.msra.mxu0 0.0
        %2642 = vmatpush.msra.mxu0 0.0
        %2643 = vmatpush.msra.mxu0 0.0
        %2644 = vmatpush.msra.mxu0 0.0
        %2645 = vmatpush.msra.mxu0 0.0
        %2646 = vmatpush.msra.mxu0 0.0
        %2647 = vmatpush.msra.mxu0 0.0
        %2648 = vmatpush.msra.mxu0 %v1091
        %2649 = vmatpush.msra.mxu0 %v1011
        %2650 = vmatpush.msra.mxu0 %v931
        %2651 = vmatpush.msra.mxu0 %v851
        %2652 = vmatpush.msra.mxu0 %v771
        %2653 = vmatmul.f32.gmra.mxu0 %v1095
        %v2654 = vpop.f32.mrf.mxu0
        %v2655 = vadd.f32 0.0, %v2654
        %2656 = vdwg.mxu0
        %2657 = vmatpush.msra.mxu0 0.0
        %2658 = vmatpush.msra.mxu0 0.0
        %2659 = vmatpush.msra.mxu0 0.0
        %2660 = vmatpush.msra.mxu0 0.0
        %2661 = vmatpush.msra.mxu0 0.0
        %2662 = vmatpush.msra.mxu0 0.0
        %2663 = vmatpush.msra.mxu0 0.0
        %2664 = vmatpush.msra.mxu0 0.0
        %2665 = vmatpush.msra.mxu0 0.0
        %2666 = vmatpush.msra.mxu0 0.0
        %2667 = vmatpush.msra.mxu0 0.0
        %2668 = vmatpush.msra.mxu0 %v1092
        %2669 = vmatpush.msra.mxu0 %v1012
        %2670 = vmatpush.msra.mxu0 %v932
        %2671 = vmatpush.msra.mxu0 %v852
        %2672 = vmatpush.msra.mxu0 %v772
        %2673 = vmatmul.f32.gmra.mxu0 %v1095
        %v2674 = vpop.f32.mrf.mxu0
        %v2675 = vadd.f32 0.0, %v2674
        %2676 = vdwg.mxu0
        %2677 = vmatpush.msra.mxu0 0.0
        %2678 = vmatpush.msra.mxu0 0.0
        %2679 = vmatpush.msra.mxu0 0.0
        %2680 = vmatpush.msra.mxu0 0.0
        %2681 = vmatpush.msra.mxu0 0.0
        %2682 = vmatpush.msra.mxu0 0.0
        %2683 = vmatpush.msra.mxu0 0.0
        %2684 = vmatpush.msra.mxu0 0.0
        %2685 = vmatpush.msra.mxu0 0.0
        %2686 = vmatpush.msra.mxu0 0.0
        %2687 = vmatpush.msra.mxu0 0.0
        %2688 = vmatpush.msra.mxu0 %v1093
        %2689 = vmatpush.msra.mxu0 %v1013
        %2690 = vmatpush.msra.mxu0 %v933
        %2691 = vmatpush.msra.mxu0 %v853
        %2692 = vmatpush.msra.mxu0 %v773
        %2693 = vmatmul.f32.gmra.mxu0 %v1095
        %v2694 = vpop.f32.mrf.mxu0
        %v2695 = vadd.f32 0.0, %v2694
        %2696 = vdwg.mxu0
        %2697 = vst [vmem:[%s557] sm:$0xff] %v1115
        %2698 = vst [vmem:[%s557 + $0x8] sm:$0xff] %v1135
        %2699 = vst [vmem:[%s557 + $0x10] sm:$0xff] %v1155
        %2700 = vst [vmem:[%s557 + $0x18] sm:$0xff] %v1175
        %2701 = vst [vmem:[%s557 + $0x20] sm:$0xff] %v1195
        %2702 = vst [vmem:[%s557 + $0x28] sm:$0xff] %v1215
        %2703 = vst [vmem:[%s557 + $0x30] sm:$0xff] %v1235
        %2704 = vst [vmem:[%s557 + $0x38] sm:$0xff] %v1255
        %2705 = vst [vmem:[%s557 + $0x40] sm:$0xff] %v1275
        %2706 = vst [vmem:[%s557 + $0x48] sm:$0xff] %v1295
        %2707 = vst [vmem:[%s557 + $0x50] sm:$0xff] %v1315
        %2708 = vst [vmem:[%s557 + $0x58] sm:$0xff] %v1335
        %2709 = vst [vmem:[%s557 + $0x60] sm:$0xff] %v1355
        %2710 = vst [vmem:[%s557 + $0x68] sm:$0xff] %v1375
        %2711 = vst [vmem:[%s557 + $0x70] sm:$0xff] %v1395
        %2712 = vst [vmem:[%s557 + $0x78] sm:$0xff] %v1415
        %2713 = vst [vmem:[%s557 + $0x80] sm:$0xff] %v1435
        %2714 = vst [vmem:[%s557 + $0x88] sm:$0xff] %v1455
        %2715 = vst [vmem:[%s557 + $0x90] sm:$0xff] %v1475
        %2716 = vst [vmem:[%s557 + $0x98] sm:$0xff] %v1495
        %2717 = vst [vmem:[%s557 + $0xa0] sm:$0xff] %v1515
        %2718 = vst [vmem:[%s557 + $0xa8] sm:$0xff] %v1535
        %2719 = vst [vmem:[%s557 + $0xb0] sm:$0xff] %v1555
        %2720 = vst [vmem:[%s557 + $0xb8] sm:$0xff] %v1575
        %2721 = vst [vmem:[%s557 + $0xc0] sm:$0xff] %v1595
        %2722 = vst [vmem:[%s557 + $0xc8] sm:$0xff] %v1615
        %2723 = vst [vmem:[%s557 + $0xd0] sm:$0xff] %v1635
        %2724 = vst [vmem:[%s557 + $0xd8] sm:$0xff] %v1655
        %2725 = vst [vmem:[%s557 + $0xe0] sm:$0xff] %v1675
        %2726 = vst [vmem:[%s557 + $0xe8] sm:$0xff] %v1695
        %2727 = vst [vmem:[%s557 + $0xf0] sm:$0xff] %v1715
        %2728 = vst [vmem:[%s557 + $0xf8] sm:$0xff] %v1735
        %2729 = vst [vmem:[%s557 + $0x100] sm:$0xff] %v1755
        %2730 = vst [vmem:[%s557 + $0x108] sm:$0xff] %v1775
        %2731 = vst [vmem:[%s557 + $0x110] sm:$0xff] %v1795
        %2732 = vst [vmem:[%s557 + $0x118] sm:$0xff] %v1815
        %2733 = vst [vmem:[%s557 + $0x120] sm:$0xff] %v1835
        %2734 = vst [vmem:[%s557 + $0x128] sm:$0xff] %v1855
        %2735 = vst [vmem:[%s557 + $0x130] sm:$0xff] %v1875
        %2736 = vst [vmem:[%s557 + $0x138] sm:$0xff] %v1895
        %2737 = vst [vmem:[%s557 + $0x140] sm:$0xff] %v1915
        %2738 = vst [vmem:[%s557 + $0x148] sm:$0xff] %v1935
        %2739 = vst [vmem:[%s557 + $0x150] sm:$0xff] %v1955
        %2740 = vst [vmem:[%s557 + $0x158] sm:$0xff] %v1975
        %2741 = vst [vmem:[%s557 + $0x160] sm:$0xff] %v1995
        %2742 = vst [vmem:[%s557 + $0x168] sm:$0xff] %v2015
        %2743 = vst [vmem:[%s557 + $0x170] sm:$0xff] %v2035
        %2744 = vst [vmem:[%s557 + $0x178] sm:$0xff] %v2055
        %2745 = vst [vmem:[%s557 + $0x180] sm:$0xff] %v2075
        %2746 = vst [vmem:[%s557 + $0x188] sm:$0xff] %v2095
        %2747 = vst [vmem:[%s557 + $0x190] sm:$0xff] %v2115
        %2748 = vst [vmem:[%s557 + $0x198] sm:$0xff] %v2135
        %2749 = vst [vmem:[%s557 + $0x1a0] sm:$0xff] %v2155
        %2750 = vst [vmem:[%s557 + $0x1a8] sm:$0xff] %v2175
        %2751 = vst [vmem:[%s557 + $0x1b0] sm:$0xff] %v2195
        %2752 = vst [vmem:[%s557 + $0x1b8] sm:$0xff] %v2215
        %2753 = vst [vmem:[%s557 + $0x1c0] sm:$0xff] %v2235
        %2754 = vst [vmem:[%s557 + $0x1c8] sm:$0xff] %v2255
        %2755 = vst [vmem:[%s557 + $0x1d0] sm:$0xff] %v2275
        %2756 = vst [vmem:[%s557 + $0x1d8] sm:$0xff] %v2295
        %2757 = vst [vmem:[%s557 + $0x1e0] sm:$0xff] %v2315
        %2758 = vst [vmem:[%s557 + $0x1e8] sm:$0xff] %v2335
        %2759 = vst [vmem:[%s557 + $0x1f0] sm:$0xff] %v2355
        %2760 = vst [vmem:[%s557 + $0x1f8] sm:$0xff] %v2375
        %2761 = vst [vmem:[%s557 + $0x200] sm:$0xff] %v2395
        %2762 = vst [vmem:[%s557 + $0x208] sm:$0xff] %v2415
        %2763 = vst [vmem:[%s557 + $0x210] sm:$0xff] %v2435
        %2764 = vst [vmem:[%s557 + $0x218] sm:$0xff] %v2455
        %2765 = vst [vmem:[%s557 + $0x220] sm:$0xff] %v2475
        %2766 = vst [vmem:[%s557 + $0x228] sm:$0xff] %v2495
        %2767 = vst [vmem:[%s557 + $0x230] sm:$0xff] %v2515
        %2768 = vst [vmem:[%s557 + $0x238] sm:$0xff] %v2535
        %2769 = vst [vmem:[%s557 + $0x240] sm:$0xff] %v2555
        %2770 = vst [vmem:[%s557 + $0x248] sm:$0xff] %v2575
        %2771 = vst [vmem:[%s557 + $0x250] sm:$0xff] %v2595
        %2772 = vst [vmem:[%s557 + $0x258] sm:$0xff] %v2615
        %2773 = vst [vmem:[%s557 + $0x260] sm:$0xff] %v2635
        %2774 = vst [vmem:[%s557 + $0x268] sm:$0xff] %v2655
        %2775 = vst [vmem:[%s557 + $0x270] sm:$0xff] %v2675
        %2776 = vst [vmem:[%s557 + $0x278] sm:$0xff] %v2695
        %p2777 = scmp.lt.s32.totalorder %s31, 1
        %s2778 = scalar_select %p2777, %s31, 1
        %s2779 = smul.addr %s2778, 8
        %s2780 = scalar_lea.vmem %s10, %s2779
        %p2781 = scmp.lt.s32.totalorder %s31, 1
        %s2782 = scalar_select %p2781, %s31, 1
        %s2783 = smul.addr %s2782, 80
        %s2784 = smul.addr %s2783, 8
        %s2785 = scalar_lea.vmem %s11, %s2784
        // Predicated region
        $region101: #{slot_classifier_forward.2} parent=59 // pred_check
          %p2786 = pneg %p264
        $region102: #{slot_classifier_forward.2} parent=59 // pred_check_branch
          %2788 = sbr.rel (%p2786) target = $region104
        $region103: #{slot_classifier_forward.2} parent=59 // pred_region
          _
        $region104: #{slot_classifier_forward.2} parent=59 // pred_fallthru
          _
        // Predicated region
        $region105: #{slot_classifier_forward.2} parent=59 // pred_check
          %p2789 = pneg %p290
        $region106: #{slot_classifier_forward.2} parent=59 // pred_check_branch
          %2791 = sbr.rel (%p2789) target = $region108
        $region107: #{slot_classifier_forward.2} parent=59 // pred_region
          _
        $region108: #{slot_classifier_forward.2} parent=59 // pred_fallthru
          _
      $region60: #{slot_classifier_forward.2} parent=5 // pred_fallthru
        _
      %p2792 = scmp.le.s32.totalorder 2, %s26
      // Predicated region
      $region109: #{slot_classifier_forward.2} parent=5 // pred_check
        %p2793 = pneg %p2792
      $region110: #{slot_classifier_forward.2} parent=5 // pred_check_branch
        %2795 = sbr.rel (%p2793) target = $region112
      $region111: #{slot_classifier_forward.2} parent=5 // pred_region
        %s2796 = ssub.s32 %s26, 2
        // Predicated region
        $region113: #{slot_classifier_forward.2} parent=111 // pred_check
          %p2797 = pneg %p270
        $region114: #{slot_classifier_forward.2} parent=111 // pred_check_branch
          %2799 = sbr.rel (%p2797) target = $region116
        $region115: #{slot_classifier_forward.2} parent=111 // pred_region
          %p2800 = scmp.lt.s32.totalorder %s32, 1
          %s2801 = scalar_select %p2800, %s32, 1
          %s2802 = smul.addr %s2801, 8
          %s2803 = scalar_lea.vmem %s10, %s2802
        $region116: #{slot_classifier_forward.2} parent=111 // pred_fallthru
          _
        // Predicated region
        $region117: #{slot_classifier_forward.2} parent=111 // pred_check
          %p2804 = pneg %p296
        $region118: #{slot_classifier_forward.2} parent=111 // pred_check_branch
          %2806 = sbr.rel (%p2804) target = $region120
        $region119: #{slot_classifier_forward.2} parent=111 // pred_region
          %p2807 = scmp.lt.s32.totalorder %s32, 1
          %s2808 = scalar_select %p2807, %s32, 1
          %s2809 = smul.addr %s2808, 80
          %s2810 = smul.addr %s2809, 8
          %s2811 = scalar_lea.vmem %s11, %s2810
        $region120: #{slot_classifier_forward.2} parent=111 // pred_fallthru
          _
      $region112: #{slot_classifier_forward.2} parent=5 // pred_fallthru
        _
    $region6: #{slot_classifier_forward.2} parent=1 // loop_footer
      %s30 = sadd.s32 1, %s26
    $region7: #{slot_classifier_forward.2} parent=1 // loop_footer_branch
      %25 = sbr.rel target = $region3
    $region8: #{slot_classifier_forward.2} parent=1 // loop_exit
      _
    %2812 = vsyncpa [#allocation3], 1
    %s2813 = scalar_lea.sflag [#allocation3], 1
    %2814 = vsyncpa %s2813, 1
    %2815 = vsyncpa [#allocation5], 1
    %2816 = vsyncpa [#allocation8], 1
    %2817 = vsyncpa [#allocation11], 1
    %2818 = vsyncpa [#allocation14], 1
    %2819 = vsyncpa [#allocation17], 1

</llo_original>
